<compile_context>
chip_gen: v7x
topology: tpu7x:2x2x1
jax: 0.10.0
libtpu: 0.0.40
codegen_flags: <defaults>
</compile_context>

<pallas_src>
import functools

import numpy as np
import jax
import jax.numpy as jnp
from jax.experimental import pallas as pl
from jax.experimental.pallas import tpu as pltpu

# ----------------------------- hyper-parameters ------------------------------
D_MODEL = 32
N_HEADS = 4
D_Q = 8
D_K = 8
D_V = 8
D_FF = 64
LN_EPS = 1e-5


# ------------------------------ in-kernel helpers -----------------------------
def _layer_norm(y, gamma, beta):
    # Two-pass (centered) variance: robust, matches the reference numerics.
    mean = jnp.mean(y, axis=-1, keepdims=True)
    c = y - mean
    var = jnp.mean(c * c, axis=-1, keepdims=True)
    return c * jax.lax.rsqrt(var + LN_EPS) * gamma + beta


def _qkt(a, b):
    # a @ b.T without an explicit transpose: contract the last dim of both.
    return jax.lax.dot_general(a, b, (((1,), (1,)), ((), ())),
                               preferred_element_type=jnp.float32)


def _attention_block(x_q, x_kv, bias, w_slab, p_slab, attn_ref, bt, sq, skv):
    """x_q: (bt*sq, D), x_kv: (bt*skv, D), bias: (bt, sq, skv) additive f32.
    w_slab: (D, 4*D) = [W_q | W_k | W_v | W_o]  (packing relies on H*d_v == D).
    p_slab: (6, D) rows = [b_q, b_k, b_v, b_o, ln_gamma, ln_beta].
    Writes (bt, H, sq, skv) attention maps into attn_ref; returns (bt*sq, D)."""
    w_q = w_slab[:, 0:D_MODEL]
    w_kv = w_slab[:, D_MODEL:3 * D_MODEL]
    w_o = w_slab[:, 3 * D_MODEL:4 * D_MODEL]
    b_q = p_slab[0:1, :]
    b_k = p_slab[1:2, :]
    b_v = p_slab[2:3, :]
    b_o = p_slab[3:4, :]
    gamma = p_slab[4:5, :]
    beta = p_slab[5:6, :]

    # Fused projections over the folded (batch*seq) M dimension: 2 MXU matmuls.
    q = jnp.dot(x_q, w_q, preferred_element_type=jnp.float32) + b_q      # (bt*sq, H*dq)
    kv = jnp.dot(x_kv, w_kv, preferred_element_type=jnp.float32)         # (bt*skv, 2*H*dk)
    k = kv[:, 0:N_HEADS * D_K] + b_k
    v = kv[:, N_HEADS * D_K:2 * N_HEADS * D_K] + b_v

    inv_sqrt_dk = jnp.float32(1.0 / np.sqrt(D_K))
    ctx_rows = []
    for b in range(bt):                     # static (bt is 1 or B//2)
        q_b = q[b * sq:(b + 1) * sq, :]
        k_b = k[b * skv:(b + 1) * skv, :]
        v_b = v[b * skv:(b + 1) * skv, :]
        bias_b = bias[b]
        attn_heads = []
        ctx_cols = []
        for h in range(N_HEADS):            # static
            qh = q_b[:, h * D_Q:(h + 1) * D_Q]
            kh = k_b[:, h * D_K:(h + 1) * D_K]
            vh = v_b[:, h * D_V:(h + 1) * D_V]
            s = _qkt(qh, kh) * inv_sqrt_dk + bias_b          # (sq, skv)
            m = jnp.max(s, axis=-1, keepdims=True)
            e = jnp.exp(s - m)
            a = e / jnp.sum(e, axis=-1, keepdims=True)       # exact softmax
            attn_heads.append(a)
            ctx_cols.append(jnp.dot(a, vh, preferred_element_type=jnp.float32))
        # TODO(synk): attention maps are stored with last dim = skv (8); a fully
        # lane-dense (bt, H*sq*skv) store would need an in-kernel relayout reshape.
        attn_ref[b] = jnp.stack(attn_heads, axis=0)          # (H, sq, skv), one store
        ctx_rows.append(jnp.concatenate(ctx_cols, axis=-1))  # (sq, H*dv)
    ctx = ctx_rows[0] if bt == 1 else jnp.concatenate(ctx_rows, axis=0)

    # Single output projection (concat-of-heads @ W_o) + residual + LayerNorm.
    proj = jnp.dot(ctx, w_o, preferred_element_type=jnp.float32) + b_o
    return _layer_norm(proj + x_q, gamma, beta)


def _ffn_block(x, w1, w2, p_slab):
    b1 = p_slab[0:1, :]                    # (1, D_FF)
    b2 = p_slab[1:2, 0:D_MODEL]
    gamma = p_slab[2:3, 0:D_MODEL]
    beta = p_slab[3:4, 0:D_MODEL]
    h = jnp.maximum(jnp.dot(x, w1, preferred_element_type=jnp.float32) + b1, 0.0)
    o = jnp.dot(h, w2, preferred_element_type=jnp.float32) + b2
    return _layer_norm(o + x, gamma, beta)


# ------------------------------- fused kernel ---------------------------------
def _decoder_layer_kernel(dec_ref, enc_ref, sbias_ref, ebias_ref,
                          sa_w_ref, sa_p_ref, ea_w_ref, ea_p_ref,
                          ff_w1_ref, ff_w2_ref, ff_p_ref,
                          out_ref, self_attn_ref, enc_attn_ref):
    bt, s_dec, _ = dec_ref.shape
    s_enc = enc_ref.shape[1]

    # Fold batch into the matmul M dimension (leading-dim merge: layout no-op).
    x_dec = dec_ref[...].reshape(bt * s_dec, D_MODEL)
    x_enc = enc_ref[...].reshape(bt * s_enc, D_MODEL)

    h1 = _attention_block(x_dec, x_dec, sbias_ref[...],
                          sa_w_ref[...], sa_p_ref[...], self_attn_ref,
                          bt, s_dec, s_dec)
    h2 = _attention_block(h1, x_enc, ebias_ref[...],
                          ea_w_ref[...], ea_p_ref[...], enc_attn_ref,
                          bt, s_dec, s_enc)
    out = _ffn_block(h2, ff_w1_ref[...], ff_w2_ref[...], ff_p_ref[...])
    out_ref[...] = out.reshape(bt, s_dec, D_MODEL)


# --------------------------- host-side param packing --------------------------
def _pack_attn_w(p):
    # (D, 4*D) lane-dense slab: [W_q | W_k | W_v | W_o]  (W_o rows == H*d_v == D).
    return jnp.concatenate([p["w_q"], p["w_k"], p["w_v"], p["w_o"]], axis=1)


def _pack_attn_p(p):
    # (6, D): rows b_q, b_k, b_v, b_o, ln_gamma, ln_beta.
    return jnp.concatenate([p["b_q"], p["b_k"], p["b_v"], p["b_o"],
                            p["ln_gamma"], p["ln_beta"]], axis=0)


def _pack_ffn_p(p):
    # (4, D_FF): rows b1 | [b2, 0] | [gamma, 0] | [beta, 0].
    pad = jnp.zeros((1, D_FF - D_MODEL), jnp.float32)
    return jnp.concatenate([
        p["b1"],
        jnp.concatenate([p["b2"], pad], axis=1),
        jnp.concatenate([p["ln_gamma"], pad], axis=1),
        jnp.concatenate([p["ln_beta"], pad], axis=1)], axis=0)


# ------------------------------- DecoderLayer --------------------------------
def decoder_layer(dec_inputs, enc_outputs, dec_self_attn_mask, dec_enc_attn_mask, params):
    B, S_dec, _ = dec_inputs.shape
    S_enc = enc_outputs.shape[1]

    # At most 2 grid steps: 2 "parallel" steps feed both v7x TensorCores; on
    # v5e/v6e this amortizes the ~0.35us per-grid-step overhead vs. grid=(B,).
    n_blocks = 2 if (B >= 2 and B % 2 == 0) else 1
    bt = B // n_blocks

    sa_w = _pack_attn_w(params["self_attn"])
    sa_p = _pack_attn_p(params["self_attn"])
    ea_w = _pack_attn_w(params["enc_attn"])
    ea_p = _pack_attn_p(params["enc_attn"])
    ff_w1 = params["ffn"]["w1"]
    ff_w2 = params["ffn"]["w2"]
    ff_p = _pack_ffn_p(params["ffn"])

    # Masks -> precomputed f32 additive bias (0 / -1e9).
    sbias = jnp.where(dec_self_attn_mask != 0, jnp.float32(-1e9), jnp.float32(0.0))
    ebias = jnp.where(dec_enc_attn_mask != 0, jnp.float32(-1e9), jnp.float32(0.0))

    operands = (dec_inputs, enc_outputs, sbias, ebias,
                sa_w, sa_p, ea_w, ea_p, ff_w1, ff_w2, ff_p)

    def batched(shape):
        nd = len(shape)
        return pl.BlockSpec((bt,) + tuple(shape[1:]),
                            lambda i, _nd=nd: (i,) + (0,) * (_nd - 1))

    def replicated(shape):
        nd = len(shape)
        return pl.BlockSpec(tuple(shape), lambda i, _nd=nd: (0,) * _nd)

    in_specs = [batched(dec_inputs.shape), batched(enc_outputs.shape),
                batched(sbias.shape), batched(ebias.shape)] + \
               [replicated(x.shape) for x in (sa_w, sa_p, ea_w, ea_p, ff_w1, ff_w2, ff_p)]

    out_shape = (
        jax.ShapeDtypeStruct((B, S_dec, D_MODEL), jnp.float32),
        jax.ShapeDtypeStruct((B, N_HEADS, S_dec, S_dec), jnp.float32),
        jax.ShapeDtypeStruct((B, N_HEADS, S_dec, S_enc), jnp.float32),
    )
    out_specs = tuple(batched(s.shape) for s in out_shape)

    # Advisory cost estimate for the XLA scheduler.
    flops = int(B * (
        2 * (2 * S_dec * D_MODEL * (3 * N_HEADS * D_Q)                 # q/k/v projections
             + 2 * N_HEADS * S_dec * max(S_dec, S_enc) * (D_K + D_V)   # scores + context
             + 2 * S_dec * (N_HEADS * D_V) * D_MODEL)                  # output projection
        + 2 * 2 * S_dec * D_MODEL * D_FF))                             # FFN
    transcendentals = int(B * N_HEADS * S_dec * (S_dec + S_enc))
    bytes_accessed = int(sum(int(np.prod(x.shape)) * 4 for x in operands)
                         + sum(int(np.prod(s.shape)) * 4 for s in out_shape))

    fn = pl.pallas_call(
        _decoder_layer_kernel,
        out_shape=out_shape,
        grid_spec=pltpu.PrefetchScalarGridSpec(
            num_scalar_prefetch=0,
            grid=(n_blocks,),
            in_specs=in_specs,
            out_specs=list(out_specs),
        ),
        compiler_params=pltpu.CompilerParams(dimension_semantics=("parallel",)),
        cost_estimate=pl.CostEstimate(flops=flops, transcendentals=transcendentals,
                                      bytes_accessed=bytes_accessed),
    )
    dec_out, self_attn, enc_attn = fn(*operands)
    return dec_out, self_attn, enc_attn


# --------------------------- parameter construction --------------------------
def _init_mha_params(key):
    ks = jax.random.split(key, 8)
    scale = 0.05
    return {
        "w_q": scale * jax.random.normal(ks[0], (D_MODEL, N_HEADS * D_Q), jnp.float32),
        "b_q": scale * jax.random.normal(ks[1], (1, N_HEADS * D_Q), jnp.float32),
        "w_k": scale * jax.random.normal(ks[2], (D_MODEL, N_HEADS * D_K), jnp.float32),
        "b_k": scale * jax.random.normal(ks[3], (1, N_HEADS * D_K), jnp.float32),
        "w_v": scale * jax.random.normal(ks[4], (D_MODEL, N_HEADS * D_V), jnp.float32),
        "b_v": scale * jax.random.normal(ks[5], (1, N_HEADS * D_V), jnp.float32),
        "w_o": scale * jax.random.normal(ks[6], (N_HEADS * D_V, D_MODEL), jnp.float32),
        "b_o": scale * jax.random.normal(ks[7], (1, D_MODEL), jnp.float32),
        "ln_gamma": jnp.ones((1, D_MODEL), jnp.float32),   # nn.LayerNorm default init
        "ln_beta": jnp.zeros((1, D_MODEL), jnp.float32),
    }


def _init_ffn_params(key):
    ks = jax.random.split(key, 4)
    scale = 0.05
    return {
        "w1": scale * jax.random.normal(ks[0], (D_MODEL, D_FF), jnp.float32),
        "b1": scale * jax.random.normal(ks[1], (1, D_FF), jnp.float32),
        "w2": scale * jax.random.normal(ks[2], (D_FF, D_MODEL), jnp.float32),
        "b2": scale * jax.random.normal(ks[3], (1, D_MODEL), jnp.float32),
        "ln_gamma": jnp.ones((1, D_MODEL), jnp.float32),
        "ln_beta": jnp.zeros((1, D_MODEL), jnp.float32),
    }


def init_decoder_layer_params(key):
    k1, k2, k3 = jax.random.split(key, 3)
    return {
        "self_attn": _init_mha_params(k1),
        "enc_attn": _init_mha_params(k2),
        "ffn": _init_ffn_params(k3),
    }


# --------------------------- pure-JAX reference -------------------------------
def _mha_ref(q, k, v, mask, p):
    B, Sq, _ = q.shape
    Skv = k.shape[1]
    qp = (q @ p["w_q"] + p["b_q"]).reshape(B, Sq, N_HEADS, D_Q).transpose(0, 2, 1, 3)
    kp = (k @ p["w_k"] + p["b_k"]).reshape(B, Skv, N_HEADS, D_K).transpose(0, 2, 1, 3)
    vp = (v @ p["w_v"] + p["b_v"]).reshape(B, Skv, N_HEADS, D_V).transpose(0, 2, 1, 3)
    scores = jnp.einsum("bhqd,bhkd->bhqk", qp, kp) / np.sqrt(D_K)
    scores = jnp.where(mask[:, None, :, :] != 0, -1e9, scores)
    attn = jax.nn.softmax(scores, axis=-1)
    ctx = jnp.einsum("bhqk,bhkd->bhqd", attn, vp).transpose(0, 2, 1, 3).reshape(B, Sq, N_HEADS * D_V)
    out = ctx @ p["w_o"] + p["b_o"]
    y = out + q
    mean = y.mean(-1, keepdims=True)
    var = ((y - mean) ** 2).mean(-1, keepdims=True)
    return ((y - mean) / jnp.sqrt(var + LN_EPS)) * p["ln_gamma"] + p["ln_beta"], attn


def _ffn_ref(x, p):
    h = jax.nn.relu(x @ p["w1"] + p["b1"])
    o = h @ p["w2"] + p["b2"]
    y = o + x
    mean = y.mean(-1, keepdims=True)
    var = ((y - mean) ** 2).mean(-1, keepdims=True)
    return ((y - mean) / jnp.sqrt(var + LN_EPS)) * p["ln_gamma"] + p["ln_beta"]


def _decoder_ref(dec_inputs, enc_outputs, m_self, m_enc, params):
    o, a1 = _mha_ref(dec_inputs, dec_inputs, dec_inputs, m_self, params["self_attn"])
    o, a2 = _mha_ref(o, enc_outputs, enc_outputs, m_enc, params["enc_attn"])
    o = _ffn_ref(o, params["ffn"])
    return o, a1, a2


# ----------------------------------- main -------------------------------------
if __name__ == "__main__":
    B, S_DEC, S_ENC = 2, 8, 8

    key = jax.random.PRNGKey(0)
    k_params, k_dec, k_enc = jax.random.split(key, 3)
    params = init_decoder_layer_params(k_params)

    dec_inputs = jax.random.normal(k_dec, (B, S_DEC, D_MODEL), jnp.float32)
    enc_outputs = jax.random.normal(k_enc, (B, S_ENC, D_MODEL), jnp.float32)

    # causal (subsequent) mask for decoder self-attention: 1 == masked
    causal = jnp.triu(jnp.ones((S_DEC, S_DEC), jnp.int32), k=1)
    dec_self_attn_mask = jnp.broadcast_to(causal, (B, S_DEC, S_DEC)).astype(jnp.int32)
    # no padding in encoder outputs -> all-zero dec-enc mask
    dec_enc_attn_mask = jnp.zeros((B, S_DEC, S_ENC), jnp.int32)

    run = jax.jit(functools.partial(decoder_layer, params=params))
    dec_out, self_attn, enc_attn = run(dec_inputs, enc_outputs,
                                       dec_self_attn_mask, dec_enc_attn_mask)
    jax.block_until_ready((dec_out, self_attn, enc_attn))

    # cross-check against a pure-JAX reference
    ref_out, ref_sa, ref_ea = _decoder_ref(dec_inputs, enc_outputs,
                                           dec_self_attn_mask, dec_enc_attn_mask, params)
    np.testing.assert_allclose(np.asarray(dec_out), np.asarray(ref_out), rtol=2e-3, atol=2e-3)
    np.testing.assert_allclose(np.asarray(self_attn), np.asarray(ref_sa), rtol=2e-3, atol=2e-3)
    np.testing.assert_allclose(np.asarray(enc_attn), np.asarray(ref_ea), rtol=2e-3, atol=2e-3)

    print("KERNEL_OK")
</pallas_src>

<mosaic_0001>
module attributes {stable_mosaic.version = 11 : i64} {
  func.func @_decoder_layer_kernel(%arg0: i32, %arg1: memref<1x8x32xf32, #tpu.memory_space<vmem>>, %arg2: memref<1x8x32xf32, #tpu.memory_space<vmem>>, %arg3: memref<1x8x8xf32, #tpu.memory_space<vmem>>, %arg4: memref<1x8x8xf32, #tpu.memory_space<vmem>>, %arg5: memref<32x128xf32, #tpu.memory_space<vmem>>, %arg6: memref<6x32xf32, #tpu.memory_space<vmem>>, %arg7: memref<32x128xf32, #tpu.memory_space<vmem>>, %arg8: memref<6x32xf32, #tpu.memory_space<vmem>>, %arg9: memref<32x64xf32, #tpu.memory_space<vmem>>, %arg10: memref<64x32xf32, #tpu.memory_space<vmem>>, %arg11: memref<4x64xf32, #tpu.memory_space<vmem>>, %arg12: memref<1x8x32xf32, #tpu.memory_space<vmem>>, %arg13: memref<1x4x8x8xf32, #tpu.memory_space<vmem>>, %arg14: memref<1x4x8x8xf32, #tpu.memory_space<vmem>>) attributes {dimension_semantics = [#tpu.dimension_semantics<parallel>], iteration_bounds = array<i64: 2>, scalar_prefetch = 0 : i64, scratch_operands = 0 : i64, tpu.core_type = #tpu.core_type<tc>, window_params = [{transform_indices = @transform_0, window_bounds = array<i64: 1, 8, 32>}, {transform_indices = @transform_1, window_bounds = array<i64: 1, 8, 32>}, {transform_indices = @transform_2, window_bounds = array<i64: 1, 8, 8>}, {transform_indices = @transform_3, window_bounds = array<i64: 1, 8, 8>}, {pipeline_mode = #tpu.pipeline_mode<synchronous>, transform_indices = @transform_4, window_bounds = array<i64: 32, 128>}, {pipeline_mode = #tpu.pipeline_mode<synchronous>, transform_indices = @transform_5, window_bounds = array<i64: 6, 32>}, {pipeline_mode = #tpu.pipeline_mode<synchronous>, transform_indices = @transform_6, window_bounds = array<i64: 32, 128>}, {pipeline_mode = #tpu.pipeline_mode<synchronous>, transform_indices = @transform_7, window_bounds = array<i64: 6, 32>}, {pipeline_mode = #tpu.pipeline_mode<synchronous>, transform_indices = @transform_8, window_bounds = array<i64: 32, 64>}, {pipeline_mode = #tpu.pipeline_mode<synchronous>, transform_indices = @transform_9, window_bounds = array<i64: 64, 32>}, {pipeline_mode = #tpu.pipeline_mode<synchronous>, transform_indices = @transform_10, window_bounds = array<i64: 4, 64>}, {transform_indices = @transform_11, window_bounds = array<i64: 1, 8, 32>}, {transform_indices = @transform_12, window_bounds = array<i64: 1, 4, 8, 8>}, {transform_indices = @transform_13, window_bounds = array<i64: 1, 4, 8, 8>}]} {
    %c0 = arith.constant 0 : index
    %c0_0 = arith.constant 0 : index
    %c0_1 = arith.constant 0 : index
    %0 = vector.load %arg1[%c0, %c0_0, %c0_1] : memref<1x8x32xf32, #tpu.memory_space<vmem>>, vector<1x8x32xf32>
    %1 = vector.shape_cast %0 : vector<1x8x32xf32> to vector<8x32xf32>
    %c0_2 = arith.constant 0 : index
    %c0_3 = arith.constant 0 : index
    %c0_4 = arith.constant 0 : index
    %2 = vector.load %arg2[%c0_2, %c0_3, %c0_4] : memref<1x8x32xf32, #tpu.memory_space<vmem>>, vector<1x8x32xf32>
    %3 = vector.shape_cast %2 : vector<1x8x32xf32> to vector<8x32xf32>
    %c0_5 = arith.constant 0 : index
    %c0_6 = arith.constant 0 : index
    %c0_7 = arith.constant 0 : index
    %4 = vector.load %arg3[%c0_5, %c0_6, %c0_7] : memref<1x8x8xf32, #tpu.memory_space<vmem>>, vector<1x8x8xf32>
    %c0_8 = arith.constant 0 : index
    %c0_9 = arith.constant 0 : index
    %5 = vector.load %arg5[%c0_8, %c0_9] : memref<32x128xf32, #tpu.memory_space<vmem>>, vector<32x128xf32>
    %c0_10 = arith.constant 0 : index
    %c0_11 = arith.constant 0 : index
    %6 = vector.load %arg6[%c0_10, %c0_11] : memref<6x32xf32, #tpu.memory_space<vmem>>, vector<6x32xf32>
    %7 = vector.extract_strided_slice %5 {offsets = [0, 0], sizes = [32, 32], strides = [1, 1]} : vector<32x128xf32> to vector<32x32xf32>
    %8 = vector.extract_strided_slice %5 {offsets = [0, 32], sizes = [32, 64], strides = [1, 1]} : vector<32x128xf32> to vector<32x64xf32>
    %9 = vector.extract_strided_slice %5 {offsets = [0, 96], sizes = [32, 32], strides = [1, 1]} : vector<32x128xf32> to vector<32x32xf32>
    %10 = vector.extract_strided_slice %6 {offsets = [0, 0], sizes = [1, 32], strides = [1, 1]} : vector<6x32xf32> to vector<1x32xf32>
    %11 = vector.extract_strided_slice %6 {offsets = [1, 0], sizes = [1, 32], strides = [1, 1]} : vector<6x32xf32> to vector<1x32xf32>
    %12 = vector.extract_strided_slice %6 {offsets = [2, 0], sizes = [1, 32], strides = [1, 1]} : vector<6x32xf32> to vector<1x32xf32>
    %13 = vector.extract_strided_slice %6 {offsets = [3, 0], sizes = [1, 32], strides = [1, 1]} : vector<6x32xf32> to vector<1x32xf32>
    %14 = vector.extract_strided_slice %6 {offsets = [4, 0], sizes = [1, 32], strides = [1, 1]} : vector<6x32xf32> to vector<1x32xf32>
    %15 = vector.extract_strided_slice %6 {offsets = [5, 0], sizes = [1, 32], strides = [1, 1]} : vector<6x32xf32> to vector<1x32xf32>
    %cst = arith.constant dense<0.000000e+00> : vector<8x32xf32>
    %16 = tpu.matmul %1, %7, %cst {dimension_numbers = #tpu.dot_dimension_numbers<[1], [0], [0], [1], [0, 0, 1, 1], [], []>} : vector<8x32xf32>, vector<32x32xf32>, vector<8x32xf32> -> vector<8x32xf32>
    %17 = vector.broadcast %10 : vector<1x32xf32> to vector<8x32xf32>
    %18 = arith.addf %16, %17 : vector<8x32xf32>
    %cst_12 = arith.constant dense<0.000000e+00> : vector<8x64xf32>
    %19 = tpu.matmul %1, %8, %cst_12 {dimension_numbers = #tpu.dot_dimension_numbers<[1], [0], [0], [1], [0, 0, 1, 1], [], []>} : vector<8x32xf32>, vector<32x64xf32>, vector<8x64xf32> -> vector<8x64xf32>
    %20 = vector.extract_strided_slice %19 {offsets = [0, 0], sizes = [8, 32], strides = [1, 1]} : vector<8x64xf32> to vector<8x32xf32>
    %21 = vector.broadcast %11 : vector<1x32xf32> to vector<8x32xf32>
    %22 = arith.addf %20, %21 : vector<8x32xf32>
    %23 = vector.extract_strided_slice %19 {offsets = [0, 32], sizes = [8, 32], strides = [1, 1]} : vector<8x64xf32> to vector<8x32xf32>
    %24 = vector.broadcast %12 : vector<1x32xf32> to vector<8x32xf32>
    %25 = arith.addf %23, %24 : vector<8x32xf32>
    %26 = vector.shape_cast %4 : vector<1x8x8xf32> to vector<8x8xf32>
    %27 = vector.extract_strided_slice %18 {offsets = [0, 0], sizes = [8, 8], strides = [1, 1]} : vector<8x32xf32> to vector<8x8xf32>
    %28 = vector.extract_strided_slice %22 {offsets = [0, 0], sizes = [8, 8], strides = [1, 1]} : vector<8x32xf32> to vector<8x8xf32>
    %29 = vector.extract_strided_slice %25 {offsets = [0, 0], sizes = [8, 8], strides = [1, 1]} : vector<8x32xf32> to vector<8x8xf32>
    %cst_13 = arith.constant dense<0.000000e+00> : vector<8x8xf32>
    %30 = tpu.matmul %27, %28, %cst_13 {dimension_numbers = #tpu.dot_dimension_numbers<[1], [1], [0], [0], [0, 0, 1, 0], [], []>} : vector<8x8xf32>, vector<8x8xf32>, vector<8x8xf32> -> vector<8x8xf32>
    %cst_14 = arith.constant 0.353553385 : f32
    %31 = vector.broadcast %cst_14 : f32 to vector<8x8xf32>
    %32 = arith.mulf %30, %31 : vector<8x8xf32>
    %33 = arith.addf %32, %26 : vector<8x8xf32>
    %cst_15 = arith.constant dense<0xFF800000> : vector<8xf32>
    %34 = vector.multi_reduction <maximumf>, %33, %cst_15 [1] : vector<8x8xf32> to vector<8xf32>
    %35 = vector.shape_cast %34 : vector<8xf32> to vector<8x1xf32>
    %36 = vector.broadcast %35 : vector<8x1xf32> to vector<8x8xf32>
    %37 = arith.subf %33, %36 : vector<8x8xf32>
    %38 = math.exp %37 : vector<8x8xf32>
    %cst_16 = arith.constant dense<0.000000e+00> : vector<8xf32>
    %39 = vector.multi_reduction <add>, %38, %cst_16 [1] : vector<8x8xf32> to vector<8xf32>
    %40 = vector.shape_cast %39 : vector<8xf32> to vector<8x1xf32>
    %41 = vector.broadcast %40 : vector<8x1xf32> to vector<8x8xf32>
    %42 = arith.divf %38, %41 : vector<8x8xf32>
    %cst_17 = arith.constant dense<0.000000e+00> : vector<8x8xf32>
    %43 = tpu.matmul %42, %29, %cst_17 {dimension_numbers = #tpu.dot_dimension_numbers<[1], [0], [0], [1], [0, 0, 1, 1], [], []>} : vector<8x8xf32>, vector<8x8xf32>, vector<8x8xf32> -> vector<8x8xf32>
    %44 = vector.extract_strided_slice %18 {offsets = [0, 8], sizes = [8, 8], strides = [1, 1]} : vector<8x32xf32> to vector<8x8xf32>
    %45 = vector.extract_strided_slice %22 {offsets = [0, 8], sizes = [8, 8], strides = [1, 1]} : vector<8x32xf32> to vector<8x8xf32>
    %46 = vector.extract_strided_slice %25 {offsets = [0, 8], sizes = [8, 8], strides = [1, 1]} : vector<8x32xf32> to vector<8x8xf32>
    %cst_18 = arith.constant dense<0.000000e+00> : vector<8x8xf32>
    %47 = tpu.matmul %44, %45, %cst_18 {dimension_numbers = #tpu.dot_dimension_numbers<[1], [1], [0], [0], [0, 0, 1, 0], [], []>} : vector<8x8xf32>, vector<8x8xf32>, vector<8x8xf32> -> vector<8x8xf32>
    %cst_19 = arith.constant 0.353553385 : f32
    %48 = vector.broadcast %cst_19 : f32 to vector<8x8xf32>
    %49 = arith.mulf %47, %48 : vector<8x8xf32>
    %50 = arith.addf %49, %26 : vector<8x8xf32>
    %cst_20 = arith.constant dense<0xFF800000> : vector<8xf32>
    %51 = vector.multi_reduction <maximumf>, %50, %cst_20 [1] : vector<8x8xf32> to vector<8xf32>
    %52 = vector.shape_cast %51 : vector<8xf32> to vector<8x1xf32>
    %53 = vector.broadcast %52 : vector<8x1xf32> to vector<8x8xf32>
    %54 = arith.subf %50, %53 : vector<8x8xf32>
    %55 = math.exp %54 : vector<8x8xf32>
    %cst_21 = arith.constant dense<0.000000e+00> : vector<8xf32>
    %56 = vector.multi_reduction <add>, %55, %cst_21 [1] : vector<8x8xf32> to vector<8xf32>
    %57 = vector.shape_cast %56 : vector<8xf32> to vector<8x1xf32>
    %58 = vector.broadcast %57 : vector<8x1xf32> to vector<8x8xf32>
    %59 = arith.divf %55, %58 : vector<8x8xf32>
    %cst_22 = arith.constant dense<0.000000e+00> : vector<8x8xf32>
    %60 = tpu.matmul %59, %46, %cst_22 {dimension_numbers = #tpu.dot_dimension_numbers<[1], [0], [0], [1], [0, 0, 1, 1], [], []>} : vector<8x8xf32>, vector<8x8xf32>, vector<8x8xf32> -> vector<8x8xf32>
    %61 = vector.extract_strided_slice %18 {offsets = [0, 16], sizes = [8, 8], strides = [1, 1]} : vector<8x32xf32> to vector<8x8xf32>
    %62 = vector.extract_strided_slice %22 {offsets = [0, 16], sizes = [8, 8], strides = [1, 1]} : vector<8x32xf32> to vector<8x8xf32>
    %63 = vector.extract_strided_slice %25 {offsets = [0, 16], sizes = [8, 8], strides = [1, 1]} : vector<8x32xf32> to vector<8x8xf32>
    %cst_23 = arith.constant dense<0.000000e+00> : vector<8x8xf32>
    %64 = tpu.matmul %61, %62, %cst_23 {dimension_numbers = #tpu.dot_dimension_numbers<[1], [1], [0], [0], [0, 0, 1, 0], [], []>} : vector<8x8xf32>, vector<8x8xf32>, vector<8x8xf32> -> vector<8x8xf32>
    %cst_24 = arith.constant 0.353553385 : f32
    %65 = vector.broadcast %cst_24 : f32 to vector<8x8xf32>
    %66 = arith.mulf %64, %65 : vector<8x8xf32>
    %67 = arith.addf %66, %26 : vector<8x8xf32>
    %cst_25 = arith.constant dense<0xFF800000> : vector<8xf32>
    %68 = vector.multi_reduction <maximumf>, %67, %cst_25 [1] : vector<8x8xf32> to vector<8xf32>
    %69 = vector.shape_cast %68 : vector<8xf32> to vector<8x1xf32>
    %70 = vector.broadcast %69 : vector<8x1xf32> to vector<8x8xf32>
    %71 = arith.subf %67, %70 : vector<8x8xf32>
    %72 = math.exp %71 : vector<8x8xf32>
    %cst_26 = arith.constant dense<0.000000e+00> : vector<8xf32>
    %73 = vector.multi_reduction <add>, %72, %cst_26 [1] : vector<8x8xf32> to vector<8xf32>
    %74 = vector.shape_cast %73 : vector<8xf32> to vector<8x1xf32>
    %75 = vector.broadcast %74 : vector<8x1xf32> to vector<8x8xf32>
    %76 = arith.divf %72, %75 : vector<8x8xf32>
    %cst_27 = arith.constant dense<0.000000e+00> : vector<8x8xf32>
    %77 = tpu.matmul %76, %63, %cst_27 {dimension_numbers = #tpu.dot_dimension_numbers<[1], [0], [0], [1], [0, 0, 1, 1], [], []>} : vector<8x8xf32>, vector<8x8xf32>, vector<8x8xf32> -> vector<8x8xf32>
    %78 = vector.extract_strided_slice %18 {offsets = [0, 24], sizes = [8, 8], strides = [1, 1]} : vector<8x32xf32> to vector<8x8xf32>
    %79 = vector.extract_strided_slice %22 {offsets = [0, 24], sizes = [8, 8], strides = [1, 1]} : vector<8x32xf32> to vector<8x8xf32>
    %80 = vector.extract_strided_slice %25 {offsets = [0, 24], sizes = [8, 8], strides = [1, 1]} : vector<8x32xf32> to vector<8x8xf32>
    %cst_28 = arith.constant dense<0.000000e+00> : vector<8x8xf32>
    %81 = tpu.matmul %78, %79, %cst_28 {dimension_numbers = #tpu.dot_dimension_numbers<[1], [1], [0], [0], [0, 0, 1, 0], [], []>} : vector<8x8xf32>, vector<8x8xf32>, vector<8x8xf32> -> vector<8x8xf32>
    %cst_29 = arith.constant 0.353553385 : f32
    %82 = vector.broadcast %cst_29 : f32 to vector<8x8xf32>
    %83 = arith.mulf %81, %82 : vector<8x8xf32>
    %84 = arith.addf %83, %26 : vector<8x8xf32>
    %cst_30 = arith.constant dense<0xFF800000> : vector<8xf32>
    %85 = vector.multi_reduction <maximumf>, %84, %cst_30 [1] : vector<8x8xf32> to vector<8xf32>
    %86 = vector.shape_cast %85 : vector<8xf32> to vector<8x1xf32>
    %87 = vector.broadcast %86 : vector<8x1xf32> to vector<8x8xf32>
    %88 = arith.subf %84, %87 : vector<8x8xf32>
    %89 = math.exp %88 : vector<8x8xf32>
    %cst_31 = arith.constant dense<0.000000e+00> : vector<8xf32>
    %90 = vector.multi_reduction <add>, %89, %cst_31 [1] : vector<8x8xf32> to vector<8xf32>
    %91 = vector.shape_cast %90 : vector<8xf32> to vector<8x1xf32>
    %92 = vector.broadcast %91 : vector<8x1xf32> to vector<8x8xf32>
    %93 = arith.divf %89, %92 : vector<8x8xf32>
    %cst_32 = arith.constant dense<0.000000e+00> : vector<8x8xf32>
    %94 = tpu.matmul %93, %80, %cst_32 {dimension_numbers = #tpu.dot_dimension_numbers<[1], [0], [0], [1], [0, 0, 1, 1], [], []>} : vector<8x8xf32>, vector<8x8xf32>, vector<8x8xf32> -> vector<8x8xf32>
    %95 = vector.shape_cast %42 : vector<8x8xf32> to vector<1x8x8xf32>
    %96 = vector.shape_cast %59 : vector<8x8xf32> to vector<1x8x8xf32>
    %97 = vector.shape_cast %76 : vector<8x8xf32> to vector<1x8x8xf32>
    %98 = vector.shape_cast %93 : vector<8x8xf32> to vector<1x8x8xf32>
    %99 = tpu.concatenate %95, %96, %97, %98 in 0 : vector<1x8x8xf32>, vector<1x8x8xf32>, vector<1x8x8xf32>, vector<1x8x8xf32> -> vector<4x8x8xf32>
    %c0_33 = arith.constant 0 : index
    %c0_34 = arith.constant 0 : index
    %c0_35 = arith.constant 0 : index
    %c0_36 = arith.constant 0 : index
    %100 = vector.load %arg13[%c0_33, %c0_34, %c0_35, %c0_36] : memref<1x4x8x8xf32, #tpu.memory_space<vmem>>, vector<1x4x8x8xf32>
    %101 = vector.shape_cast %100 : vector<1x4x8x8xf32> to vector<4x8x8xf32>
    %102 = vector.shape_cast %99 : vector<4x8x8xf32> to vector<1x4x8x8xf32>
    tpu.vector_store %arg13[%c0_33, %c0_34, %c0_35, %c0_36], %102 {strides = array<i32>} : memref<1x4x8x8xf32, #tpu.memory_space<vmem>>, vector<1x4x8x8xf32>,
    %103 = tpu.concatenate %43, %60, %77, %94 in 1 : vector<8x8xf32>, vector<8x8xf32>, vector<8x8xf32>, vector<8x8xf32> -> vector<8x32xf32>
    %cst_37 = arith.constant dense<0.000000e+00> : vector<8x32xf32>
    %104 = tpu.matmul %103, %9, %cst_37 {dimension_numbers = #tpu.dot_dimension_numbers<[1], [0], [0], [1], [0, 0, 1, 1], [], []>} : vector<8x32xf32>, vector<32x32xf32>, vector<8x32xf32> -> vector<8x32xf32>
    %105 = vector.broadcast %13 : vector<1x32xf32> to vector<8x32xf32>
    %106 = arith.addf %104, %105 : vector<8x32xf32>
    %107 = arith.addf %106, %1 : vector<8x32xf32>
    %cst_38 = arith.constant dense<0.000000e+00> : vector<8xf32>
    %108 = vector.multi_reduction <add>, %107, %cst_38 [1] : vector<8x32xf32> to vector<8xf32>
    %109 = vector.shape_cast %108 : vector<8xf32> to vector<8x1xf32>
    %cst_39 = arith.constant 3.200000e+01 : f32
    %110 = vector.broadcast %cst_39 : f32 to vector<8x1xf32>
    %111 = arith.divf %109, %110 : vector<8x1xf32>
    %112 = vector.broadcast %111 : vector<8x1xf32> to vector<8x32xf32>
    %113 = arith.subf %107, %112 : vector<8x32xf32>
    %114 = arith.mulf %113, %113 : vector<8x32xf32>
    %cst_40 = arith.constant dense<0.000000e+00> : vector<8xf32>
    %115 = vector.multi_reduction <add>, %114, %cst_40 [1] : vector<8x32xf32> to vector<8xf32>
    %116 = vector.shape_cast %115 : vector<8xf32> to vector<8x1xf32>
    %cst_41 = arith.constant 3.200000e+01 : f32
    %117 = vector.broadcast %cst_41 : f32 to vector<8x1xf32>
    %118 = arith.divf %116, %117 : vector<8x1xf32>
    %cst_42 = arith.constant 9.99999974E-6 : f32
    %119 = vector.broadcast %cst_42 : f32 to vector<8x1xf32>
    %120 = arith.addf %118, %119 : vector<8x1xf32>
    %121 = math.rsqrt %120 : vector<8x1xf32>
    %122 = vector.broadcast %121 : vector<8x1xf32> to vector<8x32xf32>
    %123 = arith.mulf %113, %122 : vector<8x32xf32>
    %124 = vector.broadcast %14 : vector<1x32xf32> to vector<8x32xf32>
    %125 = arith.mulf %123, %124 : vector<8x32xf32>
    %126 = vector.broadcast %15 : vector<1x32xf32> to vector<8x32xf32>
    %127 = arith.addf %125, %126 : vector<8x32xf32>
    %c0_43 = arith.constant 0 : index
    %c0_44 = arith.constant 0 : index
    %c0_45 = arith.constant 0 : index
    %128 = vector.load %arg4[%c0_43, %c0_44, %c0_45] : memref<1x8x8xf32, #tpu.memory_space<vmem>>, vector<1x8x8xf32>
    %c0_46 = arith.constant 0 : index
    %c0_47 = arith.constant 0 : index
    %129 = vector.load %arg7[%c0_46, %c0_47] : memref<32x128xf32, #tpu.memory_space<vmem>>, vector<32x128xf32>
    %c0_48 = arith.constant 0 : index
    %c0_49 = arith.constant 0 : index
    %130 = vector.load %arg8[%c0_48, %c0_49] : memref<6x32xf32, #tpu.memory_space<vmem>>, vector<6x32xf32>
    %131 = vector.extract_strided_slice %129 {offsets = [0, 0], sizes = [32, 32], strides = [1, 1]} : vector<32x128xf32> to vector<32x32xf32>
    %132 = vector.extract_strided_slice %129 {offsets = [0, 32], sizes = [32, 64], strides = [1, 1]} : vector<32x128xf32> to vector<32x64xf32>
    %133 = vector.extract_strided_slice %129 {offsets = [0, 96], sizes = [32, 32], strides = [1, 1]} : vector<32x128xf32> to vector<32x32xf32>
    %134 = vector.extract_strided_slice %130 {offsets = [0, 0], sizes = [1, 32], strides = [1, 1]} : vector<6x32xf32> to vector<1x32xf32>
    %135 = vector.extract_strided_slice %130 {offsets = [1, 0], sizes = [1, 32], strides = [1, 1]} : vector<6x32xf32> to vector<1x32xf32>
    %136 = vector.extract_strided_slice %130 {offsets = [2, 0], sizes = [1, 32], strides = [1, 1]} : vector<6x32xf32> to vector<1x32xf32>
    %137 = vector.extract_strided_slice %130 {offsets = [3, 0], sizes = [1, 32], strides = [1, 1]} : vector<6x32xf32> to vector<1x32xf32>
    %138 = vector.extract_strided_slice %130 {offsets = [4, 0], sizes = [1, 32], strides = [1, 1]} : vector<6x32xf32> to vector<1x32xf32>
    %139 = vector.extract_strided_slice %130 {offsets = [5, 0], sizes = [1, 32], strides = [1, 1]} : vector<6x32xf32> to vector<1x32xf32>
    %cst_50 = arith.constant dense<0.000000e+00> : vector<8x32xf32>
    %140 = tpu.matmul %127, %131, %cst_50 {dimension_numbers = #tpu.dot_dimension_numbers<[1], [0], [0], [1], [0, 0, 1, 1], [], []>} : vector<8x32xf32>, vector<32x32xf32>, vector<8x32xf32> -> vector<8x32xf32>
    %141 = vector.broadcast %134 : vector<1x32xf32> to vector<8x32xf32>
    %142 = arith.addf %140, %141 : vector<8x32xf32>
    %cst_51 = arith.constant dense<0.000000e+00> : vector<8x64xf32>
    %143 = tpu.matmul %3, %132, %cst_51 {dimension_numbers = #tpu.dot_dimension_numbers<[1], [0], [0], [1], [0, 0, 1, 1], [], []>} : vector<8x32xf32>, vector<32x64xf32>, vector<8x64xf32> -> vector<8x64xf32>
    %144 = vector.extract_strided_slice %143 {offsets = [0, 0], sizes = [8, 32], strides = [1, 1]} : vector<8x64xf32> to vector<8x32xf32>
    %145 = vector.broadcast %135 : vector<1x32xf32> to vector<8x32xf32>
    %146 = arith.addf %144, %145 : vector<8x32xf32>
    %147 = vector.extract_strided_slice %143 {offsets = [0, 32], sizes = [8, 32], strides = [1, 1]} : vector<8x64xf32> to vector<8x32xf32>
    %148 = vector.broadcast %136 : vector<1x32xf32> to vector<8x32xf32>
    %149 = arith.addf %147, %148 : vector<8x32xf32>
    %150 = vector.shape_cast %128 : vector<1x8x8xf32> to vector<8x8xf32>
    %151 = vector.extract_strided_slice %142 {offsets = [0, 0], sizes = [8, 8], strides = [1, 1]} : vector<8x32xf32> to vector<8x8xf32>
    %152 = vector.extract_strided_slice %146 {offsets = [0, 0], sizes = [8, 8], strides = [1, 1]} : vector<8x32xf32> to vector<8x8xf32>
    %153 = vector.extract_strided_slice %149 {offsets = [0, 0], sizes = [8, 8], strides = [1, 1]} : vector<8x32xf32> to vector<8x8xf32>
    %cst_52 = arith.constant dense<0.000000e+00> : vector<8x8xf32>
    %154 = tpu.matmul %151, %152, %cst_52 {dimension_numbers = #tpu.dot_dimension_numbers<[1], [1], [0], [0], [0, 0, 1, 0], [], []>} : vector<8x8xf32>, vector<8x8xf32>, vector<8x8xf32> -> vector<8x8xf32>
    %cst_53 = arith.constant 0.353553385 : f32
    %155 = vector.broadcast %cst_53 : f32 to vector<8x8xf32>
    %156 = arith.mulf %154, %155 : vector<8x8xf32>
    %157 = arith.addf %156, %150 : vector<8x8xf32>
    %cst_54 = arith.constant dense<0xFF800000> : vector<8xf32>
    %158 = vector.multi_reduction <maximumf>, %157, %cst_54 [1] : vector<8x8xf32> to vector<8xf32>
    %159 = vector.shape_cast %158 : vector<8xf32> to vector<8x1xf32>
    %160 = vector.broadcast %159 : vector<8x1xf32> to vector<8x8xf32>
    %161 = arith.subf %157, %160 : vector<8x8xf32>
    %162 = math.exp %161 : vector<8x8xf32>
    %cst_55 = arith.constant dense<0.000000e+00> : vector<8xf32>
    %163 = vector.multi_reduction <add>, %162, %cst_55 [1] : vector<8x8xf32> to vector<8xf32>
    %164 = vector.shape_cast %163 : vector<8xf32> to vector<8x1xf32>
    %165 = vector.broadcast %164 : vector<8x1xf32> to vector<8x8xf32>
    %166 = arith.divf %162, %165 : vector<8x8xf32>
    %cst_56 = arith.constant dense<0.000000e+00> : vector<8x8xf32>
    %167 = tpu.matmul %166, %153, %cst_56 {dimension_numbers = #tpu.dot_dimension_numbers<[1], [0], [0], [1], [0, 0, 1, 1], [], []>} : vector<8x8xf32>, vector<8x8xf32>, vector<8x8xf32> -> vector<8x8xf32>
    %168 = vector.extract_strided_slice %142 {offsets = [0, 8], sizes = [8, 8], strides = [1, 1]} : vector<8x32xf32> to vector<8x8xf32>
    %169 = vector.extract_strided_slice %146 {offsets = [0, 8], sizes = [8, 8], strides = [1, 1]} : vector<8x32xf32> to vector<8x8xf32>
    %170 = vector.extract_strided_slice %149 {offsets = [0, 8], sizes = [8, 8], strides = [1, 1]} : vector<8x32xf32> to vector<8x8xf32>
    %cst_57 = arith.constant dense<0.000000e+00> : vector<8x8xf32>
    %171 = tpu.matmul %168, %169, %cst_57 {dimension_numbers = #tpu.dot_dimension_numbers<[1], [1], [0], [0], [0, 0, 1, 0], [], []>} : vector<8x8xf32>, vector<8x8xf32>, vector<8x8xf32> -> vector<8x8xf32>
    %cst_58 = arith.constant 0.353553385 : f32
    %172 = vector.broadcast %cst_58 : f32 to vector<8x8xf32>
    %173 = arith.mulf %171, %172 : vector<8x8xf32>
    %174 = arith.addf %173, %150 : vector<8x8xf32>
    %cst_59 = arith.constant dense<0xFF800000> : vector<8xf32>
    %175 = vector.multi_reduction <maximumf>, %174, %cst_59 [1] : vector<8x8xf32> to vector<8xf32>
    %176 = vector.shape_cast %175 : vector<8xf32> to vector<8x1xf32>
    %177 = vector.broadcast %176 : vector<8x1xf32> to vector<8x8xf32>
    %178 = arith.subf %174, %177 : vector<8x8xf32>
    %179 = math.exp %178 : vector<8x8xf32>
    %cst_60 = arith.constant dense<0.000000e+00> : vector<8xf32>
    %180 = vector.multi_reduction <add>, %179, %cst_60 [1] : vector<8x8xf32> to vector<8xf32>
    %181 = vector.shape_cast %180 : vector<8xf32> to vector<8x1xf32>
    %182 = vector.broadcast %181 : vector<8x1xf32> to vector<8x8xf32>
    %183 = arith.divf %179, %182 : vector<8x8xf32>
    %cst_61 = arith.constant dense<0.000000e+00> : vector<8x8xf32>
    %184 = tpu.matmul %183, %170, %cst_61 {dimension_numbers = #tpu.dot_dimension_numbers<[1], [0], [0], [1], [0, 0, 1, 1], [], []>} : vector<8x8xf32>, vector<8x8xf32>, vector<8x8xf32> -> vector<8x8xf32>
    %185 = vector.extract_strided_slice %142 {offsets = [0, 16], sizes = [8, 8], strides = [1, 1]} : vector<8x32xf32> to vector<8x8xf32>
    %186 = vector.extract_strided_slice %146 {offsets = [0, 16], sizes = [8, 8], strides = [1, 1]} : vector<8x32xf32> to vector<8x8xf32>
    %187 = vector.extract_strided_slice %149 {offsets = [0, 16], sizes = [8, 8], strides = [1, 1]} : vector<8x32xf32> to vector<8x8xf32>
    %cst_62 = arith.constant dense<0.000000e+00> : vector<8x8xf32>
    %188 = tpu.matmul %185, %186, %cst_62 {dimension_numbers = #tpu.dot_dimension_numbers<[1], [1], [0], [0], [0, 0, 1, 0], [], []>} : vector<8x8xf32>, vector<8x8xf32>, vector<8x8xf32> -> vector<8x8xf32>
    %cst_63 = arith.constant 0.353553385 : f32
    %189 = vector.broadcast %cst_63 : f32 to vector<8x8xf32>
    %190 = arith.mulf %188, %189 : vector<8x8xf32>
    %191 = arith.addf %190, %150 : vector<8x8xf32>
    %cst_64 = arith.constant dense<0xFF800000> : vector<8xf32>
    %192 = vector.multi_reduction <maximumf>, %191, %cst_64 [1] : vector<8x8xf32> to vector<8xf32>
    %193 = vector.shape_cast %192 : vector<8xf32> to vector<8x1xf32>
    %194 = vector.broadcast %193 : vector<8x1xf32> to vector<8x8xf32>
    %195 = arith.subf %191, %194 : vector<8x8xf32>
    %196 = math.exp %195 : vector<8x8xf32>
    %cst_65 = arith.constant dense<0.000000e+00> : vector<8xf32>
    %197 = vector.multi_reduction <add>, %196, %cst_65 [1] : vector<8x8xf32> to vector<8xf32>
    %198 = vector.shape_cast %197 : vector<8xf32> to vector<8x1xf32>
    %199 = vector.broadcast %198 : vector<8x1xf32> to vector<8x8xf32>
    %200 = arith.divf %196, %199 : vector<8x8xf32>
    %cst_66 = arith.constant dense<0.000000e+00> : vector<8x8xf32>
    %201 = tpu.matmul %200, %187, %cst_66 {dimension_numbers = #tpu.dot_dimension_numbers<[1], [0], [0], [1], [0, 0, 1, 1], [], []>} : vector<8x8xf32>, vector<8x8xf32>, vector<8x8xf32> -> vector<8x8xf32>
    %202 = vector.extract_strided_slice %142 {offsets = [0, 24], sizes = [8, 8], strides = [1, 1]} : vector<8x32xf32> to vector<8x8xf32>
    %203 = vector.extract_strided_slice %146 {offsets = [0, 24], sizes = [8, 8], strides = [1, 1]} : vector<8x32xf32> to vector<8x8xf32>
    %204 = vector.extract_strided_slice %149 {offsets = [0, 24], sizes = [8, 8], strides = [1, 1]} : vector<8x32xf32> to vector<8x8xf32>
    %cst_67 = arith.constant dense<0.000000e+00> : vector<8x8xf32>
    %205 = tpu.matmul %202, %203, %cst_67 {dimension_numbers = #tpu.dot_dimension_numbers<[1], [1], [0], [0], [0, 0, 1, 0], [], []>} : vector<8x8xf32>, vector<8x8xf32>, vector<8x8xf32> -> vector<8x8xf32>
    %cst_68 = arith.constant 0.353553385 : f32
    %206 = vector.broadcast %cst_68 : f32 to vector<8x8xf32>
    %207 = arith.mulf %205, %206 : vector<8x8xf32>
    %208 = arith.addf %207, %150 : vector<8x8xf32>
    %cst_69 = arith.constant dense<0xFF800000> : vector<8xf32>
    %209 = vector.multi_reduction <maximumf>, %208, %cst_69 [1] : vector<8x8xf32> to vector<8xf32>
    %210 = vector.shape_cast %209 : vector<8xf32> to vector<8x1xf32>
    %211 = vector.broadcast %210 : vector<8x1xf32> to vector<8x8xf32>
    %212 = arith.subf %208, %211 : vector<8x8xf32>
    %213 = math.exp %212 : vector<8x8xf32>
    %cst_70 = arith.constant dense<0.000000e+00> : vector<8xf32>
    %214 = vector.multi_reduction <add>, %213, %cst_70 [1] : vector<8x8xf32> to vector<8xf32>
    %215 = vector.shape_cast %214 : vector<8xf32> to vector<8x1xf32>
    %216 = vector.broadcast %215 : vector<8x1xf32> to vector<8x8xf32>
    %217 = arith.divf %213, %216 : vector<8x8xf32>
    %cst_71 = arith.constant dense<0.000000e+00> : vector<8x8xf32>
    %218 = tpu.matmul %217, %204, %cst_71 {dimension_numbers = #tpu.dot_dimension_numbers<[1], [0], [0], [1], [0, 0, 1, 1], [], []>} : vector<8x8xf32>, vector<8x8xf32>, vector<8x8xf32> -> vector<8x8xf32>
    %219 = vector.shape_cast %166 : vector<8x8xf32> to vector<1x8x8xf32>
    %220 = vector.shape_cast %183 : vector<8x8xf32> to vector<1x8x8xf32>
    %221 = vector.shape_cast %200 : vector<8x8xf32> to vector<1x8x8xf32>
    %222 = vector.shape_cast %217 : vector<8x8xf32> to vector<1x8x8xf32>
    %223 = tpu.concatenate %219, %220, %221, %222 in 0 : vector<1x8x8xf32>, vector<1x8x8xf32>, vector<1x8x8xf32>, vector<1x8x8xf32> -> vector<4x8x8xf32>
    %c0_72 = arith.constant 0 : index
    %c0_73 = arith.constant 0 : index
    %c0_74 = arith.constant 0 : index
    %c0_75 = arith.constant 0 : index
    %224 = vector.load %arg14[%c0_72, %c0_73, %c0_74, %c0_75] : memref<1x4x8x8xf32, #tpu.memory_space<vmem>>, vector<1x4x8x8xf32>
    %225 = vector.shape_cast %224 : vector<1x4x8x8xf32> to vector<4x8x8xf32>
    %226 = vector.shape_cast %223 : vector<4x8x8xf32> to vector<1x4x8x8xf32>
    tpu.vector_store %arg14[%c0_72, %c0_73, %c0_74, %c0_75], %226 {strides = array<i32>} : memref<1x4x8x8xf32, #tpu.memory_space<vmem>>, vector<1x4x8x8xf32>,
    %227 = tpu.concatenate %167, %184, %201, %218 in 1 : vector<8x8xf32>, vector<8x8xf32>, vector<8x8xf32>, vector<8x8xf32> -> vector<8x32xf32>
    %cst_76 = arith.constant dense<0.000000e+00> : vector<8x32xf32>
    %228 = tpu.matmul %227, %133, %cst_76 {dimension_numbers = #tpu.dot_dimension_numbers<[1], [0], [0], [1], [0, 0, 1, 1], [], []>} : vector<8x32xf32>, vector<32x32xf32>, vector<8x32xf32> -> vector<8x32xf32>
    %229 = vector.broadcast %137 : vector<1x32xf32> to vector<8x32xf32>
    %230 = arith.addf %228, %229 : vector<8x32xf32>
    %231 = arith.addf %230, %127 : vector<8x32xf32>
    %cst_77 = arith.constant dense<0.000000e+00> : vector<8xf32>
    %232 = vector.multi_reduction <add>, %231, %cst_77 [1] : vector<8x32xf32> to vector<8xf32>
    %233 = vector.shape_cast %232 : vector<8xf32> to vector<8x1xf32>
    %cst_78 = arith.constant 3.200000e+01 : f32
    %234 = vector.broadcast %cst_78 : f32 to vector<8x1xf32>
    %235 = arith.divf %233, %234 : vector<8x1xf32>
    %236 = vector.broadcast %235 : vector<8x1xf32> to vector<8x32xf32>
    %237 = arith.subf %231, %236 : vector<8x32xf32>
    %238 = arith.mulf %237, %237 : vector<8x32xf32>
    %cst_79 = arith.constant dense<0.000000e+00> : vector<8xf32>
    %239 = vector.multi_reduction <add>, %238, %cst_79 [1] : vector<8x32xf32> to vector<8xf32>
    %240 = vector.shape_cast %239 : vector<8xf32> to vector<8x1xf32>
    %cst_80 = arith.constant 3.200000e+01 : f32
    %241 = vector.broadcast %cst_80 : f32 to vector<8x1xf32>
    %242 = arith.divf %240, %241 : vector<8x1xf32>
    %cst_81 = arith.constant 9.99999974E-6 : f32
    %243 = vector.broadcast %cst_81 : f32 to vector<8x1xf32>
    %244 = arith.addf %242, %243 : vector<8x1xf32>
    %245 = math.rsqrt %244 : vector<8x1xf32>
    %246 = vector.broadcast %245 : vector<8x1xf32> to vector<8x32xf32>
    %247 = arith.mulf %237, %246 : vector<8x32xf32>
    %248 = vector.broadcast %138 : vector<1x32xf32> to vector<8x32xf32>
    %249 = arith.mulf %247, %248 : vector<8x32xf32>
    %250 = vector.broadcast %139 : vector<1x32xf32> to vector<8x32xf32>
    %251 = arith.addf %249, %250 : vector<8x32xf32>
    %c0_82 = arith.constant 0 : index
    %c0_83 = arith.constant 0 : index
    %252 = vector.load %arg9[%c0_82, %c0_83] : memref<32x64xf32, #tpu.memory_space<vmem>>, vector<32x64xf32>
    %c0_84 = arith.constant 0 : index
    %c0_85 = arith.constant 0 : index
    %253 = vector.load %arg10[%c0_84, %c0_85] : memref<64x32xf32, #tpu.memory_space<vmem>>, vector<64x32xf32>
    %c0_86 = arith.constant 0 : index
    %c0_87 = arith.constant 0 : index
    %254 = vector.load %arg11[%c0_86, %c0_87] : memref<4x64xf32, #tpu.memory_space<vmem>>, vector<4x64xf32>
    %255 = vector.extract_strided_slice %254 {offsets = [0, 0], sizes = [1, 64], strides = [1, 1]} : vector<4x64xf32> to vector<1x64xf32>
    %256 = vector.extract_strided_slice %254 {offsets = [1, 0], sizes = [1, 32], strides = [1, 1]} : vector<4x64xf32> to vector<1x32xf32>
    %257 = vector.extract_strided_slice %254 {offsets = [2, 0], sizes = [1, 32], strides = [1, 1]} : vector<4x64xf32> to vector<1x32xf32>
    %258 = vector.extract_strided_slice %254 {offsets = [3, 0], sizes = [1, 32], strides = [1, 1]} : vector<4x64xf32> to vector<1x32xf32>
    %cst_88 = arith.constant dense<0.000000e+00> : vector<8x64xf32>
    %259 = tpu.matmul %251, %252, %cst_88 {dimension_numbers = #tpu.dot_dimension_numbers<[1], [0], [0], [1], [0, 0, 1, 1], [], []>} : vector<8x32xf32>, vector<32x64xf32>, vector<8x64xf32> -> vector<8x64xf32>
    %260 = vector.broadcast %255 : vector<1x64xf32> to vector<8x64xf32>
    %261 = arith.addf %259, %260 : vector<8x64xf32>
    %cst_89 = arith.constant 0.000000e+00 : f32
    %262 = vector.broadcast %cst_89 : f32 to vector<8x64xf32>
    %263 = arith.maximumf %261, %262 : vector<8x64xf32>
    %cst_90 = arith.constant dense<0.000000e+00> : vector<8x32xf32>
    %264 = tpu.matmul %263, %253, %cst_90 {dimension_numbers = #tpu.dot_dimension_numbers<[1], [0], [0], [1], [0, 0, 1, 1], [], []>} : vector<8x64xf32>, vector<64x32xf32>, vector<8x32xf32> -> vector<8x32xf32>
    %265 = vector.broadcast %256 : vector<1x32xf32> to vector<8x32xf32>
    %266 = arith.addf %264, %265 : vector<8x32xf32>
    %267 = arith.addf %266, %251 : vector<8x32xf32>
    %cst_91 = arith.constant dense<0.000000e+00> : vector<8xf32>
    %268 = vector.multi_reduction <add>, %267, %cst_91 [1] : vector<8x32xf32> to vector<8xf32>
    %269 = vector.shape_cast %268 : vector<8xf32> to vector<8x1xf32>
    %cst_92 = arith.constant 3.200000e+01 : f32
    %270 = vector.broadcast %cst_92 : f32 to vector<8x1xf32>
    %271 = arith.divf %269, %270 : vector<8x1xf32>
    %272 = vector.broadcast %271 : vector<8x1xf32> to vector<8x32xf32>
    %273 = arith.subf %267, %272 : vector<8x32xf32>
    %274 = arith.mulf %273, %273 : vector<8x32xf32>
    %cst_93 = arith.constant dense<0.000000e+00> : vector<8xf32>
    %275 = vector.multi_reduction <add>, %274, %cst_93 [1] : vector<8x32xf32> to vector<8xf32>
    %276 = vector.shape_cast %275 : vector<8xf32> to vector<8x1xf32>
    %cst_94 = arith.constant 3.200000e+01 : f32
    %277 = vector.broadcast %cst_94 : f32 to vector<8x1xf32>
    %278 = arith.divf %276, %277 : vector<8x1xf32>
    %cst_95 = arith.constant 9.99999974E-6 : f32
    %279 = vector.broadcast %cst_95 : f32 to vector<8x1xf32>
    %280 = arith.addf %278, %279 : vector<8x1xf32>
    %281 = math.rsqrt %280 : vector<8x1xf32>
    %282 = vector.broadcast %281 : vector<8x1xf32> to vector<8x32xf32>
    %283 = arith.mulf %273, %282 : vector<8x32xf32>
    %284 = vector.broadcast %257 : vector<1x32xf32> to vector<8x32xf32>
    %285 = arith.mulf %283, %284 : vector<8x32xf32>
    %286 = vector.broadcast %258 : vector<1x32xf32> to vector<8x32xf32>
    %287 = arith.addf %285, %286 : vector<8x32xf32>
    %288 = vector.shape_cast %287 : vector<8x32xf32> to vector<1x8x32xf32>
    %c0_96 = arith.constant 0 : index
    %c0_97 = arith.constant 0 : index
    %c0_98 = arith.constant 0 : index
    %289 = vector.load %arg12[%c0_96, %c0_97, %c0_98] : memref<1x8x32xf32, #tpu.memory_space<vmem>>, vector<1x8x32xf32>
    tpu.vector_store %arg12[%c0_96, %c0_97, %c0_98], %288 {strides = array<i32>} : memref<1x8x32xf32, #tpu.memory_space<vmem>>, vector<1x8x32xf32>,
    return
  }
  func.func @transform_0(%arg0: i32) -> (i32, i32, i32) {
    %c0_i32 = arith.constant 0 : i32
    %c0_i32_0 = arith.constant 0 : i32
    %c0_i32_1 = arith.constant 0 : i32
    return %arg0, %c0_i32, %c0_i32_0 : i32, i32, i32
  }
  func.func @transform_1(%arg0: i32) -> (i32, i32, i32) {
    %c0_i32 = arith.constant 0 : i32
    %c0_i32_0 = arith.constant 0 : i32
    %c0_i32_1 = arith.constant 0 : i32
    return %arg0, %c0_i32, %c0_i32_0 : i32, i32, i32
  }
  func.func @transform_2(%arg0: i32) -> (i32, i32, i32) {
    %c0_i32 = arith.constant 0 : i32
    %c0_i32_0 = arith.constant 0 : i32
    %c0_i32_1 = arith.constant 0 : i32
    return %arg0, %c0_i32, %c0_i32_0 : i32, i32, i32
  }
  func.func @transform_3(%arg0: i32) -> (i32, i32, i32) {
    %c0_i32 = arith.constant 0 : i32
    %c0_i32_0 = arith.constant 0 : i32
    %c0_i32_1 = arith.constant 0 : i32
    return %arg0, %c0_i32, %c0_i32_0 : i32, i32, i32
  }
  func.func @transform_4(%arg0: i32) -> (i32, i32) {
    %c0_i32 = arith.constant 0 : i32
    %c0_i32_0 = arith.constant 0 : i32
    %c0_i32_1 = arith.constant 0 : i32
    return %c0_i32, %c0_i32_0 : i32, i32
  }
  func.func @transform_5(%arg0: i32) -> (i32, i32) {
    %c0_i32 = arith.constant 0 : i32
    %c0_i32_0 = arith.constant 0 : i32
    %c0_i32_1 = arith.constant 0 : i32
    return %c0_i32, %c0_i32_0 : i32, i32
  }
  func.func @transform_6(%arg0: i32) -> (i32, i32) {
    %c0_i32 = arith.constant 0 : i32
    %c0_i32_0 = arith.constant 0 : i32
    %c0_i32_1 = arith.constant 0 : i32
    return %c0_i32, %c0_i32_0 : i32, i32
  }
  func.func @transform_7(%arg0: i32) -> (i32, i32) {
    %c0_i32 = arith.constant 0 : i32
    %c0_i32_0 = arith.constant 0 : i32
    %c0_i32_1 = arith.constant 0 : i32
    return %c0_i32, %c0_i32_0 : i32, i32
  }
  func.func @transform_8(%arg0: i32) -> (i32, i32) {
    %c0_i32 = arith.constant 0 : i32
    %c0_i32_0 = arith.constant 0 : i32
    %c0_i32_1 = arith.constant 0 : i32
    return %c0_i32, %c0_i32_0 : i32, i32
  }
  func.func @transform_9(%arg0: i32) -> (i32, i32) {
    %c0_i32 = arith.constant 0 : i32
    %c0_i32_0 = arith.constant 0 : i32
    %c0_i32_1 = arith.constant 0 : i32
    return %c0_i32, %c0_i32_0 : i32, i32
  }
  func.func @transform_10(%arg0: i32) -> (i32, i32) {
    %c0_i32 = arith.constant 0 : i32
    %c0_i32_0 = arith.constant 0 : i32
    %c0_i32_1 = arith.constant 0 : i32
    return %c0_i32, %c0_i32_0 : i32, i32
  }
  func.func @transform_11(%arg0: i32) -> (i32, i32, i32) {
    %c0_i32 = arith.constant 0 : i32
    %c0_i32_0 = arith.constant 0 : i32
    %c0_i32_1 = arith.constant 0 : i32
    return %arg0, %c0_i32, %c0_i32_0 : i32, i32, i32
  }
  func.func @transform_12(%arg0: i32) -> (i32, i32, i32, i32) {
    %c0_i32 = arith.constant 0 : i32
    %c0_i32_0 = arith.constant 0 : i32
    %c0_i32_1 = arith.constant 0 : i32
    %c0_i32_2 = arith.constant 0 : i32
    return %arg0, %c0_i32, %c0_i32_0, %c0_i32_1 : i32, i32, i32, i32
  }
  func.func @transform_13(%arg0: i32) -> (i32, i32, i32, i32) {
    %c0_i32 = arith.constant 0 : i32
    %c0_i32_0 = arith.constant 0 : i32
    %c0_i32_1 = arith.constant 0 : i32
    %c0_i32_2 = arith.constant 0 : i32
    return %arg0, %c0_i32, %c0_i32_0, %c0_i32_1 : i32, i32, i32, i32
  }
}

</mosaic_0001>

<llo_original>
// kernel: decoder_layer.1
$region0: #{decoder_layer.1}
  #allocation0 [shape = 'u32[]', space=smem, size = 0x4, offset = 0x4, fixed_abs, tag = 'smem constant byte address 0x4 - core index']
  #allocation1 [shape = 'u32[144,128]{1,0:T(1,128)}', space=vmem, size = 0x12000, scoped, tag = 'internal scratch']
  %s0 = inlined_call_operand.hbm [shape: f32[2,8,32], index: 0, kind: input, shape index: {}]
  %s1 = inlined_call_operand.hbm [shape: f32[2,8,32], index: 1, kind: input, shape index: {}]
  %s2 = inlined_call_operand.vmem [shape: f32[2,8,8], index: 2, kind: input, shape index: {}]
  %s3 = inlined_call_operand.vmem [shape: f32[2,8,8], index: 3, kind: input, shape index: {}]
  %s4 = inlined_call_operand.hbm [shape: f32[32,128], index: 4, kind: input, shape index: {}]
  %s5 = inlined_call_operand.hbm [shape: f32[6,32], index: 5, kind: input, shape index: {}]
  %s6 = inlined_call_operand.vmem [shape: f32[32,128], index: 6, kind: input, shape index: {}]
  %s7 = inlined_call_operand.vmem [shape: f32[6,32], index: 7, kind: input, shape index: {}]
  %s8 = inlined_call_operand.hbm [shape: f32[32,64], index: 8, kind: input, shape index: {}]
  %s9 = inlined_call_operand.vmem [shape: f32[64,32], index: 9, kind: input, shape index: {}]
  %s10 = inlined_call_operand.vmem [shape: f32[4,64], index: 10, kind: input, shape index: {}]
  %s11 = inlined_call_operand.hbm [shape: f32[2,8,32], index: 11, kind: output, shape index: {0}]
  %s12 = inlined_call_operand.hbm [shape: f32[2,4,8,8], index: 12, kind: output, shape index: {1}]
  %s13 = inlined_call_operand.hbm [shape: f32[2,4,8,8], index: 13, kind: output, shape index: {2}]
  %14 = xla_tuple %s11, %s12, %s13
  %s15 = sld [smem:[#allocation0]]
  $region113: #{decoder_layer.1} parent=0
    _
  %s17 = ssub.s32 1, %s15
  %s18 = scalar_select 0, %s17, %s15
  $region1: #{decoder_layer.1} parent=0
    #allocation2 [shape = 'u8[8192]{0}', space=vmem, size = 0x2000, scoped, tag = 'input window, operand 0']
    #allocation3 [shape = 's32[2]{0}', space=sflag, size = 0x8, scoped, tag = 'scoped memory for decoder_layer.1']
    #allocation4 [shape = 's32[2]{0}', space=sflag, size = 0x8, scoped, tag = 'scoped memory for decoder_layer.1']
    #allocation5 [shape = 'u8[8192]{0}', space=vmem, size = 0x2000, scoped, tag = 'input window, operand 1']
    #allocation6 [shape = 's32[2]{0}', space=sflag, size = 0x8, scoped, tag = 'scoped memory for decoder_layer.1']
    #allocation7 [shape = 'u8[16384]{0}', space=vmem, size = 0x4000, scoped, tag = 'input window, operand 4, single buffered']
    #allocation8 [shape = 'u8[4096]{0}', space=vmem, size = 0x1000, scoped, tag = 'input window, operand 5, single buffered']
    #allocation9 [shape = 's32[1]{0}', space=sflag, size = 0x4, scoped, tag = 'scoped memory for decoder_layer.1']
    #allocation10 [shape = 'u8[16384]{0}', space=vmem, size = 0x4000, scoped, tag = 'input window, operand 8, single buffered']
    #allocation11 [shape = 'u8[8192]{0}', space=vmem, size = 0x2000, scoped, tag = 'output window, operand 0']
    #allocation12 [shape = 'u8[32768]{0}', space=vmem, size = 0x8000, scoped, tag = 'output window, operand 1']
    #allocation13 [shape = 's32[2]{0}', space=sflag, size = 0x8, scoped, tag = 'scoped memory for decoder_layer.1']
    #allocation14 [shape = 'u8[32768]{0}', space=vmem, size = 0x8000, scoped, tag = 'output window, operand 2']
    %19 = vsyncpa [#allocation3], 0
    %s20 = scalar_lea.sflag [#allocation3], 1
    %21 = vsyncpa %s20, 0
    %22 = vsyncpa [#allocation6], 0
    %s23 = scalar_lea.sflag [#allocation6], 1
    %24 = vsyncpa %s23, 0
    %25 = vsyncpa [#allocation9], 0
    %26 = vsyncpa [#allocation4], 0
    %s27 = scalar_lea.sflag [#allocation4], 1
    %28 = vsyncpa %s27, 0
    %29 = vsyncpa [#allocation13], 0
    %s30 = scalar_lea.sflag [#allocation13], 1
    %31 = vsyncpa %s30, 0
    loop: start=0, step=1, limit=4
    $region2: #{decoder_layer.1} parent=1 // loop_pre_header
      _
    $region3: #{decoder_layer.1} parent=1 // loop_header
      %s33 = sphi 0, %s37
      %p34 = scmp.ge.s32.totalorder %s33, 4
      %s43 = sphi 0, %s45
      %s46 = sphi 0, %s43
      %s47 = sphi 0, %s46
      %s63 = sphi 0, %s47
      %s69 = sphi 0, %s71
      %s72 = sphi 0, %s69
      %s73 = sphi 0, %s72
      %s89 = sphi 0, %s73
      %s95 = sphi 0, %s97
      %s98 = sphi 0, %s95
      %s99 = sphi 0, %s98
      %s115 = sphi 0, %s99
      %s121 = sphi 0, %s123
      %s124 = sphi 0, %s121
      %s125 = sphi 0, %s124
      %s141 = sphi 0, %s125
      %s145 = sphi 0, %s145
      %s147 = sphi 0, %s145
      %s148 = sphi 0, %s147
      %s162 = sphi 0, %s148
      %s166 = sphi 0, %s166
      %s168 = sphi 0, %s166
      %s169 = sphi 0, %s168
      %s183 = sphi 0, %s169
      %s187 = sphi 0, %s187
      %s189 = sphi 0, %s187
      %s190 = sphi 0, %s189
      %s204 = sphi 0, %s190
      %s208 = sphi 0, %s208
      %s210 = sphi 0, %s208
      %s211 = sphi 0, %s210
      %s225 = sphi 0, %s211
      %s229 = sphi 0, %s229
      %s231 = sphi 0, %s229
      %s232 = sphi 0, %s231
      %s246 = sphi 0, %s232
      %s250 = sphi 0, %s250
      %s252 = sphi 0, %s250
      %s253 = sphi 0, %s252
      %s267 = sphi 0, %s253
      %s271 = sphi 0, %s271
      %s273 = sphi 0, %s271
      %s274 = sphi 0, %s273
      %s288 = sphi 0, %s274
      %s294 = sphi 0, %s296
      %s297 = sphi 0, %s294
      %s298 = sphi 0, %s297
      %s314 = sphi 0, %s298
      %s320 = sphi 0, %s322
      %s323 = sphi 0, %s320
      %s324 = sphi 0, %s323
      %s340 = sphi 0, %s324
      %s346 = sphi 0, %s348
      %s349 = sphi 0, %s346
      %s350 = sphi 0, %s349
      %s366 = sphi 0, %s350
    $region4: #{decoder_layer.1} parent=1 // loop_header_branch
      %36 = sbr.rel (%p34) target = $region8
    $region5: #{decoder_layer.1} parent=1 // loop_body
      %s38 = ssub.s32 %s33, 1
      %s39 = ssub.s32 %s33, 2
      %s40 = sadd.s32 %s33, 1
      %s41 = ssub.s32 %s33, %s40
      %p42 = scmp.eq.s32.totalorder %s41, 0
      %s44 = sadd.s32 %s43, 1
      %s45 = scalar_select %p42, %s43, %s44
      %p48 = pneg %p42
      %p49 = scmp.eq.s32.totalorder %s33, 1
      %p50 = por %p48, %p49
      %p51 = scmp.ne.s32.totalorder %s43, %s46
      %p52 = scmp.eq.s32.totalorder %s33, 0
      %p53 = por %p51, %p52
      %p54 = scmp.ne.s32.totalorder %s43, %s46
      %p55 = scmp.eq.s32.totalorder %s38, 1
      %p56 = por %p54, %p55
      %p57 = scmp.ne.s32.totalorder %s46, %s47
      %p58 = scmp.eq.s32.totalorder %s38, 0
      %p59 = por %p57, %p58
      %p60 = scmp.ne.s32.totalorder %s46, %s47
      %p61 = scmp.eq.s32.totalorder %s39, 1
      %p62 = por %p60, %p61
      %p64 = scmp.ne.s32.totalorder %s47, %s63
      %p65 = scmp.eq.s32.totalorder %s39, 0
      %p66 = por %p64, %p65
      %s67 = ssub.s32 %s33, %s40
      %p68 = scmp.eq.s32.totalorder %s67, 0
      %s70 = sadd.s32 %s69, 1
      %s71 = scalar_select %p68, %s69, %s70
      %p74 = pneg %p68
      %p75 = scmp.eq.s32.totalorder %s33, 1
      %p76 = por %p74, %p75
      %p77 = scmp.ne.s32.totalorder %s69, %s72
      %p78 = scmp.eq.s32.totalorder %s33, 0
      %p79 = por %p77, %p78
      %p80 = scmp.ne.s32.totalorder %s69, %s72
      %p81 = scmp.eq.s32.totalorder %s38, 1
      %p82 = por %p80, %p81
      %p83 = scmp.ne.s32.totalorder %s72, %s73
      %p84 = scmp.eq.s32.totalorder %s38, 0
      %p85 = por %p83, %p84
      %p86 = scmp.ne.s32.totalorder %s72, %s73
      %p87 = scmp.eq.s32.totalorder %s39, 1
      %p88 = por %p86, %p87
      %p90 = scmp.ne.s32.totalorder %s73, %s89
      %p91 = scmp.eq.s32.totalorder %s39, 0
      %p92 = por %p90, %p91
      %s93 = ssub.s32 %s33, %s40
      %p94 = scmp.eq.s32.totalorder %s93, 0
      %s96 = sadd.s32 %s95, 1
      %s97 = scalar_select %p94, %s95, %s96
      %p100 = pneg %p94
      %p101 = scmp.eq.s32.totalorder %s33, 1
      %p102 = por %p100, %p101
      %p103 = scmp.ne.s32.totalorder %s95, %s98
      %p104 = scmp.eq.s32.totalorder %s33, 0
      %p105 = por %p103, %p104
      %p106 = scmp.ne.s32.totalorder %s95, %s98
      %p107 = scmp.eq.s32.totalorder %s38, 1
      %p108 = por %p106, %p107
      %p109 = scmp.ne.s32.totalorder %s98, %s99
      %p110 = scmp.eq.s32.totalorder %s38, 0
      %p111 = por %p109, %p110
      %p112 = scmp.ne.s32.totalorder %s98, %s99
      %p113 = scmp.eq.s32.totalorder %s39, 1
      %p114 = por %p112, %p113
      %p116 = scmp.ne.s32.totalorder %s99, %s115
      %p117 = scmp.eq.s32.totalorder %s39, 0
      %p118 = por %p116, %p117
      %s119 = ssub.s32 %s33, %s40
      %p120 = scmp.eq.s32.totalorder %s119, 0
      %s122 = sadd.s32 %s121, 1
      %s123 = scalar_select %p120, %s121, %s122
      %p126 = pneg %p120
      %p127 = scmp.eq.s32.totalorder %s33, 1
      %p128 = por %p126, %p127
      %p129 = scmp.ne.s32.totalorder %s121, %s124
      %p130 = scmp.eq.s32.totalorder %s33, 0
      %p131 = por %p129, %p130
      %p132 = scmp.ne.s32.totalorder %s121, %s124
      %p133 = scmp.eq.s32.totalorder %s38, 1
      %p134 = por %p132, %p133
      %p135 = scmp.ne.s32.totalorder %s124, %s125
      %p136 = scmp.eq.s32.totalorder %s38, 0
      %p137 = por %p135, %p136
      %p138 = scmp.ne.s32.totalorder %s124, %s125
      %p139 = scmp.eq.s32.totalorder %s39, 1
      %p140 = por %p138, %p139
      %p142 = scmp.ne.s32.totalorder %s125, %s141
      %p143 = scmp.eq.s32.totalorder %s39, 0
      %p144 = por %p142, %p143
      %s146 = sadd.s32 %s145, 1
      %p149 = scmp.eq.s32.totalorder %s33, 1
      %p150 = scmp.ne.s32.totalorder %s145, %s147
      %p151 = scmp.eq.s32.totalorder %s33, 0
      %p152 = por %p150, %p151
      %p153 = scmp.ne.s32.totalorder %s145, %s147
      %p154 = scmp.eq.s32.totalorder %s38, 1
      %p155 = por %p153, %p154
      %p156 = scmp.ne.s32.totalorder %s147, %s148
      %p157 = scmp.eq.s32.totalorder %s38, 0
      %p158 = por %p156, %p157
      %p159 = scmp.ne.s32.totalorder %s147, %s148
      %p160 = scmp.eq.s32.totalorder %s39, 1
      %p161 = por %p159, %p160
      %p163 = scmp.ne.s32.totalorder %s148, %s162
      %p164 = scmp.eq.s32.totalorder %s39, 0
      %p165 = por %p163, %p164
      %s167 = sadd.s32 %s166, 1
      %p170 = scmp.eq.s32.totalorder %s33, 1
      %p171 = scmp.ne.s32.totalorder %s166, %s168
      %p172 = scmp.eq.s32.totalorder %s33, 0
      %p173 = por %p171, %p172
      %p174 = scmp.ne.s32.totalorder %s166, %s168
      %p175 = scmp.eq.s32.totalorder %s38, 1
      %p176 = por %p174, %p175
      %p177 = scmp.ne.s32.totalorder %s168, %s169
      %p178 = scmp.eq.s32.totalorder %s38, 0
      %p179 = por %p177, %p178
      %p180 = scmp.ne.s32.totalorder %s168, %s169
      %p181 = scmp.eq.s32.totalorder %s39, 1
      %p182 = por %p180, %p181
      %p184 = scmp.ne.s32.totalorder %s169, %s183
      %p185 = scmp.eq.s32.totalorder %s39, 0
      %p186 = por %p184, %p185
      %s188 = sadd.s32 %s187, 1
      %p191 = scmp.eq.s32.totalorder %s33, 1
      %p192 = scmp.ne.s32.totalorder %s187, %s189
      %p193 = scmp.eq.s32.totalorder %s33, 0
      %p194 = por %p192, %p193
      %p195 = scmp.ne.s32.totalorder %s187, %s189
      %p196 = scmp.eq.s32.totalorder %s38, 1
      %p197 = por %p195, %p196
      %p198 = scmp.ne.s32.totalorder %s189, %s190
      %p199 = scmp.eq.s32.totalorder %s38, 0
      %p200 = por %p198, %p199
      %p201 = scmp.ne.s32.totalorder %s189, %s190
      %p202 = scmp.eq.s32.totalorder %s39, 1
      %p203 = por %p201, %p202
      %p205 = scmp.ne.s32.totalorder %s190, %s204
      %p206 = scmp.eq.s32.totalorder %s39, 0
      %p207 = por %p205, %p206
      %s209 = sadd.s32 %s208, 1
      %p212 = scmp.eq.s32.totalorder %s33, 1
      %p213 = scmp.ne.s32.totalorder %s208, %s210
      %p214 = scmp.eq.s32.totalorder %s33, 0
      %p215 = por %p213, %p214
      %p216 = scmp.ne.s32.totalorder %s208, %s210
      %p217 = scmp.eq.s32.totalorder %s38, 1
      %p218 = por %p216, %p217
      %p219 = scmp.ne.s32.totalorder %s210, %s211
      %p220 = scmp.eq.s32.totalorder %s38, 0
      %p221 = por %p219, %p220
      %p222 = scmp.ne.s32.totalorder %s210, %s211
      %p223 = scmp.eq.s32.totalorder %s39, 1
      %p224 = por %p222, %p223
      %p226 = scmp.ne.s32.totalorder %s211, %s225
      %p227 = scmp.eq.s32.totalorder %s39, 0
      %p228 = por %p226, %p227
      %s230 = sadd.s32 %s229, 1
      %p233 = scmp.eq.s32.totalorder %s33, 1
      %p234 = scmp.ne.s32.totalorder %s229, %s231
      %p235 = scmp.eq.s32.totalorder %s33, 0
      %p236 = por %p234, %p235
      %p237 = scmp.ne.s32.totalorder %s229, %s231
      %p238 = scmp.eq.s32.totalorder %s38, 1
      %p239 = por %p237, %p238
      %p240 = scmp.ne.s32.totalorder %s231, %s232
      %p241 = scmp.eq.s32.totalorder %s38, 0
      %p242 = por %p240, %p241
      %p243 = scmp.ne.s32.totalorder %s231, %s232
      %p244 = scmp.eq.s32.totalorder %s39, 1
      %p245 = por %p243, %p244
      %p247 = scmp.ne.s32.totalorder %s232, %s246
      %p248 = scmp.eq.s32.totalorder %s39, 0
      %p249 = por %p247, %p248
      %s251 = sadd.s32 %s250, 1
      %p254 = scmp.eq.s32.totalorder %s33, 1
      %p255 = scmp.ne.s32.totalorder %s250, %s252
      %p256 = scmp.eq.s32.totalorder %s33, 0
      %p257 = por %p255, %p256
      %p258 = scmp.ne.s32.totalorder %s250, %s252
      %p259 = scmp.eq.s32.totalorder %s38, 1
      %p260 = por %p258, %p259
      %p261 = scmp.ne.s32.totalorder %s252, %s253
      %p262 = scmp.eq.s32.totalorder %s38, 0
      %p263 = por %p261, %p262
      %p264 = scmp.ne.s32.totalorder %s252, %s253
      %p265 = scmp.eq.s32.totalorder %s39, 1
      %p266 = por %p264, %p265
      %p268 = scmp.ne.s32.totalorder %s253, %s267
      %p269 = scmp.eq.s32.totalorder %s39, 0
      %p270 = por %p268, %p269
      %s272 = sadd.s32 %s271, 1
      %p275 = scmp.eq.s32.totalorder %s33, 1
      %p276 = scmp.ne.s32.totalorder %s271, %s273
      %p277 = scmp.eq.s32.totalorder %s33, 0
      %p278 = por %p276, %p277
      %p279 = scmp.ne.s32.totalorder %s271, %s273
      %p280 = scmp.eq.s32.totalorder %s38, 1
      %p281 = por %p279, %p280
      %p282 = scmp.ne.s32.totalorder %s273, %s274
      %p283 = scmp.eq.s32.totalorder %s38, 0
      %p284 = por %p282, %p283
      %p285 = scmp.ne.s32.totalorder %s273, %s274
      %p286 = scmp.eq.s32.totalorder %s39, 1
      %p287 = por %p285, %p286
      %p289 = scmp.ne.s32.totalorder %s274, %s288
      %p290 = scmp.eq.s32.totalorder %s39, 0
      %p291 = por %p289, %p290
      %s292 = ssub.s32 %s33, %s40
      %p293 = scmp.eq.s32.totalorder %s292, 0
      %s295 = sadd.s32 %s294, 1
      %s296 = scalar_select %p293, %s294, %s295
      %p299 = pneg %p293
      %p300 = scmp.eq.s32.totalorder %s33, 1
      %p301 = por %p299, %p300
      %p302 = scmp.ne.s32.totalorder %s294, %s297
      %p303 = scmp.eq.s32.totalorder %s33, 0
      %p304 = por %p302, %p303
      %p305 = scmp.ne.s32.totalorder %s294, %s297
      %p306 = scmp.eq.s32.totalorder %s38, 1
      %p307 = por %p305, %p306
      %p308 = scmp.ne.s32.totalorder %s297, %s298
      %p309 = scmp.eq.s32.totalorder %s38, 0
      %p310 = por %p308, %p309
      %p311 = scmp.ne.s32.totalorder %s297, %s298
      %p312 = scmp.eq.s32.totalorder %s39, 1
      %p313 = por %p311, %p312
      %p315 = scmp.ne.s32.totalorder %s298, %s314
      %p316 = scmp.eq.s32.totalorder %s39, 0
      %p317 = por %p315, %p316
      %s318 = ssub.s32 %s33, %s40
      %p319 = scmp.eq.s32.totalorder %s318, 0
      %s321 = sadd.s32 %s320, 1
      %s322 = scalar_select %p319, %s320, %s321
      %p325 = pneg %p319
      %p326 = scmp.eq.s32.totalorder %s33, 1
      %p327 = por %p325, %p326
      %p328 = scmp.ne.s32.totalorder %s320, %s323
      %p329 = scmp.eq.s32.totalorder %s33, 0
      %p330 = por %p328, %p329
      %p331 = scmp.ne.s32.totalorder %s320, %s323
      %p332 = scmp.eq.s32.totalorder %s38, 1
      %p333 = por %p331, %p332
      %p334 = scmp.ne.s32.totalorder %s323, %s324
      %p335 = scmp.eq.s32.totalorder %s38, 0
      %p336 = por %p334, %p335
      %p337 = scmp.ne.s32.totalorder %s323, %s324
      %p338 = scmp.eq.s32.totalorder %s39, 1
      %p339 = por %p337, %p338
      %p341 = scmp.ne.s32.totalorder %s324, %s340
      %p342 = scmp.eq.s32.totalorder %s39, 0
      %p343 = por %p341, %p342
      %s344 = ssub.s32 %s33, %s40
      %p345 = scmp.eq.s32.totalorder %s344, 0
      %s347 = sadd.s32 %s346, 1
      %s348 = scalar_select %p345, %s346, %s347
      %p351 = pneg %p345
      %p352 = scmp.eq.s32.totalorder %s33, 1
      %p353 = por %p351, %p352
      %p354 = scmp.ne.s32.totalorder %s346, %s349
      %p355 = scmp.eq.s32.totalorder %s33, 0
      %p356 = por %p354, %p355
      %p357 = scmp.ne.s32.totalorder %s346, %s349
      %p358 = scmp.eq.s32.totalorder %s38, 1
      %p359 = por %p357, %p358
      %p360 = scmp.ne.s32.totalorder %s349, %s350
      %p361 = scmp.eq.s32.totalorder %s38, 0
      %p362 = por %p360, %p361
      %p363 = scmp.ne.s32.totalorder %s349, %s350
      %p364 = scmp.eq.s32.totalorder %s39, 1
      %p365 = por %p363, %p364
      %p367 = scmp.ne.s32.totalorder %s350, %s366
      %p368 = scmp.eq.s32.totalorder %s39, 0
      %p369 = por %p367, %p368
      %p370 = scmp.le.s32.totalorder 1, %s33
      %p371 = scmp.lt.s32.totalorder %s33, 3
      %p372 = pnand %p370, %p371
      %p373 = pneg %p372
      // Predicated region
      $region9: #{decoder_layer.1} parent=5 // pred_check
        _
      $region10: #{decoder_layer.1} parent=5 // pred_check_branch
        %375 = sbr.rel (%p372) target = $region12
      $region11: #{decoder_layer.1} parent=5 // pred_region
        %s376 = ssub.s32 %s33, 1
        // Predicated region
        $region13: #{decoder_layer.1} parent=11 // pred_check
          %p377 = pneg %p158
        $region14: #{decoder_layer.1} parent=11 // pred_check_branch
          %379 = sbr.rel (%p377) target = $region16
        $region15: #{decoder_layer.1} parent=11 // pred_region
          %s381 = ssub.s32 512, 512
          %382 = vsyncadd [#allocation6], %s381
          %s383 = sshll.u32 [#allocation7], 4
          %s384 = int_to_ptr.vmem [resolvable:$true] %s383
          %389 = dma.hbm_to_vmem [thread:$0]  %s4, 512, %s384, [#allocation6], 128, 128, 8
        $region16: #{decoder_layer.1} parent=11 // pred_fallthru
          _
        // Predicated region
        $region17: #{decoder_layer.1} parent=11 // pred_check
          %p390 = pneg %p179
        $region18: #{decoder_layer.1} parent=11 // pred_check_branch
          %392 = sbr.rel (%p390) target = $region20
        $region19: #{decoder_layer.1} parent=11 // pred_region
          %s394 = ssub.s32 128, 128
          %395 = vsyncadd [#allocation9], %s394
          %s397 = sshll.u32 [#allocation8], 4
          %s398 = int_to_ptr.vmem [resolvable:$true] %s397
          %400 = dma.hbm_to_vmem [thread:$0]  %s5, 128, %s398, [#allocation9]
        $region20: #{decoder_layer.1} parent=11 // pred_fallthru
          _
        // Predicated region
        $region21: #{decoder_layer.1} parent=11 // pred_check
          %p401 = pneg %p200
        $region22: #{decoder_layer.1} parent=11 // pred_check_branch
          %403 = sbr.rel (%p401) target = $region24
        $region23: #{decoder_layer.1} parent=11 // pred_region
          _
        $region24: #{decoder_layer.1} parent=11 // pred_fallthru
          _
        // Predicated region
        $region25: #{decoder_layer.1} parent=11 // pred_check
          %p404 = pneg %p221
        $region26: #{decoder_layer.1} parent=11 // pred_check_branch
          %406 = sbr.rel (%p404) target = $region28
        $region27: #{decoder_layer.1} parent=11 // pred_region
          _
        $region28: #{decoder_layer.1} parent=11 // pred_fallthru
          _
        // Predicated region
        $region29: #{decoder_layer.1} parent=11 // pred_check
          %p407 = pneg %p242
        $region30: #{decoder_layer.1} parent=11 // pred_check_branch
          %409 = sbr.rel (%p407) target = $region32
        $region31: #{decoder_layer.1} parent=11 // pred_region
          %s411 = ssub.s32 512, 512
          %412 = vsyncadd [#allocation9], %s411
          %s413 = sshll.u32 [#allocation10], 4
          %s414 = int_to_ptr.vmem [resolvable:$true] %s413
          %419 = dma.hbm_to_vmem [thread:$0]  %s8, 512, %s414, [#allocation9], 128, 128, 8
        $region32: #{decoder_layer.1} parent=11 // pred_fallthru
          _
        // Predicated region
        $region33: #{decoder_layer.1} parent=11 // pred_check
          %p420 = pneg %p263
        $region34: #{decoder_layer.1} parent=11 // pred_check_branch
          %422 = sbr.rel (%p420) target = $region36
        $region35: #{decoder_layer.1} parent=11 // pred_region
          _
        $region36: #{decoder_layer.1} parent=11 // pred_fallthru
          _
        // Predicated region
        $region37: #{decoder_layer.1} parent=11 // pred_check
          %p423 = pneg %p284
        $region38: #{decoder_layer.1} parent=11 // pred_check_branch
          %425 = sbr.rel (%p423) target = $region40
        $region39: #{decoder_layer.1} parent=11 // pred_region
          _
        $region40: #{decoder_layer.1} parent=11 // pred_fallthru
          _
      $region12: #{decoder_layer.1} parent=5 // pred_fallthru
        _
      %p426 = scmp.lt.s32.totalorder %s33, 2
      // Predicated region
      $region41: #{decoder_layer.1} parent=5 // pred_check
        %p427 = pneg %p426
      $region42: #{decoder_layer.1} parent=5 // pred_check_branch
        %429 = sbr.rel (%p427) target = $region44
      $region43: #{decoder_layer.1} parent=5 // pred_region
        // Predicated region
        $region45: #{decoder_layer.1} parent=43 // pred_check
          %p430 = pneg %p53
        $region46: #{decoder_layer.1} parent=43 // pred_check_branch
          %432 = sbr.rel (%p430) target = $region48
        $region47: #{decoder_layer.1} parent=43 // pred_region
          %s433 = sand.u32 %s43, 1
          %s434 = scalar_lea.sflag [#allocation3], %s433
          %s435 = sand.u32 %s43, 1
          %s436 = smul.addr %s435, 8
          %s437 = scalar_lea.vmem [#allocation2], %s436
          %s439 = ssub.s32 128, 128
          %440 = vsyncadd %s434, %s439
          %s441 = smul.addr %s33, 128
          %s442 = scalar_lea.hbm %s0, %s441
          %s444 = sshll.u32 %s437, 4
          %s445 = int_to_ptr.vmem [resolvable:$true] %s444
          %447 = dma.hbm_to_vmem [thread:$0]  %s442, 128, %s445, %s434
        $region48: #{decoder_layer.1} parent=43 // pred_fallthru
          _
        // Predicated region
        $region49: #{decoder_layer.1} parent=43 // pred_check
          %p448 = pneg %p79
        $region50: #{decoder_layer.1} parent=43 // pred_check_branch
          %450 = sbr.rel (%p448) target = $region52
        $region51: #{decoder_layer.1} parent=43 // pred_region
          %s451 = sand.u32 %s33, 1
          %s452 = scalar_lea.sflag [#allocation6], %s451
          %s453 = sand.u32 %s69, 1
          %s454 = smul.addr %s453, 8
          %s455 = scalar_lea.vmem [#allocation5], %s454
          %s457 = ssub.s32 128, 128
          %458 = vsyncadd %s452, %s457
          %s459 = smul.addr %s33, 128
          %s460 = scalar_lea.hbm %s1, %s459
          %s462 = sshll.u32 %s455, 4
          %s463 = int_to_ptr.vmem [resolvable:$true] %s462
          %465 = dma.hbm_to_vmem [thread:$0]  %s460, 128, %s463, %s452
        $region52: #{decoder_layer.1} parent=43 // pred_fallthru
          _
        // Predicated region
        $region53: #{decoder_layer.1} parent=43 // pred_check
          %p466 = pneg %p105
        $region54: #{decoder_layer.1} parent=43 // pred_check_branch
          %468 = sbr.rel (%p466) target = $region56
        $region55: #{decoder_layer.1} parent=43 // pred_region
          %p469 = scmp.lt.s32.totalorder %s33, 1
          %s470 = scalar_select %p469, %s33, 1
          %s471 = smul.addr %s470, 8
          %s472 = scalar_lea.vmem %s2, %s471
        $region56: #{decoder_layer.1} parent=43 // pred_fallthru
          _
        // Predicated region
        $region57: #{decoder_layer.1} parent=43 // pred_check
          %p473 = pneg %p131
        $region58: #{decoder_layer.1} parent=43 // pred_check_branch
          %475 = sbr.rel (%p473) target = $region60
        $region59: #{decoder_layer.1} parent=43 // pred_region
          %p476 = scmp.lt.s32.totalorder %s33, 1
          %s477 = scalar_select %p476, %s33, 1
          %s478 = smul.addr %s477, 8
          %s479 = scalar_lea.vmem %s3, %s478
        $region60: #{decoder_layer.1} parent=43 // pred_fallthru
          _
      $region44: #{decoder_layer.1} parent=5 // pred_fallthru
        _
      %p480 = scmp.le.s32.totalorder 1, %s33
      %p481 = scmp.lt.s32.totalorder %s33, 3
      %p482 = pnand %p480, %p481
      %p483 = pneg %p482
      // Predicated region
      $region61: #{decoder_layer.1} parent=5 // pred_check
        _
      $region62: #{decoder_layer.1} parent=5 // pred_check_branch
        %485 = sbr.rel (%p482) target = $region64
      $region63: #{decoder_layer.1} parent=5 // pred_region
        %s486 = ssub.s32 %s33, 1
        %s487 = sand.u32 %s46, 1
        %s488 = scalar_lea.sflag [#allocation3], %s487
        %s489 = sand.u32 %s46, 1
        %s490 = smul.addr %s489, 8
        %s491 = scalar_lea.vmem [#allocation2], %s490
        // Predicated region
        $region65: #{decoder_layer.1} parent=63 // pred_check
          %p492 = pneg %p59
        $region66: #{decoder_layer.1} parent=63 // pred_check_branch
          %494 = sbr.rel (%p492) target = $region68
        $region67: #{decoder_layer.1} parent=63 // pred_region
          %495 = dma.done %s488, 128
        $region68: #{decoder_layer.1} parent=63 // pred_fallthru
          _
        %s496 = sand.u32 %s38, 1
        %s497 = scalar_lea.sflag [#allocation6], %s496
        %s498 = sand.u32 %s72, 1
        %s499 = smul.addr %s498, 8
        %s500 = scalar_lea.vmem [#allocation5], %s499
        // Predicated region
        $region69: #{decoder_layer.1} parent=63 // pred_check
          %p501 = pneg %p85
        $region70: #{decoder_layer.1} parent=63 // pred_check_branch
          %503 = sbr.rel (%p501) target = $region72
        $region71: #{decoder_layer.1} parent=63 // pred_region
          %504 = dma.done %s497, 128
        $region72: #{decoder_layer.1} parent=63 // pred_fallthru
          _
        // Predicated region
        $region73: #{decoder_layer.1} parent=63 // pred_check
          %p505 = pneg %p158
        $region74: #{decoder_layer.1} parent=63 // pred_check_branch
          %507 = sbr.rel (%p505) target = $region76
        $region75: #{decoder_layer.1} parent=63 // pred_region
          %508 = dma.done [#allocation6], 512
        $region76: #{decoder_layer.1} parent=63 // pred_fallthru
          _
        // Predicated region
        $region77: #{decoder_layer.1} parent=63 // pred_check
          %p509 = pneg %p179
        $region78: #{decoder_layer.1} parent=63 // pred_check_branch
          %511 = sbr.rel (%p509) target = $region80
        $region79: #{decoder_layer.1} parent=63 // pred_region
          %512 = dma.done [#allocation9], 128
        $region80: #{decoder_layer.1} parent=63 // pred_fallthru
          _
        // Predicated region
        $region81: #{decoder_layer.1} parent=63 // pred_check
          %p513 = pneg %p242
        $region82: #{decoder_layer.1} parent=63 // pred_check_branch
          %515 = sbr.rel (%p513) target = $region84
        $region83: #{decoder_layer.1} parent=63 // pred_region
          %516 = dma.done [#allocation9], 512
        $region84: #{decoder_layer.1} parent=63 // pred_fallthru
          _
        %s517 = sand.u32 %s46, 1
        %s518 = scalar_lea.sflag [#allocation3], %s517
        %s519 = sand.u32 %s46, 1
        %s520 = smul.addr %s519, 8
        %s521 = scalar_lea.vmem [#allocation2], %s520
        %p522 = pneg %p59
        %p523 = pneg %p56
        %s524 = sand.u32 %s38, 1
        %s525 = scalar_lea.sflag [#allocation6], %s524
        %s526 = sand.u32 %s72, 1
        %s527 = smul.addr %s526, 8
        %s528 = scalar_lea.vmem [#allocation5], %s527
        %p529 = pneg %p85
        %p530 = pneg %p82
        %p531 = scmp.lt.s32.totalorder %s38, 1
        %s532 = scalar_select %p531, %s38, 1
        %s533 = smul.addr %s532, 8
        %s534 = scalar_lea.vmem %s2, %s533
        %p535 = pneg %p111
        %p536 = pneg %p108
        %p537 = scmp.lt.s32.totalorder %s38, 1
        %s538 = scalar_select %p537, %s38, 1
        %s539 = smul.addr %s538, 8
        %s540 = scalar_lea.vmem %s3, %s539
        %p541 = pneg %p137
        %p542 = pneg %p134
        %p543 = pneg %p158
        %p544 = pneg %p155
        %p545 = pneg %p179
        %p546 = pneg %p176
        %p547 = pneg %p200
        %p548 = pneg %p197
        %p549 = pneg %p221
        %p550 = pneg %p218
        %p551 = pneg %p242
        %p552 = pneg %p239
        %p553 = pneg %p263
        %p554 = pneg %p260
        %p555 = pneg %p284
        %p556 = pneg %p281
        %p557 = pneg %p310
        %p558 = pneg %p307
        %s559 = sand.u32 %s297, 1
        %s560 = scalar_lea.sflag [#allocation4], %s559
        %s561 = sand.u32 %s297, 1
        %s562 = smul.addr %s561, 8
        %s563 = scalar_lea.vmem [#allocation11], %s562
        %p564 = pneg %p336
        %p565 = pneg %p333
        %s566 = sand.u32 %s38, 1
        %s567 = scalar_lea.sflag [#allocation13], %s566
        %s568 = sand.u32 %s323, 1
        %s569 = smul.addr %s568, 32
        %s570 = scalar_lea.vmem [#allocation12], %s569
        %p571 = pneg %p362
        %p572 = pneg %p359
        %s573 = sand.u32 %s38, 1
        %s574 = scalar_lea.sflag [#allocation13], %s573
        %s575 = sand.u32 %s349, 1
        %s576 = smul.addr %s575, 32
        %s577 = scalar_lea.vmem [#allocation14], %s576
        %p578 = scmp.lt.s32.totalorder %s38, 1
        %s579 = scalar_select %p578, %s38, 1
        %s580 = smul.addr %s579, 8
        %s581 = scalar_lea.vmem %s2, %s580
        %p582 = scmp.lt.s32.totalorder %s38, 1
        %s583 = scalar_select %p582, %s38, 1
        %s584 = smul.addr %s583, 8
        %s585 = scalar_lea.vmem %s3, %s584
        %v586 = vld [vmem:[%s491] sm:$0xff]
        %v587 = vld [vmem:[%s500] sm:$0xff]
        %v588 = vld [vmem:[%s581] sm:$0xff]
        %v589 = vld [vmem:[#allocation7] sm:$0xff]
        %v590 = vld [vmem:[#allocation7 + $0x8] sm:$0xff]
        %v591 = vld [vmem:[#allocation7 + $0x10] sm:$0xff]
        %v592 = vld [vmem:[#allocation7 + $0x18] sm:$0xff]
        %v593 = vld [vmem:[#allocation8] sm:$0x3f]
        %v594 = vlaneseq
        %v595 = vshrl.u32 %v594, 7
        %v596 = vsub.s32 0, %v595
        %v597 = vrot.slane %v593, %v596
        %vm598 = vcmask 261120
        %v600 = vsel %vm598, %v586, 0
        %602 = vmatprep.subr.mxu0 0.0
        %603 = vmatpush1.msra.mxu0 %v589
        %604 = vmatprep.subr.mxu0 0.0
        %605 = vmatpush1.msra.mxu0 %v590
        %606 = vmatprep.subr.mxu0 0.0
        %607 = vmatpush1.msra.mxu0 %v591
        %608 = vmatprep.subr.mxu0 0.0
        %609 = vmatpush1.msra.mxu0 %v592
        %610 = vmatprep.subr.mxu0 0.0
        %611 = vmatpush1.msra.mxu0 0.0
        %612 = vmatprep.subr.mxu0 0.0
        %613 = vmatpush1.msra.mxu0 0.0
        %614 = vmatprep.subr.mxu0 0.0
        %615 = vmatpush1.msra.mxu0 0.0
        %616 = vmatprep.subr.mxu0 0.0
        %617 = vmatpush1.msra.mxu0 0.0
        %618 = vmatprep.subr.mxu0 0.0
        %619 = vmatpush1.msra.mxu0 0.0
        %620 = vmatprep.subr.mxu0 0.0
        %621 = vmatpush1.msra.mxu0 0.0
        %622 = vmatprep.subr.mxu0 0.0
        %623 = vmatpush1.msra.mxu0 0.0
        %624 = vmatprep.subr.mxu0 0.0
        %625 = vmatpush1.msra.mxu0 0.0
        %626 = vmatprep.subr.mxu0 0.0
        %627 = vmatpush1.msra.mxu0 0.0
        %628 = vmatprep.subr.mxu0 0.0
        %629 = vmatpush1.msra.mxu0 0.0
        %630 = vmatprep.subr.mxu0 0.0
        %631 = vmatpush1.msra.mxu0 0.0
        %632 = vmatprep.subr.mxu0 0.0
        %633 = vmatpush1.msra.mxu0 0.0
        %634 = vmatprep.subr.mxu0 0.0
        %635 = vmatpush1.msra.mxu0 0.0
        %636 = vmatprep.subr.mxu0 0.0
        %637 = vmatpush1.msra.mxu0 0.0
        %638 = vmatprep.subr.mxu0 0.0
        %639 = vmatpush1.msra.mxu0 0.0
        %640 = vmatprep.subr.mxu0 0.0
        %641 = vmatpush1.msra.mxu0 0.0
        %642 = vmatprep.subr.mxu0 0.0
        %643 = vmatpush1.msra.mxu0 0.0
        %644 = vmatprep.subr.mxu0 0.0
        %645 = vmatpush1.msra.mxu0 0.0
        %646 = vmatprep.subr.mxu0 0.0
        %647 = vmatpush1.msra.mxu0 0.0
        %648 = vmatprep.subr.mxu0 0.0
        %649 = vmatpush1.msra.mxu0 0.0
        %650 = vmatprep.subr.mxu0 0.0
        %651 = vmatpush1.msra.mxu0 0.0
        %652 = vmatprep.subr.mxu0 0.0
        %653 = vmatpush1.msra.mxu0 0.0
        %654 = vmatprep.subr.mxu0 0.0
        %655 = vmatpush1.msra.mxu0 0.0
        %656 = vmatprep.subr.mxu0 0.0
        %657 = vmatpush1.msra.mxu0 0.0
        %658 = vmatprep.subr.mxu0 0.0
        %659 = vmatpush1.msra.mxu0 0.0
        %660 = vmatprep.subr.mxu0 0.0
        %661 = vmatpush1.msra.mxu0 0.0
        %662 = vmatprep.subr.mxu0 0.0
        %663 = vmatpush1.msra.mxu0 0.0
        %664 = vmatprep.subr.mxu0 0.0
        %665 = vmatpush1.msra.mxu0 0.0
        %666 = vmatprep.mubr.f32.mxu0 0.0
        %667 = vmatmul.mubr.f32.gmra.mrb[0].mxu0 %v600
        %v668 = vpop.f32.mrb[0].mxu0
        %v669 = vadd.f32 %v597, %v668
        %v670 = vpop.f32.mrb[0].mxu0
        %671 = vdwg.mxu0
        %676 = vrot.lane.b32.xlu0 %v589, 96
        %v677 = vpop.permute.xlu0 %676
        %678 = vrot.lane.b32.xlu0 %v590, 96
        %v679 = vpop.permute.xlu0 %678
        %680 = vrot.lane.b32.xlu0 %v591, 96
        %v681 = vpop.permute.xlu0 %680
        %682 = vrot.lane.b32.xlu0 %v592, 96
        %v683 = vpop.permute.xlu0 %682
        %688 = vmatprep.subr.mxu0 0.0
        %689 = vmatpush1.msra.mxu0 %v677
        %690 = vmatprep.subr.mxu0 0.0
        %691 = vmatpush1.msra.mxu0 %v679
        %692 = vmatprep.subr.mxu0 0.0
        %693 = vmatpush1.msra.mxu0 %v681
        %694 = vmatprep.subr.mxu0 0.0
        %695 = vmatpush1.msra.mxu0 %v683
        %696 = vmatprep.subr.mxu0 0.0
        %697 = vmatpush1.msra.mxu0 0.0
        %698 = vmatprep.subr.mxu0 0.0
        %699 = vmatpush1.msra.mxu0 0.0
        %700 = vmatprep.subr.mxu0 0.0
        %701 = vmatpush1.msra.mxu0 0.0
        %702 = vmatprep.subr.mxu0 0.0
        %703 = vmatpush1.msra.mxu0 0.0
        %704 = vmatprep.subr.mxu0 0.0
        %705 = vmatpush1.msra.mxu0 0.0
        %706 = vmatprep.subr.mxu0 0.0
        %707 = vmatpush1.msra.mxu0 0.0
        %708 = vmatprep.subr.mxu0 0.0
        %709 = vmatpush1.msra.mxu0 0.0
        %710 = vmatprep.subr.mxu0 0.0
        %711 = vmatpush1.msra.mxu0 0.0
        %712 = vmatprep.subr.mxu0 0.0
        %713 = vmatpush1.msra.mxu0 0.0
        %714 = vmatprep.subr.mxu0 0.0
        %715 = vmatpush1.msra.mxu0 0.0
        %716 = vmatprep.subr.mxu0 0.0
        %717 = vmatpush1.msra.mxu0 0.0
        %718 = vmatprep.subr.mxu0 0.0
        %719 = vmatpush1.msra.mxu0 0.0
        %720 = vmatprep.subr.mxu0 0.0
        %721 = vmatpush1.msra.mxu0 0.0
        %722 = vmatprep.subr.mxu0 0.0
        %723 = vmatpush1.msra.mxu0 0.0
        %724 = vmatprep.subr.mxu0 0.0
        %725 = vmatpush1.msra.mxu0 0.0
        %726 = vmatprep.subr.mxu0 0.0
        %727 = vmatpush1.msra.mxu0 0.0
        %728 = vmatprep.subr.mxu0 0.0
        %729 = vmatpush1.msra.mxu0 0.0
        %730 = vmatprep.subr.mxu0 0.0
        %731 = vmatpush1.msra.mxu0 0.0
        %732 = vmatprep.subr.mxu0 0.0
        %733 = vmatpush1.msra.mxu0 0.0
        %734 = vmatprep.subr.mxu0 0.0
        %735 = vmatpush1.msra.mxu0 0.0
        %736 = vmatprep.subr.mxu0 0.0
        %737 = vmatpush1.msra.mxu0 0.0
        %738 = vmatprep.subr.mxu0 0.0
        %739 = vmatpush1.msra.mxu0 0.0
        %740 = vmatprep.subr.mxu0 0.0
        %741 = vmatpush1.msra.mxu0 0.0
        %742 = vmatprep.subr.mxu0 0.0
        %743 = vmatpush1.msra.mxu0 0.0
        %744 = vmatprep.subr.mxu0 0.0
        %745 = vmatpush1.msra.mxu0 0.0
        %746 = vmatprep.subr.mxu0 0.0
        %747 = vmatpush1.msra.mxu0 0.0
        %748 = vmatprep.subr.mxu0 0.0
        %749 = vmatpush1.msra.mxu0 0.0
        %750 = vmatprep.subr.mxu0 0.0
        %751 = vmatpush1.msra.mxu0 0.0
        %752 = vmatprep.mubr.f32.mxu0 0.0
        %753 = vmatmul.mubr.f32.gmra.mrb[0].mxu0 %v600
        %v754 = vpop.f32.mrb[0].mxu0
        %v755 = vadd.f32 0.0, %v754
        %v756 = vpop.f32.mrb[0].mxu0
        %757 = vdwg.mxu0
        %v758 = vlaneseq
        %v759 = vshrl.u32 %v758, 7
        %v760 = vsub.s32 1, %v759
        %v761 = vrot.slane %v593, %v760
        %v762 = vadd.f32 %v755, %v761
        %v763 = vlaneseq
        %v764 = vshrl.u32 %v763, 7
        %v765 = vsub.s32 2, %v764
        %v766 = vrot.slane %v593, %v765
        %768 = vrot.lane.b32.xlu0 %v766, 32
        %v769 = vpop.permute.xlu0 %768
        %v771 = vadd.f32 %v755, %v769
        %vm772 = vcmask 64512
        %v774 = vsel %vm772, %v669, 0
        %v777 = vsel %vm772, %v762, 0
        %779 = vmatprep.subr.mxu0 0.0
        %780 = vmatpush1.xpose.msra.mxu0 %v777
        %781 = vmatprep.subr.mxu0 0.0
        %782 = vmatpush1.xpose.msra.mxu0 0.0
        %783 = vmatprep.subr.mxu0 0.0
        %784 = vmatpush1.xpose.msra.mxu0 0.0
        %785 = vmatprep.subr.mxu0 0.0
        %786 = vmatpush1.xpose.msra.mxu0 0.0
        %787 = vmatprep.subr.mxu0 0.0
        %788 = vmatpush1.xpose.msra.mxu0 0.0
        %789 = vmatprep.subr.mxu0 0.0
        %790 = vmatpush1.xpose.msra.mxu0 0.0
        %791 = vmatprep.subr.mxu0 0.0
        %792 = vmatpush1.xpose.msra.mxu0 0.0
        %793 = vmatprep.subr.mxu0 0.0
        %794 = vmatpush1.xpose.msra.mxu0 0.0
        %795 = vmatprep.subr.mxu0 0.0
        %796 = vmatpush1.xpose.msra.mxu0 0.0
        %797 = vmatprep.subr.mxu0 0.0
        %798 = vmatpush1.xpose.msra.mxu0 0.0
        %799 = vmatprep.subr.mxu0 0.0
        %800 = vmatpush1.xpose.msra.mxu0 0.0
        %801 = vmatprep.subr.mxu0 0.0
        %802 = vmatpush1.xpose.msra.mxu0 0.0
        %803 = vmatprep.subr.mxu0 0.0
        %804 = vmatpush1.xpose.msra.mxu0 0.0
        %805 = vmatprep.subr.mxu0 0.0
        %806 = vmatpush1.xpose.msra.mxu0 0.0
        %807 = vmatprep.subr.mxu0 0.0
        %808 = vmatpush1.xpose.msra.mxu0 0.0
        %809 = vmatprep.subr.mxu0 0.0
        %810 = vmatpush1.xpose.msra.mxu0 0.0
        %811 = vmatprep.subr.mxu0 0.0
        %812 = vmatpush1.xpose.msra.mxu0 0.0
        %813 = vmatprep.subr.mxu0 0.0
        %814 = vmatpush1.xpose.msra.mxu0 0.0
        %815 = vmatprep.subr.mxu0 0.0
        %816 = vmatpush1.xpose.msra.mxu0 0.0
        %817 = vmatprep.subr.mxu0 0.0
        %818 = vmatpush1.xpose.msra.mxu0 0.0
        %819 = vmatprep.subr.mxu0 0.0
        %820 = vmatpush1.xpose.msra.mxu0 0.0
        %821 = vmatprep.subr.mxu0 0.0
        %822 = vmatpush1.xpose.msra.mxu0 0.0
        %823 = vmatprep.subr.mxu0 0.0
        %824 = vmatpush1.xpose.msra.mxu0 0.0
        %825 = vmatprep.subr.mxu0 0.0
        %826 = vmatpush1.xpose.msra.mxu0 0.0
        %827 = vmatprep.subr.mxu0 0.0
        %828 = vmatpush1.xpose.msra.mxu0 0.0
        %829 = vmatprep.subr.mxu0 0.0
        %830 = vmatpush1.xpose.msra.mxu0 0.0
        %831 = vmatprep.subr.mxu0 0.0
        %832 = vmatpush1.xpose.msra.mxu0 0.0
        %833 = vmatprep.subr.mxu0 0.0
        %834 = vmatpush1.xpose.msra.mxu0 0.0
        %835 = vmatprep.subr.mxu0 0.0
        %836 = vmatpush1.xpose.msra.mxu0 0.0
        %837 = vmatprep.subr.mxu0 0.0
        %838 = vmatpush1.xpose.msra.mxu0 0.0
        %839 = vmatprep.subr.mxu0 0.0
        %840 = vmatpush1.xpose.msra.mxu0 0.0
        %841 = vmatprep.subr.mxu0 0.0
        %842 = vmatpush1.xpose.msra.mxu0 0.0
        %843 = vmatprep.mubr.f32.mxu0 0.0
        %844 = vmatmul.mubr.f32.gmra.mrb[0].mxu0 %v774
        %v845 = vpop.f32.mrb[0].mxu0
        %v846 = vadd.f32 0.0, %v845
        %v847 = vpop.f32.mrb[0].mxu0
        %848 = vdwg.mxu0
        %v849 = vmul.f32 %v846, 0.35355338
        %v850 = vadd.f32 %v849, %v588
        %v851 = vsel %vm772, %v850, -inf
        %852 = vmax.xlane.f32.xlu0 %v851
        %v853 = vpop.xlane.xlu0 %852
        %v854 = vsub.f32 %v850, %v853
        %v855 = vmul.f32 %v854, 1.442695
        %v856 = vpow.pop %v855
        %v857 = vsel %vm772, %v856, 0.0
        %858 = vadd.xlane.f32.xlu0 %v857
        %v859 = vpop.xlane.xlu0 %858
        %v860 = vrcp.pop %v859
        %v861 = vmul.f32 %v856, %v860
        %863 = vrot.lane.b32.xlu0 %v771, 96
        %v864 = vpop.permute.xlu0 %863
        %v867 = vsel %vm772, %v861, 0
        %869 = vmatprep.subr.mxu0 0.0
        %870 = vmatpush1.msra.mxu0 %v864
        %871 = vmatprep.subr.mxu0 0.0
        %872 = vmatpush1.msra.mxu0 0.0
        %873 = vmatprep.subr.mxu0 0.0
        %874 = vmatpush1.msra.mxu0 0.0
        %875 = vmatprep.subr.mxu0 0.0
        %876 = vmatpush1.msra.mxu0 0.0
        %877 = vmatprep.subr.mxu0 0.0
        %878 = vmatpush1.msra.mxu0 0.0
        %879 = vmatprep.subr.mxu0 0.0
        %880 = vmatpush1.msra.mxu0 0.0
        %881 = vmatprep.subr.mxu0 0.0
        %882 = vmatpush1.msra.mxu0 0.0
        %883 = vmatprep.subr.mxu0 0.0
        %884 = vmatpush1.msra.mxu0 0.0
        %885 = vmatprep.subr.mxu0 0.0
        %886 = vmatpush1.msra.mxu0 0.0
        %887 = vmatprep.subr.mxu0 0.0
        %888 = vmatpush1.msra.mxu0 0.0
        %889 = vmatprep.subr.mxu0 0.0
        %890 = vmatpush1.msra.mxu0 0.0
        %891 = vmatprep.subr.mxu0 0.0
        %892 = vmatpush1.msra.mxu0 0.0
        %893 = vmatprep.subr.mxu0 0.0
        %894 = vmatpush1.msra.mxu0 0.0
        %895 = vmatprep.subr.mxu0 0.0
        %896 = vmatpush1.msra.mxu0 0.0
        %897 = vmatprep.subr.mxu0 0.0
        %898 = vmatpush1.msra.mxu0 0.0
        %899 = vmatprep.subr.mxu0 0.0
        %900 = vmatpush1.msra.mxu0 0.0
        %901 = vmatprep.subr.mxu0 0.0
        %902 = vmatpush1.msra.mxu0 0.0
        %903 = vmatprep.subr.mxu0 0.0
        %904 = vmatpush1.msra.mxu0 0.0
        %905 = vmatprep.subr.mxu0 0.0
        %906 = vmatpush1.msra.mxu0 0.0
        %907 = vmatprep.subr.mxu0 0.0
        %908 = vmatpush1.msra.mxu0 0.0
        %909 = vmatprep.subr.mxu0 0.0
        %910 = vmatpush1.msra.mxu0 0.0
        %911 = vmatprep.subr.mxu0 0.0
        %912 = vmatpush1.msra.mxu0 0.0
        %913 = vmatprep.subr.mxu0 0.0
        %914 = vmatpush1.msra.mxu0 0.0
        %915 = vmatprep.subr.mxu0 0.0
        %916 = vmatpush1.msra.mxu0 0.0
        %917 = vmatprep.subr.mxu0 0.0
        %918 = vmatpush1.msra.mxu0 0.0
        %919 = vmatprep.subr.mxu0 0.0
        %920 = vmatpush1.msra.mxu0 0.0
        %921 = vmatprep.subr.mxu0 0.0
        %922 = vmatpush1.msra.mxu0 0.0
        %923 = vmatprep.subr.mxu0 0.0
        %924 = vmatpush1.msra.mxu0 0.0
        %925 = vmatprep.subr.mxu0 0.0
        %926 = vmatpush1.msra.mxu0 0.0
        %927 = vmatprep.subr.mxu0 0.0
        %928 = vmatpush1.msra.mxu0 0.0
        %929 = vmatprep.subr.mxu0 0.0
        %930 = vmatpush1.msra.mxu0 0.0
        %931 = vmatprep.subr.mxu0 0.0
        %932 = vmatpush1.msra.mxu0 0.0
        %933 = vmatprep.mubr.f32.mxu0 0.0
        %934 = vmatmul.mubr.f32.gmra.mrb[0].mxu0 %v867
        %v935 = vpop.f32.mrb[0].mxu0
        %v936 = vadd.f32 0.0, %v935
        %v937 = vpop.f32.mrb[0].mxu0
        %938 = vdwg.mxu0
        %939 = vrot.lane.b32.xlu0 %v669, 120
        %v940 = vpop.permute.xlu0 %939
        %941 = vrot.lane.b32.xlu0 %v762, 120
        %v942 = vpop.permute.xlu0 %941
        %v943 = vsel %vm772, %v940, 0
        %v945 = vsel %vm772, %v942, 0
        %947 = vmatprep.subr.mxu0 0.0
        %948 = vmatpush1.xpose.msra.mxu0 %v945
        %949 = vmatprep.subr.mxu0 0.0
        %950 = vmatpush1.xpose.msra.mxu0 0.0
        %951 = vmatprep.subr.mxu0 0.0
        %952 = vmatpush1.xpose.msra.mxu0 0.0
        %953 = vmatprep.subr.mxu0 0.0
        %954 = vmatpush1.xpose.msra.mxu0 0.0
        %955 = vmatprep.subr.mxu0 0.0
        %956 = vmatpush1.xpose.msra.mxu0 0.0
        %957 = vmatprep.subr.mxu0 0.0
        %958 = vmatpush1.xpose.msra.mxu0 0.0
        %959 = vmatprep.subr.mxu0 0.0
        %960 = vmatpush1.xpose.msra.mxu0 0.0
        %961 = vmatprep.subr.mxu0 0.0
        %962 = vmatpush1.xpose.msra.mxu0 0.0
        %963 = vmatprep.subr.mxu0 0.0
        %964 = vmatpush1.xpose.msra.mxu0 0.0
        %965 = vmatprep.subr.mxu0 0.0
        %966 = vmatpush1.xpose.msra.mxu0 0.0
        %967 = vmatprep.subr.mxu0 0.0
        %968 = vmatpush1.xpose.msra.mxu0 0.0
        %969 = vmatprep.subr.mxu0 0.0
        %970 = vmatpush1.xpose.msra.mxu0 0.0
        %971 = vmatprep.subr.mxu0 0.0
        %972 = vmatpush1.xpose.msra.mxu0 0.0
        %973 = vmatprep.subr.mxu0 0.0
        %974 = vmatpush1.xpose.msra.mxu0 0.0
        %975 = vmatprep.subr.mxu0 0.0
        %976 = vmatpush1.xpose.msra.mxu0 0.0
        %977 = vmatprep.subr.mxu0 0.0
        %978 = vmatpush1.xpose.msra.mxu0 0.0
        %979 = vmatprep.subr.mxu0 0.0
        %980 = vmatpush1.xpose.msra.mxu0 0.0
        %981 = vmatprep.subr.mxu0 0.0
        %982 = vmatpush1.xpose.msra.mxu0 0.0
        %983 = vmatprep.subr.mxu0 0.0
        %984 = vmatpush1.xpose.msra.mxu0 0.0
        %985 = vmatprep.subr.mxu0 0.0
        %986 = vmatpush1.xpose.msra.mxu0 0.0
        %987 = vmatprep.subr.mxu0 0.0
        %988 = vmatpush1.xpose.msra.mxu0 0.0
        %989 = vmatprep.subr.mxu0 0.0
        %990 = vmatpush1.xpose.msra.mxu0 0.0
        %991 = vmatprep.subr.mxu0 0.0
        %992 = vmatpush1.xpose.msra.mxu0 0.0
        %993 = vmatprep.subr.mxu0 0.0
        %994 = vmatpush1.xpose.msra.mxu0 0.0
        %995 = vmatprep.subr.mxu0 0.0
        %996 = vmatpush1.xpose.msra.mxu0 0.0
        %997 = vmatprep.subr.mxu0 0.0
        %998 = vmatpush1.xpose.msra.mxu0 0.0
        %999 = vmatprep.subr.mxu0 0.0
        %1000 = vmatpush1.xpose.msra.mxu0 0.0
        %1001 = vmatprep.subr.mxu0 0.0
        %1002 = vmatpush1.xpose.msra.mxu0 0.0
        %1003 = vmatprep.subr.mxu0 0.0
        %1004 = vmatpush1.xpose.msra.mxu0 0.0
        %1005 = vmatprep.subr.mxu0 0.0
        %1006 = vmatpush1.xpose.msra.mxu0 0.0
        %1007 = vmatprep.subr.mxu0 0.0
        %1008 = vmatpush1.xpose.msra.mxu0 0.0
        %1009 = vmatprep.subr.mxu0 0.0
        %1010 = vmatpush1.xpose.msra.mxu0 0.0
        %1011 = vmatprep.mubr.f32.mxu0 0.0
        %1012 = vmatmul.mubr.f32.gmra.mrb[0].mxu0 %v943
        %v1013 = vpop.f32.mrb[0].mxu0
        %v1014 = vadd.f32 0.0, %v1013
        %v1015 = vpop.f32.mrb[0].mxu0
        %1016 = vdwg.mxu0
        %v1017 = vmul.f32 %v1014, 0.35355338
        %v1018 = vadd.f32 %v1017, %v588
        %v1019 = vsel %vm772, %v1018, -inf
        %1020 = vmax.xlane.f32.xlu0 %v1019
        %v1021 = vpop.xlane.xlu0 %1020
        %v1022 = vsub.f32 %v1018, %v1021
        %v1023 = vmul.f32 %v1022, 1.442695
        %v1024 = vpow.pop %v1023
        %v1025 = vsel %vm772, %v1024, 0.0
        %1026 = vadd.xlane.f32.xlu0 %v1025
        %v1027 = vpop.xlane.xlu0 %1026
        %v1028 = vrcp.pop %v1027
        %v1029 = vmul.f32 %v1024, %v1028
        %1030 = vrot.lane.b32.xlu0 %v771, 88
        %v1031 = vpop.permute.xlu0 %1030
        %v1034 = vsel %vm772, %v1029, 0
        %1036 = vmatprep.subr.mxu0 0.0
        %1037 = vmatpush1.msra.mxu0 %v1031
        %1038 = vmatprep.subr.mxu0 0.0
        %1039 = vmatpush1.msra.mxu0 0.0
        %1040 = vmatprep.subr.mxu0 0.0
        %1041 = vmatpush1.msra.mxu0 0.0
        %1042 = vmatprep.subr.mxu0 0.0
        %1043 = vmatpush1.msra.mxu0 0.0
        %1044 = vmatprep.subr.mxu0 0.0
        %1045 = vmatpush1.msra.mxu0 0.0
        %1046 = vmatprep.subr.mxu0 0.0
        %1047 = vmatpush1.msra.mxu0 0.0
        %1048 = vmatprep.subr.mxu0 0.0
        %1049 = vmatpush1.msra.mxu0 0.0
        %1050 = vmatprep.subr.mxu0 0.0
        %1051 = vmatpush1.msra.mxu0 0.0
        %1052 = vmatprep.subr.mxu0 0.0
        %1053 = vmatpush1.msra.mxu0 0.0
        %1054 = vmatprep.subr.mxu0 0.0
        %1055 = vmatpush1.msra.mxu0 0.0
        %1056 = vmatprep.subr.mxu0 0.0
        %1057 = vmatpush1.msra.mxu0 0.0
        %1058 = vmatprep.subr.mxu0 0.0
        %1059 = vmatpush1.msra.mxu0 0.0
        %1060 = vmatprep.subr.mxu0 0.0
        %1061 = vmatpush1.msra.mxu0 0.0
        %1062 = vmatprep.subr.mxu0 0.0
        %1063 = vmatpush1.msra.mxu0 0.0
        %1064 = vmatprep.subr.mxu0 0.0
        %1065 = vmatpush1.msra.mxu0 0.0
        %1066 = vmatprep.subr.mxu0 0.0
        %1067 = vmatpush1.msra.mxu0 0.0
        %1068 = vmatprep.subr.mxu0 0.0
        %1069 = vmatpush1.msra.mxu0 0.0
        %1070 = vmatprep.subr.mxu0 0.0
        %1071 = vmatpush1.msra.mxu0 0.0
        %1072 = vmatprep.subr.mxu0 0.0
        %1073 = vmatpush1.msra.mxu0 0.0
        %1074 = vmatprep.subr.mxu0 0.0
        %1075 = vmatpush1.msra.mxu0 0.0
        %1076 = vmatprep.subr.mxu0 0.0
        %1077 = vmatpush1.msra.mxu0 0.0
        %1078 = vmatprep.subr.mxu0 0.0
        %1079 = vmatpush1.msra.mxu0 0.0
        %1080 = vmatprep.subr.mxu0 0.0
        %1081 = vmatpush1.msra.mxu0 0.0
        %1082 = vmatprep.subr.mxu0 0.0
        %1083 = vmatpush1.msra.mxu0 0.0
        %1084 = vmatprep.subr.mxu0 0.0
        %1085 = vmatpush1.msra.mxu0 0.0
        %1086 = vmatprep.subr.mxu0 0.0
        %1087 = vmatpush1.msra.mxu0 0.0
        %1088 = vmatprep.subr.mxu0 0.0
        %1089 = vmatpush1.msra.mxu0 0.0
        %1090 = vmatprep.subr.mxu0 0.0
        %1091 = vmatpush1.msra.mxu0 0.0
        %1092 = vmatprep.subr.mxu0 0.0
        %1093 = vmatpush1.msra.mxu0 0.0
        %1094 = vmatprep.subr.mxu0 0.0
        %1095 = vmatpush1.msra.mxu0 0.0
        %1096 = vmatprep.subr.mxu0 0.0
        %1097 = vmatpush1.msra.mxu0 0.0
        %1098 = vmatprep.subr.mxu0 0.0
        %1099 = vmatpush1.msra.mxu0 0.0
        %1100 = vmatprep.mubr.f32.mxu0 0.0
        %1101 = vmatmul.mubr.f32.gmra.mrb[0].mxu0 %v1034
        %v1102 = vpop.f32.mrb[0].mxu0
        %v1103 = vadd.f32 0.0, %v1102
        %v1104 = vpop.f32.mrb[0].mxu0
        %1105 = vdwg.mxu0
        %1106 = vrot.lane.b32.xlu0 %v669, 112
        %v1107 = vpop.permute.xlu0 %1106
        %1108 = vrot.lane.b32.xlu0 %v762, 112
        %v1109 = vpop.permute.xlu0 %1108
        %v1110 = vsel %vm772, %v1107, 0
        %v1112 = vsel %vm772, %v1109, 0
        %1114 = vmatprep.subr.mxu0 0.0
        %1115 = vmatpush1.xpose.msra.mxu0 %v1112
        %1116 = vmatprep.subr.mxu0 0.0
        %1117 = vmatpush1.xpose.msra.mxu0 0.0
        %1118 = vmatprep.subr.mxu0 0.0
        %1119 = vmatpush1.xpose.msra.mxu0 0.0
        %1120 = vmatprep.subr.mxu0 0.0
        %1121 = vmatpush1.xpose.msra.mxu0 0.0
        %1122 = vmatprep.subr.mxu0 0.0
        %1123 = vmatpush1.xpose.msra.mxu0 0.0
        %1124 = vmatprep.subr.mxu0 0.0
        %1125 = vmatpush1.xpose.msra.mxu0 0.0
        %1126 = vmatprep.subr.mxu0 0.0
        %1127 = vmatpush1.xpose.msra.mxu0 0.0
        %1128 = vmatprep.subr.mxu0 0.0
        %1129 = vmatpush1.xpose.msra.mxu0 0.0
        %1130 = vmatprep.subr.mxu0 0.0
        %1131 = vmatpush1.xpose.msra.mxu0 0.0
        %1132 = vmatprep.subr.mxu0 0.0
        %1133 = vmatpush1.xpose.msra.mxu0 0.0
        %1134 = vmatprep.subr.mxu0 0.0
        %1135 = vmatpush1.xpose.msra.mxu0 0.0
        %1136 = vmatprep.subr.mxu0 0.0
        %1137 = vmatpush1.xpose.msra.mxu0 0.0
        %1138 = vmatprep.subr.mxu0 0.0
        %1139 = vmatpush1.xpose.msra.mxu0 0.0
        %1140 = vmatprep.subr.mxu0 0.0
        %1141 = vmatpush1.xpose.msra.mxu0 0.0
        %1142 = vmatprep.subr.mxu0 0.0
        %1143 = vmatpush1.xpose.msra.mxu0 0.0
        %1144 = vmatprep.subr.mxu0 0.0
        %1145 = vmatpush1.xpose.msra.mxu0 0.0
        %1146 = vmatprep.subr.mxu0 0.0
        %1147 = vmatpush1.xpose.msra.mxu0 0.0
        %1148 = vmatprep.subr.mxu0 0.0
        %1149 = vmatpush1.xpose.msra.mxu0 0.0
        %1150 = vmatprep.subr.mxu0 0.0
        %1151 = vmatpush1.xpose.msra.mxu0 0.0
        %1152 = vmatprep.subr.mxu0 0.0
        %1153 = vmatpush1.xpose.msra.mxu0 0.0
        %1154 = vmatprep.subr.mxu0 0.0
        %1155 = vmatpush1.xpose.msra.mxu0 0.0
        %1156 = vmatprep.subr.mxu0 0.0
        %1157 = vmatpush1.xpose.msra.mxu0 0.0
        %1158 = vmatprep.subr.mxu0 0.0
        %1159 = vmatpush1.xpose.msra.mxu0 0.0
        %1160 = vmatprep.subr.mxu0 0.0
        %1161 = vmatpush1.xpose.msra.mxu0 0.0
        %1162 = vmatprep.subr.mxu0 0.0
        %1163 = vmatpush1.xpose.msra.mxu0 0.0
        %1164 = vmatprep.subr.mxu0 0.0
        %1165 = vmatpush1.xpose.msra.mxu0 0.0
        %1166 = vmatprep.subr.mxu0 0.0
        %1167 = vmatpush1.xpose.msra.mxu0 0.0
        %1168 = vmatprep.subr.mxu0 0.0
        %1169 = vmatpush1.xpose.msra.mxu0 0.0
        %1170 = vmatprep.subr.mxu0 0.0
        %1171 = vmatpush1.xpose.msra.mxu0 0.0
        %1172 = vmatprep.subr.mxu0 0.0
        %1173 = vmatpush1.xpose.msra.mxu0 0.0
        %1174 = vmatprep.subr.mxu0 0.0
        %1175 = vmatpush1.xpose.msra.mxu0 0.0
        %1176 = vmatprep.subr.mxu0 0.0
        %1177 = vmatpush1.xpose.msra.mxu0 0.0
        %1178 = vmatprep.mubr.f32.mxu0 0.0
        %1179 = vmatmul.mubr.f32.gmra.mrb[0].mxu0 %v1110
        %v1180 = vpop.f32.mrb[0].mxu0
        %v1181 = vadd.f32 0.0, %v1180
        %v1182 = vpop.f32.mrb[0].mxu0
        %1183 = vdwg.mxu0
        %v1184 = vmul.f32 %v1181, 0.35355338
        %v1185 = vadd.f32 %v1184, %v588
        %v1186 = vsel %vm772, %v1185, -inf
        %1187 = vmax.xlane.f32.xlu0 %v1186
        %v1188 = vpop.xlane.xlu0 %1187
        %v1189 = vsub.f32 %v1185, %v1188
        %v1190 = vmul.f32 %v1189, 1.442695
        %v1191 = vpow.pop %v1190
        %v1192 = vsel %vm772, %v1191, 0.0
        %1193 = vadd.xlane.f32.xlu0 %v1192
        %v1194 = vpop.xlane.xlu0 %1193
        %v1195 = vrcp.pop %v1194
        %v1196 = vmul.f32 %v1191, %v1195
        %1197 = vrot.lane.b32.xlu0 %v771, 80
        %v1198 = vpop.permute.xlu0 %1197
        %v1201 = vsel %vm772, %v1196, 0
        %1203 = vmatprep.subr.mxu0 0.0
        %1204 = vmatpush1.msra.mxu0 %v1198
        %1205 = vmatprep.subr.mxu0 0.0
        %1206 = vmatpush1.msra.mxu0 0.0
        %1207 = vmatprep.subr.mxu0 0.0
        %1208 = vmatpush1.msra.mxu0 0.0
        %1209 = vmatprep.subr.mxu0 0.0
        %1210 = vmatpush1.msra.mxu0 0.0
        %1211 = vmatprep.subr.mxu0 0.0
        %1212 = vmatpush1.msra.mxu0 0.0
        %1213 = vmatprep.subr.mxu0 0.0
        %1214 = vmatpush1.msra.mxu0 0.0
        %1215 = vmatprep.subr.mxu0 0.0
        %1216 = vmatpush1.msra.mxu0 0.0
        %1217 = vmatprep.subr.mxu0 0.0
        %1218 = vmatpush1.msra.mxu0 0.0
        %1219 = vmatprep.subr.mxu0 0.0
        %1220 = vmatpush1.msra.mxu0 0.0
        %1221 = vmatprep.subr.mxu0 0.0
        %1222 = vmatpush1.msra.mxu0 0.0
        %1223 = vmatprep.subr.mxu0 0.0
        %1224 = vmatpush1.msra.mxu0 0.0
        %1225 = vmatprep.subr.mxu0 0.0
        %1226 = vmatpush1.msra.mxu0 0.0
        %1227 = vmatprep.subr.mxu0 0.0
        %1228 = vmatpush1.msra.mxu0 0.0
        %1229 = vmatprep.subr.mxu0 0.0
        %1230 = vmatpush1.msra.mxu0 0.0
        %1231 = vmatprep.subr.mxu0 0.0
        %1232 = vmatpush1.msra.mxu0 0.0
        %1233 = vmatprep.subr.mxu0 0.0
        %1234 = vmatpush1.msra.mxu0 0.0
        %1235 = vmatprep.subr.mxu0 0.0
        %1236 = vmatpush1.msra.mxu0 0.0
        %1237 = vmatprep.subr.mxu0 0.0
        %1238 = vmatpush1.msra.mxu0 0.0
        %1239 = vmatprep.subr.mxu0 0.0
        %1240 = vmatpush1.msra.mxu0 0.0
        %1241 = vmatprep.subr.mxu0 0.0
        %1242 = vmatpush1.msra.mxu0 0.0
        %1243 = vmatprep.subr.mxu0 0.0
        %1244 = vmatpush1.msra.mxu0 0.0
        %1245 = vmatprep.subr.mxu0 0.0
        %1246 = vmatpush1.msra.mxu0 0.0
        %1247 = vmatprep.subr.mxu0 0.0
        %1248 = vmatpush1.msra.mxu0 0.0
        %1249 = vmatprep.subr.mxu0 0.0
        %1250 = vmatpush1.msra.mxu0 0.0
        %1251 = vmatprep.subr.mxu0 0.0
        %1252 = vmatpush1.msra.mxu0 0.0
        %1253 = vmatprep.subr.mxu0 0.0
        %1254 = vmatpush1.msra.mxu0 0.0
        %1255 = vmatprep.subr.mxu0 0.0
        %1256 = vmatpush1.msra.mxu0 0.0
        %1257 = vmatprep.subr.mxu0 0.0
        %1258 = vmatpush1.msra.mxu0 0.0
        %1259 = vmatprep.subr.mxu0 0.0
        %1260 = vmatpush1.msra.mxu0 0.0
        %1261 = vmatprep.subr.mxu0 0.0
        %1262 = vmatpush1.msra.mxu0 0.0
        %1263 = vmatprep.subr.mxu0 0.0
        %1264 = vmatpush1.msra.mxu0 0.0
        %1265 = vmatprep.subr.mxu0 0.0
        %1266 = vmatpush1.msra.mxu0 0.0
        %1267 = vmatprep.mubr.f32.mxu0 0.0
        %1268 = vmatmul.mubr.f32.gmra.mrb[0].mxu0 %v1201
        %v1269 = vpop.f32.mrb[0].mxu0
        %v1270 = vadd.f32 0.0, %v1269
        %v1271 = vpop.f32.mrb[0].mxu0
        %1272 = vdwg.mxu0
        %1273 = vrot.lane.b32.xlu0 %v669, 104
        %v1274 = vpop.permute.xlu0 %1273
        %1275 = vrot.lane.b32.xlu0 %v762, 104
        %v1276 = vpop.permute.xlu0 %1275
        %v1277 = vsel %vm772, %v1274, 0
        %v1279 = vsel %vm772, %v1276, 0
        %1281 = vmatprep.subr.mxu0 0.0
        %1282 = vmatpush1.xpose.msra.mxu0 %v1279
        %1283 = vmatprep.subr.mxu0 0.0
        %1284 = vmatpush1.xpose.msra.mxu0 0.0
        %1285 = vmatprep.subr.mxu0 0.0
        %1286 = vmatpush1.xpose.msra.mxu0 0.0
        %1287 = vmatprep.subr.mxu0 0.0
        %1288 = vmatpush1.xpose.msra.mxu0 0.0
        %1289 = vmatprep.subr.mxu0 0.0
        %1290 = vmatpush1.xpose.msra.mxu0 0.0
        %1291 = vmatprep.subr.mxu0 0.0
        %1292 = vmatpush1.xpose.msra.mxu0 0.0
        %1293 = vmatprep.subr.mxu0 0.0
        %1294 = vmatpush1.xpose.msra.mxu0 0.0
        %1295 = vmatprep.subr.mxu0 0.0
        %1296 = vmatpush1.xpose.msra.mxu0 0.0
        %1297 = vmatprep.subr.mxu0 0.0
        %1298 = vmatpush1.xpose.msra.mxu0 0.0
        %1299 = vmatprep.subr.mxu0 0.0
        %1300 = vmatpush1.xpose.msra.mxu0 0.0
        %1301 = vmatprep.subr.mxu0 0.0
        %1302 = vmatpush1.xpose.msra.mxu0 0.0
        %1303 = vmatprep.subr.mxu0 0.0
        %1304 = vmatpush1.xpose.msra.mxu0 0.0
        %1305 = vmatprep.subr.mxu0 0.0
        %1306 = vmatpush1.xpose.msra.mxu0 0.0
        %1307 = vmatprep.subr.mxu0 0.0
        %1308 = vmatpush1.xpose.msra.mxu0 0.0
        %1309 = vmatprep.subr.mxu0 0.0
        %1310 = vmatpush1.xpose.msra.mxu0 0.0
        %1311 = vmatprep.subr.mxu0 0.0
        %1312 = vmatpush1.xpose.msra.mxu0 0.0
        %1313 = vmatprep.subr.mxu0 0.0
        %1314 = vmatpush1.xpose.msra.mxu0 0.0
        %1315 = vmatprep.subr.mxu0 0.0
        %1316 = vmatpush1.xpose.msra.mxu0 0.0
        %1317 = vmatprep.subr.mxu0 0.0
        %1318 = vmatpush1.xpose.msra.mxu0 0.0
        %1319 = vmatprep.subr.mxu0 0.0
        %1320 = vmatpush1.xpose.msra.mxu0 0.0
        %1321 = vmatprep.subr.mxu0 0.0
        %1322 = vmatpush1.xpose.msra.mxu0 0.0
        %1323 = vmatprep.subr.mxu0 0.0
        %1324 = vmatpush1.xpose.msra.mxu0 0.0
        %1325 = vmatprep.subr.mxu0 0.0
        %1326 = vmatpush1.xpose.msra.mxu0 0.0
        %1327 = vmatprep.subr.mxu0 0.0
        %1328 = vmatpush1.xpose.msra.mxu0 0.0
        %1329 = vmatprep.subr.mxu0 0.0
        %1330 = vmatpush1.xpose.msra.mxu0 0.0
        %1331 = vmatprep.subr.mxu0 0.0
        %1332 = vmatpush1.xpose.msra.mxu0 0.0
        %1333 = vmatprep.subr.mxu0 0.0
        %1334 = vmatpush1.xpose.msra.mxu0 0.0
        %1335 = vmatprep.subr.mxu0 0.0
        %1336 = vmatpush1.xpose.msra.mxu0 0.0
        %1337 = vmatprep.subr.mxu0 0.0
        %1338 = vmatpush1.xpose.msra.mxu0 0.0
        %1339 = vmatprep.subr.mxu0 0.0
        %1340 = vmatpush1.xpose.msra.mxu0 0.0
        %1341 = vmatprep.subr.mxu0 0.0
        %1342 = vmatpush1.xpose.msra.mxu0 0.0
        %1343 = vmatprep.subr.mxu0 0.0
        %1344 = vmatpush1.xpose.msra.mxu0 0.0
        %1345 = vmatprep.mubr.f32.mxu0 0.0
        %1346 = vmatmul.mubr.f32.gmra.mrb[0].mxu0 %v1277
        %v1347 = vpop.f32.mrb[0].mxu0
        %v1348 = vadd.f32 0.0, %v1347
        %v1349 = vpop.f32.mrb[0].mxu0
        %1350 = vdwg.mxu0
        %v1351 = vmul.f32 %v1348, 0.35355338
        %v1352 = vadd.f32 %v1351, %v588
        %v1353 = vsel %vm772, %v1352, -inf
        %1354 = vmax.xlane.f32.xlu0 %v1353
        %v1355 = vpop.xlane.xlu0 %1354
        %v1356 = vsub.f32 %v1352, %v1355
        %v1357 = vmul.f32 %v1356, 1.442695
        %v1358 = vpow.pop %v1357
        %v1359 = vsel %vm772, %v1358, 0.0
        %1360 = vadd.xlane.f32.xlu0 %v1359
        %v1361 = vpop.xlane.xlu0 %1360
        %v1362 = vrcp.pop %v1361
        %v1363 = vmul.f32 %v1358, %v1362
        %1364 = vrot.lane.b32.xlu0 %v771, 72
        %v1365 = vpop.permute.xlu0 %1364
        %v1368 = vsel %vm772, %v1363, 0
        %1370 = vmatprep.subr.mxu0 0.0
        %1371 = vmatpush1.msra.mxu0 %v1365
        %1372 = vmatprep.subr.mxu0 0.0
        %1373 = vmatpush1.msra.mxu0 0.0
        %1374 = vmatprep.subr.mxu0 0.0
        %1375 = vmatpush1.msra.mxu0 0.0
        %1376 = vmatprep.subr.mxu0 0.0
        %1377 = vmatpush1.msra.mxu0 0.0
        %1378 = vmatprep.subr.mxu0 0.0
        %1379 = vmatpush1.msra.mxu0 0.0
        %1380 = vmatprep.subr.mxu0 0.0
        %1381 = vmatpush1.msra.mxu0 0.0
        %1382 = vmatprep.subr.mxu0 0.0
        %1383 = vmatpush1.msra.mxu0 0.0
        %1384 = vmatprep.subr.mxu0 0.0
        %1385 = vmatpush1.msra.mxu0 0.0
        %1386 = vmatprep.subr.mxu0 0.0
        %1387 = vmatpush1.msra.mxu0 0.0
        %1388 = vmatprep.subr.mxu0 0.0
        %1389 = vmatpush1.msra.mxu0 0.0
        %1390 = vmatprep.subr.mxu0 0.0
        %1391 = vmatpush1.msra.mxu0 0.0
        %1392 = vmatprep.subr.mxu0 0.0
        %1393 = vmatpush1.msra.mxu0 0.0
        %1394 = vmatprep.subr.mxu0 0.0
        %1395 = vmatpush1.msra.mxu0 0.0
        %1396 = vmatprep.subr.mxu0 0.0
        %1397 = vmatpush1.msra.mxu0 0.0
        %1398 = vmatprep.subr.mxu0 0.0
        %1399 = vmatpush1.msra.mxu0 0.0
        %1400 = vmatprep.subr.mxu0 0.0
        %1401 = vmatpush1.msra.mxu0 0.0
        %1402 = vmatprep.subr.mxu0 0.0
        %1403 = vmatpush1.msra.mxu0 0.0
        %1404 = vmatprep.subr.mxu0 0.0
        %1405 = vmatpush1.msra.mxu0 0.0
        %1406 = vmatprep.subr.mxu0 0.0
        %1407 = vmatpush1.msra.mxu0 0.0
        %1408 = vmatprep.subr.mxu0 0.0
        %1409 = vmatpush1.msra.mxu0 0.0
        %1410 = vmatprep.subr.mxu0 0.0
        %1411 = vmatpush1.msra.mxu0 0.0
        %1412 = vmatprep.subr.mxu0 0.0
        %1413 = vmatpush1.msra.mxu0 0.0
        %1414 = vmatprep.subr.mxu0 0.0
        %1415 = vmatpush1.msra.mxu0 0.0
        %1416 = vmatprep.subr.mxu0 0.0
        %1417 = vmatpush1.msra.mxu0 0.0
        %1418 = vmatprep.subr.mxu0 0.0
        %1419 = vmatpush1.msra.mxu0 0.0
        %1420 = vmatprep.subr.mxu0 0.0
        %1421 = vmatpush1.msra.mxu0 0.0
        %1422 = vmatprep.subr.mxu0 0.0
        %1423 = vmatpush1.msra.mxu0 0.0
        %1424 = vmatprep.subr.mxu0 0.0
        %1425 = vmatpush1.msra.mxu0 0.0
        %1426 = vmatprep.subr.mxu0 0.0
        %1427 = vmatpush1.msra.mxu0 0.0
        %1428 = vmatprep.subr.mxu0 0.0
        %1429 = vmatpush1.msra.mxu0 0.0
        %1430 = vmatprep.subr.mxu0 0.0
        %1431 = vmatpush1.msra.mxu0 0.0
        %1432 = vmatprep.subr.mxu0 0.0
        %1433 = vmatpush1.msra.mxu0 0.0
        %1434 = vmatprep.mubr.f32.mxu0 0.0
        %1435 = vmatmul.mubr.f32.gmra.mrb[0].mxu0 %v1368
        %v1436 = vpop.f32.mrb[0].mxu0
        %v1437 = vadd.f32 0.0, %v1436
        %v1438 = vpop.f32.mrb[0].mxu0
        %1439 = vdwg.mxu0
        %1440 = vst.msk [vmem:[%s570] sm:$0xff] %vm772, %v861
        %1441 = vst.msk [vmem:[%s570 + $0x8] sm:$0xff] %vm772, %v1029
        %1442 = vst.msk [vmem:[%s570 + $0x10] sm:$0xff] %vm772, %v1196
        %1443 = vst.msk [vmem:[%s570 + $0x18] sm:$0xff] %vm772, %v1363
        %1445 = vrot.lane.b32.xlu0 %v1103, 8
        %v1446 = vpop.permute.xlu0 %1445
        %1449 = vrot.lane.b32.xlu0 %v1270, 16
        %v1450 = vpop.permute.xlu0 %1449
        %1453 = vrot.lane.b32.xlu0 %v1437, 24
        %v1454 = vpop.permute.xlu0 %1453
        %v1456 = vsel %vm772, %v936, %v1446
        %vm1457 = vcmask 130048
        %v1458 = vsel %vm1457, %v1456, %v1450
        %vm1459 = vcmask 195584
        %v1460 = vsel %vm1459, %v1458, %v1454
        %v1461 = vlaneseq
        %v1462 = vshrl.u32 %v1461, 7
        %v1463 = vsub.s32 3, %v1462
        %v1464 = vrot.slane %v593, %v1463
        %1465 = vrot.lane.b32.xlu0 %v589, 32
        %v1466 = vpop.permute.xlu0 %1465
        %1467 = vrot.lane.b32.xlu0 %v590, 32
        %v1468 = vpop.permute.xlu0 %1467
        %1469 = vrot.lane.b32.xlu0 %v591, 32
        %v1470 = vpop.permute.xlu0 %1469
        %1471 = vrot.lane.b32.xlu0 %v592, 32
        %v1472 = vpop.permute.xlu0 %1471
        %v1478 = vsel %vm598, %v1460, 0
        %1480 = vmatprep.subr.mxu0 0.0
        %1481 = vmatpush1.msra.mxu0 %v1466
        %1482 = vmatprep.subr.mxu0 0.0
        %1483 = vmatpush1.msra.mxu0 %v1468
        %1484 = vmatprep.subr.mxu0 0.0
        %1485 = vmatpush1.msra.mxu0 %v1470
        %1486 = vmatprep.subr.mxu0 0.0
        %1487 = vmatpush1.msra.mxu0 %v1472
        %1488 = vmatprep.subr.mxu0 0.0
        %1489 = vmatpush1.msra.mxu0 0.0
        %1490 = vmatprep.subr.mxu0 0.0
        %1491 = vmatpush1.msra.mxu0 0.0
        %1492 = vmatprep.subr.mxu0 0.0
        %1493 = vmatpush1.msra.mxu0 0.0
        %1494 = vmatprep.subr.mxu0 0.0
        %1495 = vmatpush1.msra.mxu0 0.0
        %1496 = vmatprep.subr.mxu0 0.0
        %1497 = vmatpush1.msra.mxu0 0.0
        %1498 = vmatprep.subr.mxu0 0.0
        %1499 = vmatpush1.msra.mxu0 0.0
        %1500 = vmatprep.subr.mxu0 0.0
        %1501 = vmatpush1.msra.mxu0 0.0
        %1502 = vmatprep.subr.mxu0 0.0
        %1503 = vmatpush1.msra.mxu0 0.0
        %1504 = vmatprep.subr.mxu0 0.0
        %1505 = vmatpush1.msra.mxu0 0.0
        %1506 = vmatprep.subr.mxu0 0.0
        %1507 = vmatpush1.msra.mxu0 0.0
        %1508 = vmatprep.subr.mxu0 0.0
        %1509 = vmatpush1.msra.mxu0 0.0
        %1510 = vmatprep.subr.mxu0 0.0
        %1511 = vmatpush1.msra.mxu0 0.0
        %1512 = vmatprep.subr.mxu0 0.0
        %1513 = vmatpush1.msra.mxu0 0.0
        %1514 = vmatprep.subr.mxu0 0.0
        %1515 = vmatpush1.msra.mxu0 0.0
        %1516 = vmatprep.subr.mxu0 0.0
        %1517 = vmatpush1.msra.mxu0 0.0
        %1518 = vmatprep.subr.mxu0 0.0
        %1519 = vmatpush1.msra.mxu0 0.0
        %1520 = vmatprep.subr.mxu0 0.0
        %1521 = vmatpush1.msra.mxu0 0.0
        %1522 = vmatprep.subr.mxu0 0.0
        %1523 = vmatpush1.msra.mxu0 0.0
        %1524 = vmatprep.subr.mxu0 0.0
        %1525 = vmatpush1.msra.mxu0 0.0
        %1526 = vmatprep.subr.mxu0 0.0
        %1527 = vmatpush1.msra.mxu0 0.0
        %1528 = vmatprep.subr.mxu0 0.0
        %1529 = vmatpush1.msra.mxu0 0.0
        %1530 = vmatprep.subr.mxu0 0.0
        %1531 = vmatpush1.msra.mxu0 0.0
        %1532 = vmatprep.subr.mxu0 0.0
        %1533 = vmatpush1.msra.mxu0 0.0
        %1534 = vmatprep.subr.mxu0 0.0
        %1535 = vmatpush1.msra.mxu0 0.0
        %1536 = vmatprep.subr.mxu0 0.0
        %1537 = vmatpush1.msra.mxu0 0.0
        %1538 = vmatprep.subr.mxu0 0.0
        %1539 = vmatpush1.msra.mxu0 0.0
        %1540 = vmatprep.subr.mxu0 0.0
        %1541 = vmatpush1.msra.mxu0 0.0
        %1542 = vmatprep.subr.mxu0 0.0
        %1543 = vmatpush1.msra.mxu0 0.0
        %1544 = vmatprep.mubr.f32.mxu0 0.0
        %1545 = vmatmul.mubr.f32.gmra.mrb[0].mxu0 %v1478
        %v1546 = vpop.f32.mrb[0].mxu0
        %v1547 = vadd.f32 %v1464, %v1546
        %v1548 = vpop.f32.mrb[0].mxu0
        %1549 = vdwg.mxu0
        %v1550 = vadd.f32 %v1547, %v586
        %v1551 = vsel %vm598, %v1550, 0.0
        %1552 = vadd.xlane.f32.xlu0 %v1551
        %v1553 = vpop.xlane.xlu0 %1552
        %v1554 = vrcp.pop 32.0
        %v1555 = vmul.f32 %v1553, %v1554
        %v1556 = vsub.f32 %v1550, %v1555
        %v1557 = vmul.f32 %v1556, %v1556
        %v1558 = vsel %vm598, %v1557, 0.0
        %1559 = vadd.xlane.f32.xlu0 %v1558
        %v1560 = vpop.xlane.xlu0 %1559
        %v1561 = vmul.f32 %v1560, %v1554
        %v1562 = vadd.f32 %v1561, 1e-05
        %v1563 = vrsqrt.pop %v1562
        %v1564 = vmul.f32 %v1556, %v1563
        %v1565 = vlaneseq
        %v1566 = vshrl.u32 %v1565, 7
        %v1567 = vsub.s32 4, %v1566
        %v1568 = vrot.slane %v593, %v1567
        %v1569 = vmul.f32 %v1564, %v1568
        %v1570 = vlaneseq
        %v1571 = vshrl.u32 %v1570, 7
        %v1572 = vsub.s32 5, %v1571
        %v1573 = vrot.slane %v593, %v1572
        %v1574 = vadd.f32 %v1569, %v1573
        %v1575 = vld [vmem:[%s585] sm:$0xff]
        %v1576 = vld [vmem:[%s6] sm:$0xff]
        %v1577 = vld [vmem:[%s6 + $0x8] sm:$0xff]
        %v1578 = vld [vmem:[%s6 + $0x10] sm:$0xff]
        %v1579 = vld [vmem:[%s6 + $0x18] sm:$0xff]
        %v1580 = vld [vmem:[%s7] sm:$0x3f]
        %v1581 = vlaneseq
        %v1582 = vshrl.u32 %v1581, 7
        %v1583 = vsub.s32 0, %v1582
        %v1584 = vrot.slane %v1580, %v1583
        %v1586 = vsel %vm598, %v1574, 0
        %1588 = vmatprep.subr.mxu0 0.0
        %1589 = vmatpush1.msra.mxu0 %v1576
        %1590 = vmatprep.subr.mxu0 0.0
        %1591 = vmatpush1.msra.mxu0 %v1577
        %1592 = vmatprep.subr.mxu0 0.0
        %1593 = vmatpush1.msra.mxu0 %v1578
        %1594 = vmatprep.subr.mxu0 0.0
        %1595 = vmatpush1.msra.mxu0 %v1579
        %1596 = vmatprep.subr.mxu0 0.0
        %1597 = vmatpush1.msra.mxu0 0.0
        %1598 = vmatprep.subr.mxu0 0.0
        %1599 = vmatpush1.msra.mxu0 0.0
        %1600 = vmatprep.subr.mxu0 0.0
        %1601 = vmatpush1.msra.mxu0 0.0
        %1602 = vmatprep.subr.mxu0 0.0
        %1603 = vmatpush1.msra.mxu0 0.0
        %1604 = vmatprep.subr.mxu0 0.0
        %1605 = vmatpush1.msra.mxu0 0.0
        %1606 = vmatprep.subr.mxu0 0.0
        %1607 = vmatpush1.msra.mxu0 0.0
        %1608 = vmatprep.subr.mxu0 0.0
        %1609 = vmatpush1.msra.mxu0 0.0
        %1610 = vmatprep.subr.mxu0 0.0
        %1611 = vmatpush1.msra.mxu0 0.0
        %1612 = vmatprep.subr.mxu0 0.0
        %1613 = vmatpush1.msra.mxu0 0.0
        %1614 = vmatprep.subr.mxu0 0.0
        %1615 = vmatpush1.msra.mxu0 0.0
        %1616 = vmatprep.subr.mxu0 0.0
        %1617 = vmatpush1.msra.mxu0 0.0
        %1618 = vmatprep.subr.mxu0 0.0
        %1619 = vmatpush1.msra.mxu0 0.0
        %1620 = vmatprep.subr.mxu0 0.0
        %1621 = vmatpush1.msra.mxu0 0.0
        %1622 = vmatprep.subr.mxu0 0.0
        %1623 = vmatpush1.msra.mxu0 0.0
        %1624 = vmatprep.subr.mxu0 0.0
        %1625 = vmatpush1.msra.mxu0 0.0
        %1626 = vmatprep.subr.mxu0 0.0
        %1627 = vmatpush1.msra.mxu0 0.0
        %1628 = vmatprep.subr.mxu0 0.0
        %1629 = vmatpush1.msra.mxu0 0.0
        %1630 = vmatprep.subr.mxu0 0.0
        %1631 = vmatpush1.msra.mxu0 0.0
        %1632 = vmatprep.subr.mxu0 0.0
        %1633 = vmatpush1.msra.mxu0 0.0
        %1634 = vmatprep.subr.mxu0 0.0
        %1635 = vmatpush1.msra.mxu0 0.0
        %1636 = vmatprep.subr.mxu0 0.0
        %1637 = vmatpush1.msra.mxu0 0.0
        %1638 = vmatprep.subr.mxu0 0.0
        %1639 = vmatpush1.msra.mxu0 0.0
        %1640 = vmatprep.subr.mxu0 0.0
        %1641 = vmatpush1.msra.mxu0 0.0
        %1642 = vmatprep.subr.mxu0 0.0
        %1643 = vmatpush1.msra.mxu0 0.0
        %1644 = vmatprep.subr.mxu0 0.0
        %1645 = vmatpush1.msra.mxu0 0.0
        %1646 = vmatprep.subr.mxu0 0.0
        %1647 = vmatpush1.msra.mxu0 0.0
        %1648 = vmatprep.subr.mxu0 0.0
        %1649 = vmatpush1.msra.mxu0 0.0
        %1650 = vmatprep.subr.mxu0 0.0
        %1651 = vmatpush1.msra.mxu0 0.0
        %1652 = vmatprep.mubr.f32.mxu0 0.0
        %1653 = vmatmul.mubr.f32.gmra.mrb[0].mxu0 %v1586
        %v1654 = vpop.f32.mrb[0].mxu0
        %v1655 = vadd.f32 %v1584, %v1654
        %v1656 = vpop.f32.mrb[0].mxu0
        %1657 = vdwg.mxu0
        %1662 = vrot.lane.b32.xlu0 %v1576, 96
        %v1663 = vpop.permute.xlu0 %1662
        %1664 = vrot.lane.b32.xlu0 %v1577, 96
        %v1665 = vpop.permute.xlu0 %1664
        %1666 = vrot.lane.b32.xlu0 %v1578, 96
        %v1667 = vpop.permute.xlu0 %1666
        %1668 = vrot.lane.b32.xlu0 %v1579, 96
        %v1669 = vpop.permute.xlu0 %1668
        %v1675 = vsel %vm598, %v587, 0
        %1677 = vmatprep.subr.mxu0 0.0
        %1678 = vmatpush1.msra.mxu0 %v1663
        %1679 = vmatprep.subr.mxu0 0.0
        %1680 = vmatpush1.msra.mxu0 %v1665
        %1681 = vmatprep.subr.mxu0 0.0
        %1682 = vmatpush1.msra.mxu0 %v1667
        %1683 = vmatprep.subr.mxu0 0.0
        %1684 = vmatpush1.msra.mxu0 %v1669
        %1685 = vmatprep.subr.mxu0 0.0
        %1686 = vmatpush1.msra.mxu0 0.0
        %1687 = vmatprep.subr.mxu0 0.0
        %1688 = vmatpush1.msra.mxu0 0.0
        %1689 = vmatprep.subr.mxu0 0.0
        %1690 = vmatpush1.msra.mxu0 0.0
        %1691 = vmatprep.subr.mxu0 0.0
        %1692 = vmatpush1.msra.mxu0 0.0
        %1693 = vmatprep.subr.mxu0 0.0
        %1694 = vmatpush1.msra.mxu0 0.0
        %1695 = vmatprep.subr.mxu0 0.0
        %1696 = vmatpush1.msra.mxu0 0.0
        %1697 = vmatprep.subr.mxu0 0.0
        %1698 = vmatpush1.msra.mxu0 0.0
        %1699 = vmatprep.subr.mxu0 0.0
        %1700 = vmatpush1.msra.mxu0 0.0
        %1701 = vmatprep.subr.mxu0 0.0
        %1702 = vmatpush1.msra.mxu0 0.0
        %1703 = vmatprep.subr.mxu0 0.0
        %1704 = vmatpush1.msra.mxu0 0.0
        %1705 = vmatprep.subr.mxu0 0.0
        %1706 = vmatpush1.msra.mxu0 0.0
        %1707 = vmatprep.subr.mxu0 0.0
        %1708 = vmatpush1.msra.mxu0 0.0
        %1709 = vmatprep.subr.mxu0 0.0
        %1710 = vmatpush1.msra.mxu0 0.0
        %1711 = vmatprep.subr.mxu0 0.0
        %1712 = vmatpush1.msra.mxu0 0.0
        %1713 = vmatprep.subr.mxu0 0.0
        %1714 = vmatpush1.msra.mxu0 0.0
        %1715 = vmatprep.subr.mxu0 0.0
        %1716 = vmatpush1.msra.mxu0 0.0
        %1717 = vmatprep.subr.mxu0 0.0
        %1718 = vmatpush1.msra.mxu0 0.0
        %1719 = vmatprep.subr.mxu0 0.0
        %1720 = vmatpush1.msra.mxu0 0.0
        %1721 = vmatprep.subr.mxu0 0.0
        %1722 = vmatpush1.msra.mxu0 0.0
        %1723 = vmatprep.subr.mxu0 0.0
        %1724 = vmatpush1.msra.mxu0 0.0
        %1725 = vmatprep.subr.mxu0 0.0
        %1726 = vmatpush1.msra.mxu0 0.0
        %1727 = vmatprep.subr.mxu0 0.0
        %1728 = vmatpush1.msra.mxu0 0.0
        %1729 = vmatprep.subr.mxu0 0.0
        %1730 = vmatpush1.msra.mxu0 0.0
        %1731 = vmatprep.subr.mxu0 0.0
        %1732 = vmatpush1.msra.mxu0 0.0
        %1733 = vmatprep.subr.mxu0 0.0
        %1734 = vmatpush1.msra.mxu0 0.0
        %1735 = vmatprep.subr.mxu0 0.0
        %1736 = vmatpush1.msra.mxu0 0.0
        %1737 = vmatprep.subr.mxu0 0.0
        %1738 = vmatpush1.msra.mxu0 0.0
        %1739 = vmatprep.subr.mxu0 0.0
        %1740 = vmatpush1.msra.mxu0 0.0
        %1741 = vmatprep.mubr.f32.mxu0 0.0
        %1742 = vmatmul.mubr.f32.gmra.mrb[0].mxu0 %v1675
        %v1743 = vpop.f32.mrb[0].mxu0
        %v1744 = vadd.f32 0.0, %v1743
        %v1745 = vpop.f32.mrb[0].mxu0
        %1746 = vdwg.mxu0
        %v1747 = vlaneseq
        %v1748 = vshrl.u32 %v1747, 7
        %v1749 = vsub.s32 1, %v1748
        %v1750 = vrot.slane %v1580, %v1749
        %v1751 = vadd.f32 %v1744, %v1750
        %v1752 = vlaneseq
        %v1753 = vshrl.u32 %v1752, 7
        %v1754 = vsub.s32 2, %v1753
        %v1755 = vrot.slane %v1580, %v1754
        %1757 = vrot.lane.b32.xlu0 %v1755, 32
        %v1758 = vpop.permute.xlu0 %1757
        %v1760 = vadd.f32 %v1744, %v1758
        %v1762 = vsel %vm772, %v1655, 0
        %v1765 = vsel %vm772, %v1751, 0
        %1767 = vmatprep.subr.mxu0 0.0
        %1768 = vmatpush1.xpose.msra.mxu0 %v1765
        %1769 = vmatprep.subr.mxu0 0.0
        %1770 = vmatpush1.xpose.msra.mxu0 0.0
        %1771 = vmatprep.subr.mxu0 0.0
        %1772 = vmatpush1.xpose.msra.mxu0 0.0
        %1773 = vmatprep.subr.mxu0 0.0
        %1774 = vmatpush1.xpose.msra.mxu0 0.0
        %1775 = vmatprep.subr.mxu0 0.0
        %1776 = vmatpush1.xpose.msra.mxu0 0.0
        %1777 = vmatprep.subr.mxu0 0.0
        %1778 = vmatpush1.xpose.msra.mxu0 0.0
        %1779 = vmatprep.subr.mxu0 0.0
        %1780 = vmatpush1.xpose.msra.mxu0 0.0
        %1781 = vmatprep.subr.mxu0 0.0
        %1782 = vmatpush1.xpose.msra.mxu0 0.0
        %1783 = vmatprep.subr.mxu0 0.0
        %1784 = vmatpush1.xpose.msra.mxu0 0.0
        %1785 = vmatprep.subr.mxu0 0.0
        %1786 = vmatpush1.xpose.msra.mxu0 0.0
        %1787 = vmatprep.subr.mxu0 0.0
        %1788 = vmatpush1.xpose.msra.mxu0 0.0
        %1789 = vmatprep.subr.mxu0 0.0
        %1790 = vmatpush1.xpose.msra.mxu0 0.0
        %1791 = vmatprep.subr.mxu0 0.0
        %1792 = vmatpush1.xpose.msra.mxu0 0.0
        %1793 = vmatprep.subr.mxu0 0.0
        %1794 = vmatpush1.xpose.msra.mxu0 0.0
        %1795 = vmatprep.subr.mxu0 0.0
        %1796 = vmatpush1.xpose.msra.mxu0 0.0
        %1797 = vmatprep.subr.mxu0 0.0
        %1798 = vmatpush1.xpose.msra.mxu0 0.0
        %1799 = vmatprep.subr.mxu0 0.0
        %1800 = vmatpush1.xpose.msra.mxu0 0.0
        %1801 = vmatprep.subr.mxu0 0.0
        %1802 = vmatpush1.xpose.msra.mxu0 0.0
        %1803 = vmatprep.subr.mxu0 0.0
        %1804 = vmatpush1.xpose.msra.mxu0 0.0
        %1805 = vmatprep.subr.mxu0 0.0
        %1806 = vmatpush1.xpose.msra.mxu0 0.0
        %1807 = vmatprep.subr.mxu0 0.0
        %1808 = vmatpush1.xpose.msra.mxu0 0.0
        %1809 = vmatprep.subr.mxu0 0.0
        %1810 = vmatpush1.xpose.msra.mxu0 0.0
        %1811 = vmatprep.subr.mxu0 0.0
        %1812 = vmatpush1.xpose.msra.mxu0 0.0
        %1813 = vmatprep.subr.mxu0 0.0
        %1814 = vmatpush1.xpose.msra.mxu0 0.0
        %1815 = vmatprep.subr.mxu0 0.0
        %1816 = vmatpush1.xpose.msra.mxu0 0.0
        %1817 = vmatprep.subr.mxu0 0.0
        %1818 = vmatpush1.xpose.msra.mxu0 0.0
        %1819 = vmatprep.subr.mxu0 0.0
        %1820 = vmatpush1.xpose.msra.mxu0 0.0
        %1821 = vmatprep.subr.mxu0 0.0
        %1822 = vmatpush1.xpose.msra.mxu0 0.0
        %1823 = vmatprep.subr.mxu0 0.0
        %1824 = vmatpush1.xpose.msra.mxu0 0.0
        %1825 = vmatprep.subr.mxu0 0.0
        %1826 = vmatpush1.xpose.msra.mxu0 0.0
        %1827 = vmatprep.subr.mxu0 0.0
        %1828 = vmatpush1.xpose.msra.mxu0 0.0
        %1829 = vmatprep.subr.mxu0 0.0
        %1830 = vmatpush1.xpose.msra.mxu0 0.0
        %1831 = vmatprep.mubr.f32.mxu0 0.0
        %1832 = vmatmul.mubr.f32.gmra.mrb[0].mxu0 %v1762
        %v1833 = vpop.f32.mrb[0].mxu0
        %v1834 = vadd.f32 0.0, %v1833
        %v1835 = vpop.f32.mrb[0].mxu0
        %1836 = vdwg.mxu0
        %v1837 = vmul.f32 %v1834, 0.35355338
        %v1838 = vadd.f32 %v1837, %v1575
        %v1839 = vsel %vm772, %v1838, -inf
        %1840 = vmax.xlane.f32.xlu0 %v1839
        %v1841 = vpop.xlane.xlu0 %1840
        %v1842 = vsub.f32 %v1838, %v1841
        %v1843 = vmul.f32 %v1842, 1.442695
        %v1844 = vpow.pop %v1843
        %v1845 = vsel %vm772, %v1844, 0.0
        %1846 = vadd.xlane.f32.xlu0 %v1845
        %v1847 = vpop.xlane.xlu0 %1846
        %v1848 = vrcp.pop %v1847
        %v1849 = vmul.f32 %v1844, %v1848
        %1851 = vrot.lane.b32.xlu0 %v1760, 96
        %v1852 = vpop.permute.xlu0 %1851
        %v1855 = vsel %vm772, %v1849, 0
        %1857 = vmatprep.subr.mxu0 0.0
        %1858 = vmatpush1.msra.mxu0 %v1852
        %1859 = vmatprep.subr.mxu0 0.0
        %1860 = vmatpush1.msra.mxu0 0.0
        %1861 = vmatprep.subr.mxu0 0.0
        %1862 = vmatpush1.msra.mxu0 0.0
        %1863 = vmatprep.subr.mxu0 0.0
        %1864 = vmatpush1.msra.mxu0 0.0
        %1865 = vmatprep.subr.mxu0 0.0
        %1866 = vmatpush1.msra.mxu0 0.0
        %1867 = vmatprep.subr.mxu0 0.0
        %1868 = vmatpush1.msra.mxu0 0.0
        %1869 = vmatprep.subr.mxu0 0.0
        %1870 = vmatpush1.msra.mxu0 0.0
        %1871 = vmatprep.subr.mxu0 0.0
        %1872 = vmatpush1.msra.mxu0 0.0
        %1873 = vmatprep.subr.mxu0 0.0
        %1874 = vmatpush1.msra.mxu0 0.0
        %1875 = vmatprep.subr.mxu0 0.0
        %1876 = vmatpush1.msra.mxu0 0.0
        %1877 = vmatprep.subr.mxu0 0.0
        %1878 = vmatpush1.msra.mxu0 0.0
        %1879 = vmatprep.subr.mxu0 0.0
        %1880 = vmatpush1.msra.mxu0 0.0
        %1881 = vmatprep.subr.mxu0 0.0
        %1882 = vmatpush1.msra.mxu0 0.0
        %1883 = vmatprep.subr.mxu0 0.0
        %1884 = vmatpush1.msra.mxu0 0.0
        %1885 = vmatprep.subr.mxu0 0.0
        %1886 = vmatpush1.msra.mxu0 0.0
        %1887 = vmatprep.subr.mxu0 0.0
        %1888 = vmatpush1.msra.mxu0 0.0
        %1889 = vmatprep.subr.mxu0 0.0
        %1890 = vmatpush1.msra.mxu0 0.0
        %1891 = vmatprep.subr.mxu0 0.0
        %1892 = vmatpush1.msra.mxu0 0.0
        %1893 = vmatprep.subr.mxu0 0.0
        %1894 = vmatpush1.msra.mxu0 0.0
        %1895 = vmatprep.subr.mxu0 0.0
        %1896 = vmatpush1.msra.mxu0 0.0
        %1897 = vmatprep.subr.mxu0 0.0
        %1898 = vmatpush1.msra.mxu0 0.0
        %1899 = vmatprep.subr.mxu0 0.0
        %1900 = vmatpush1.msra.mxu0 0.0
        %1901 = vmatprep.subr.mxu0 0.0
        %1902 = vmatpush1.msra.mxu0 0.0
        %1903 = vmatprep.subr.mxu0 0.0
        %1904 = vmatpush1.msra.mxu0 0.0
        %1905 = vmatprep.subr.mxu0 0.0
        %1906 = vmatpush1.msra.mxu0 0.0
        %1907 = vmatprep.subr.mxu0 0.0
        %1908 = vmatpush1.msra.mxu0 0.0
        %1909 = vmatprep.subr.mxu0 0.0
        %1910 = vmatpush1.msra.mxu0 0.0
        %1911 = vmatprep.subr.mxu0 0.0
        %1912 = vmatpush1.msra.mxu0 0.0
        %1913 = vmatprep.subr.mxu0 0.0
        %1914 = vmatpush1.msra.mxu0 0.0
        %1915 = vmatprep.subr.mxu0 0.0
        %1916 = vmatpush1.msra.mxu0 0.0
        %1917 = vmatprep.subr.mxu0 0.0
        %1918 = vmatpush1.msra.mxu0 0.0
        %1919 = vmatprep.subr.mxu0 0.0
        %1920 = vmatpush1.msra.mxu0 0.0
        %1921 = vmatprep.mubr.f32.mxu0 0.0
        %1922 = vmatmul.mubr.f32.gmra.mrb[0].mxu0 %v1855
        %v1923 = vpop.f32.mrb[0].mxu0
        %v1924 = vadd.f32 0.0, %v1923
        %v1925 = vpop.f32.mrb[0].mxu0
        %1926 = vdwg.mxu0
        %1927 = vrot.lane.b32.xlu0 %v1655, 120
        %v1928 = vpop.permute.xlu0 %1927
        %1929 = vrot.lane.b32.xlu0 %v1751, 120
        %v1930 = vpop.permute.xlu0 %1929
        %v1931 = vsel %vm772, %v1928, 0
        %v1933 = vsel %vm772, %v1930, 0
        %1935 = vmatprep.subr.mxu0 0.0
        %1936 = vmatpush1.xpose.msra.mxu0 %v1933
        %1937 = vmatprep.subr.mxu0 0.0
        %1938 = vmatpush1.xpose.msra.mxu0 0.0
        %1939 = vmatprep.subr.mxu0 0.0
        %1940 = vmatpush1.xpose.msra.mxu0 0.0
        %1941 = vmatprep.subr.mxu0 0.0
        %1942 = vmatpush1.xpose.msra.mxu0 0.0
        %1943 = vmatprep.subr.mxu0 0.0
        %1944 = vmatpush1.xpose.msra.mxu0 0.0
        %1945 = vmatprep.subr.mxu0 0.0
        %1946 = vmatpush1.xpose.msra.mxu0 0.0
        %1947 = vmatprep.subr.mxu0 0.0
        %1948 = vmatpush1.xpose.msra.mxu0 0.0
        %1949 = vmatprep.subr.mxu0 0.0
        %1950 = vmatpush1.xpose.msra.mxu0 0.0
        %1951 = vmatprep.subr.mxu0 0.0
        %1952 = vmatpush1.xpose.msra.mxu0 0.0
        %1953 = vmatprep.subr.mxu0 0.0
        %1954 = vmatpush1.xpose.msra.mxu0 0.0
        %1955 = vmatprep.subr.mxu0 0.0
        %1956 = vmatpush1.xpose.msra.mxu0 0.0
        %1957 = vmatprep.subr.mxu0 0.0
        %1958 = vmatpush1.xpose.msra.mxu0 0.0
        %1959 = vmatprep.subr.mxu0 0.0
        %1960 = vmatpush1.xpose.msra.mxu0 0.0
        %1961 = vmatprep.subr.mxu0 0.0
        %1962 = vmatpush1.xpose.msra.mxu0 0.0
        %1963 = vmatprep.subr.mxu0 0.0
        %1964 = vmatpush1.xpose.msra.mxu0 0.0
        %1965 = vmatprep.subr.mxu0 0.0
        %1966 = vmatpush1.xpose.msra.mxu0 0.0
        %1967 = vmatprep.subr.mxu0 0.0
        %1968 = vmatpush1.xpose.msra.mxu0 0.0
        %1969 = vmatprep.subr.mxu0 0.0
        %1970 = vmatpush1.xpose.msra.mxu0 0.0
        %1971 = vmatprep.subr.mxu0 0.0
        %1972 = vmatpush1.xpose.msra.mxu0 0.0
        %1973 = vmatprep.subr.mxu0 0.0
        %1974 = vmatpush1.xpose.msra.mxu0 0.0
        %1975 = vmatprep.subr.mxu0 0.0
        %1976 = vmatpush1.xpose.msra.mxu0 0.0
        %1977 = vmatprep.subr.mxu0 0.0
        %1978 = vmatpush1.xpose.msra.mxu0 0.0
        %1979 = vmatprep.subr.mxu0 0.0
        %1980 = vmatpush1.xpose.msra.mxu0 0.0
        %1981 = vmatprep.subr.mxu0 0.0
        %1982 = vmatpush1.xpose.msra.mxu0 0.0
        %1983 = vmatprep.subr.mxu0 0.0
        %1984 = vmatpush1.xpose.msra.mxu0 0.0
        %1985 = vmatprep.subr.mxu0 0.0
        %1986 = vmatpush1.xpose.msra.mxu0 0.0
        %1987 = vmatprep.subr.mxu0 0.0
        %1988 = vmatpush1.xpose.msra.mxu0 0.0
        %1989 = vmatprep.subr.mxu0 0.0
        %1990 = vmatpush1.xpose.msra.mxu0 0.0
        %1991 = vmatprep.subr.mxu0 0.0
        %1992 = vmatpush1.xpose.msra.mxu0 0.0
        %1993 = vmatprep.subr.mxu0 0.0
        %1994 = vmatpush1.xpose.msra.mxu0 0.0
        %1995 = vmatprep.subr.mxu0 0.0
        %1996 = vmatpush1.xpose.msra.mxu0 0.0
        %1997 = vmatprep.subr.mxu0 0.0
        %1998 = vmatpush1.xpose.msra.mxu0 0.0
        %1999 = vmatprep.mubr.f32.mxu0 0.0
        %2000 = vmatmul.mubr.f32.gmra.mrb[0].mxu0 %v1931
        %v2001 = vpop.f32.mrb[0].mxu0
        %v2002 = vadd.f32 0.0, %v2001
        %v2003 = vpop.f32.mrb[0].mxu0
        %2004 = vdwg.mxu0
        %v2005 = vmul.f32 %v2002, 0.35355338
        %v2006 = vadd.f32 %v2005, %v1575
        %v2007 = vsel %vm772, %v2006, -inf
        %2008 = vmax.xlane.f32.xlu0 %v2007
        %v2009 = vpop.xlane.xlu0 %2008
        %v2010 = vsub.f32 %v2006, %v2009
        %v2011 = vmul.f32 %v2010, 1.442695
        %v2012 = vpow.pop %v2011
        %v2013 = vsel %vm772, %v2012, 0.0
        %2014 = vadd.xlane.f32.xlu0 %v2013
        %v2015 = vpop.xlane.xlu0 %2014
        %v2016 = vrcp.pop %v2015
        %v2017 = vmul.f32 %v2012, %v2016
        %2018 = vrot.lane.b32.xlu0 %v1760, 88
        %v2019 = vpop.permute.xlu0 %2018
        %v2022 = vsel %vm772, %v2017, 0
        %2024 = vmatprep.subr.mxu0 0.0
        %2025 = vmatpush1.msra.mxu0 %v2019
        %2026 = vmatprep.subr.mxu0 0.0
        %2027 = vmatpush1.msra.mxu0 0.0
        %2028 = vmatprep.subr.mxu0 0.0
        %2029 = vmatpush1.msra.mxu0 0.0
        %2030 = vmatprep.subr.mxu0 0.0
        %2031 = vmatpush1.msra.mxu0 0.0
        %2032 = vmatprep.subr.mxu0 0.0
        %2033 = vmatpush1.msra.mxu0 0.0
        %2034 = vmatprep.subr.mxu0 0.0
        %2035 = vmatpush1.msra.mxu0 0.0
        %2036 = vmatprep.subr.mxu0 0.0
        %2037 = vmatpush1.msra.mxu0 0.0
        %2038 = vmatprep.subr.mxu0 0.0
        %2039 = vmatpush1.msra.mxu0 0.0
        %2040 = vmatprep.subr.mxu0 0.0
        %2041 = vmatpush1.msra.mxu0 0.0
        %2042 = vmatprep.subr.mxu0 0.0
        %2043 = vmatpush1.msra.mxu0 0.0
        %2044 = vmatprep.subr.mxu0 0.0
        %2045 = vmatpush1.msra.mxu0 0.0
        %2046 = vmatprep.subr.mxu0 0.0
        %2047 = vmatpush1.msra.mxu0 0.0
        %2048 = vmatprep.subr.mxu0 0.0
        %2049 = vmatpush1.msra.mxu0 0.0
        %2050 = vmatprep.subr.mxu0 0.0
        %2051 = vmatpush1.msra.mxu0 0.0
        %2052 = vmatprep.subr.mxu0 0.0
        %2053 = vmatpush1.msra.mxu0 0.0
        %2054 = vmatprep.subr.mxu0 0.0
        %2055 = vmatpush1.msra.mxu0 0.0
        %2056 = vmatprep.subr.mxu0 0.0
        %2057 = vmatpush1.msra.mxu0 0.0
        %2058 = vmatprep.subr.mxu0 0.0
        %2059 = vmatpush1.msra.mxu0 0.0
        %2060 = vmatprep.subr.mxu0 0.0
        %2061 = vmatpush1.msra.mxu0 0.0
        %2062 = vmatprep.subr.mxu0 0.0
        %2063 = vmatpush1.msra.mxu0 0.0
        %2064 = vmatprep.subr.mxu0 0.0
        %2065 = vmatpush1.msra.mxu0 0.0
        %2066 = vmatprep.subr.mxu0 0.0
        %2067 = vmatpush1.msra.mxu0 0.0
        %2068 = vmatprep.subr.mxu0 0.0
        %2069 = vmatpush1.msra.mxu0 0.0
        %2070 = vmatprep.subr.mxu0 0.0
        %2071 = vmatpush1.msra.mxu0 0.0
        %2072 = vmatprep.subr.mxu0 0.0
        %2073 = vmatpush1.msra.mxu0 0.0
        %2074 = vmatprep.subr.mxu0 0.0
        %2075 = vmatpush1.msra.mxu0 0.0
        %2076 = vmatprep.subr.mxu0 0.0
        %2077 = vmatpush1.msra.mxu0 0.0
        %2078 = vmatprep.subr.mxu0 0.0
        %2079 = vmatpush1.msra.mxu0 0.0
        %2080 = vmatprep.subr.mxu0 0.0
        %2081 = vmatpush1.msra.mxu0 0.0
        %2082 = vmatprep.subr.mxu0 0.0
        %2083 = vmatpush1.msra.mxu0 0.0
        %2084 = vmatprep.subr.mxu0 0.0
        %2085 = vmatpush1.msra.mxu0 0.0
        %2086 = vmatprep.subr.mxu0 0.0
        %2087 = vmatpush1.msra.mxu0 0.0
        %2088 = vmatprep.mubr.f32.mxu0 0.0
        %2089 = vmatmul.mubr.f32.gmra.mrb[0].mxu0 %v2022
        %v2090 = vpop.f32.mrb[0].mxu0
        %v2091 = vadd.f32 0.0, %v2090
        %v2092 = vpop.f32.mrb[0].mxu0
        %2093 = vdwg.mxu0
        %2094 = vrot.lane.b32.xlu0 %v1655, 112
        %v2095 = vpop.permute.xlu0 %2094
        %2096 = vrot.lane.b32.xlu0 %v1751, 112
        %v2097 = vpop.permute.xlu0 %2096
        %v2098 = vsel %vm772, %v2095, 0
        %v2100 = vsel %vm772, %v2097, 0
        %2102 = vmatprep.subr.mxu0 0.0
        %2103 = vmatpush1.xpose.msra.mxu0 %v2100
        %2104 = vmatprep.subr.mxu0 0.0
        %2105 = vmatpush1.xpose.msra.mxu0 0.0
        %2106 = vmatprep.subr.mxu0 0.0
        %2107 = vmatpush1.xpose.msra.mxu0 0.0
        %2108 = vmatprep.subr.mxu0 0.0
        %2109 = vmatpush1.xpose.msra.mxu0 0.0
        %2110 = vmatprep.subr.mxu0 0.0
        %2111 = vmatpush1.xpose.msra.mxu0 0.0
        %2112 = vmatprep.subr.mxu0 0.0
        %2113 = vmatpush1.xpose.msra.mxu0 0.0
        %2114 = vmatprep.subr.mxu0 0.0
        %2115 = vmatpush1.xpose.msra.mxu0 0.0
        %2116 = vmatprep.subr.mxu0 0.0
        %2117 = vmatpush1.xpose.msra.mxu0 0.0
        %2118 = vmatprep.subr.mxu0 0.0
        %2119 = vmatpush1.xpose.msra.mxu0 0.0
        %2120 = vmatprep.subr.mxu0 0.0
        %2121 = vmatpush1.xpose.msra.mxu0 0.0
        %2122 = vmatprep.subr.mxu0 0.0
        %2123 = vmatpush1.xpose.msra.mxu0 0.0
        %2124 = vmatprep.subr.mxu0 0.0
        %2125 = vmatpush1.xpose.msra.mxu0 0.0
        %2126 = vmatprep.subr.mxu0 0.0
        %2127 = vmatpush1.xpose.msra.mxu0 0.0
        %2128 = vmatprep.subr.mxu0 0.0
        %2129 = vmatpush1.xpose.msra.mxu0 0.0
        %2130 = vmatprep.subr.mxu0 0.0
        %2131 = vmatpush1.xpose.msra.mxu0 0.0
        %2132 = vmatprep.subr.mxu0 0.0
        %2133 = vmatpush1.xpose.msra.mxu0 0.0
        %2134 = vmatprep.subr.mxu0 0.0
        %2135 = vmatpush1.xpose.msra.mxu0 0.0
        %2136 = vmatprep.subr.mxu0 0.0
        %2137 = vmatpush1.xpose.msra.mxu0 0.0
        %2138 = vmatprep.subr.mxu0 0.0
        %2139 = vmatpush1.xpose.msra.mxu0 0.0
        %2140 = vmatprep.subr.mxu0 0.0
        %2141 = vmatpush1.xpose.msra.mxu0 0.0
        %2142 = vmatprep.subr.mxu0 0.0
        %2143 = vmatpush1.xpose.msra.mxu0 0.0
        %2144 = vmatprep.subr.mxu0 0.0
        %2145 = vmatpush1.xpose.msra.mxu0 0.0
        %2146 = vmatprep.subr.mxu0 0.0
        %2147 = vmatpush1.xpose.msra.mxu0 0.0
        %2148 = vmatprep.subr.mxu0 0.0
        %2149 = vmatpush1.xpose.msra.mxu0 0.0
        %2150 = vmatprep.subr.mxu0 0.0
        %2151 = vmatpush1.xpose.msra.mxu0 0.0
        %2152 = vmatprep.subr.mxu0 0.0
        %2153 = vmatpush1.xpose.msra.mxu0 0.0
        %2154 = vmatprep.subr.mxu0 0.0
        %2155 = vmatpush1.xpose.msra.mxu0 0.0
        %2156 = vmatprep.subr.mxu0 0.0
        %2157 = vmatpush1.xpose.msra.mxu0 0.0
        %2158 = vmatprep.subr.mxu0 0.0
        %2159 = vmatpush1.xpose.msra.mxu0 0.0
        %2160 = vmatprep.subr.mxu0 0.0
        %2161 = vmatpush1.xpose.msra.mxu0 0.0
        %2162 = vmatprep.subr.mxu0 0.0
        %2163 = vmatpush1.xpose.msra.mxu0 0.0
        %2164 = vmatprep.subr.mxu0 0.0
        %2165 = vmatpush1.xpose.msra.mxu0 0.0
        %2166 = vmatprep.mubr.f32.mxu0 0.0
        %2167 = vmatmul.mubr.f32.gmra.mrb[0].mxu0 %v2098
        %v2168 = vpop.f32.mrb[0].mxu0
        %v2169 = vadd.f32 0.0, %v2168
        %v2170 = vpop.f32.mrb[0].mxu0
        %2171 = vdwg.mxu0
        %v2172 = vmul.f32 %v2169, 0.35355338
        %v2173 = vadd.f32 %v2172, %v1575
        %v2174 = vsel %vm772, %v2173, -inf
        %2175 = vmax.xlane.f32.xlu0 %v2174
        %v2176 = vpop.xlane.xlu0 %2175
        %v2177 = vsub.f32 %v2173, %v2176
        %v2178 = vmul.f32 %v2177, 1.442695
        %v2179 = vpow.pop %v2178
        %v2180 = vsel %vm772, %v2179, 0.0
        %2181 = vadd.xlane.f32.xlu0 %v2180
        %v2182 = vpop.xlane.xlu0 %2181
        %v2183 = vrcp.pop %v2182
        %v2184 = vmul.f32 %v2179, %v2183
        %2185 = vrot.lane.b32.xlu0 %v1760, 80
        %v2186 = vpop.permute.xlu0 %2185
        %v2189 = vsel %vm772, %v2184, 0
        %2191 = vmatprep.subr.mxu0 0.0
        %2192 = vmatpush1.msra.mxu0 %v2186
        %2193 = vmatprep.subr.mxu0 0.0
        %2194 = vmatpush1.msra.mxu0 0.0
        %2195 = vmatprep.subr.mxu0 0.0
        %2196 = vmatpush1.msra.mxu0 0.0
        %2197 = vmatprep.subr.mxu0 0.0
        %2198 = vmatpush1.msra.mxu0 0.0
        %2199 = vmatprep.subr.mxu0 0.0
        %2200 = vmatpush1.msra.mxu0 0.0
        %2201 = vmatprep.subr.mxu0 0.0
        %2202 = vmatpush1.msra.mxu0 0.0
        %2203 = vmatprep.subr.mxu0 0.0
        %2204 = vmatpush1.msra.mxu0 0.0
        %2205 = vmatprep.subr.mxu0 0.0
        %2206 = vmatpush1.msra.mxu0 0.0
        %2207 = vmatprep.subr.mxu0 0.0
        %2208 = vmatpush1.msra.mxu0 0.0
        %2209 = vmatprep.subr.mxu0 0.0
        %2210 = vmatpush1.msra.mxu0 0.0
        %2211 = vmatprep.subr.mxu0 0.0
        %2212 = vmatpush1.msra.mxu0 0.0
        %2213 = vmatprep.subr.mxu0 0.0
        %2214 = vmatpush1.msra.mxu0 0.0
        %2215 = vmatprep.subr.mxu0 0.0
        %2216 = vmatpush1.msra.mxu0 0.0
        %2217 = vmatprep.subr.mxu0 0.0
        %2218 = vmatpush1.msra.mxu0 0.0
        %2219 = vmatprep.subr.mxu0 0.0
        %2220 = vmatpush1.msra.mxu0 0.0
        %2221 = vmatprep.subr.mxu0 0.0
        %2222 = vmatpush1.msra.mxu0 0.0
        %2223 = vmatprep.subr.mxu0 0.0
        %2224 = vmatpush1.msra.mxu0 0.0
        %2225 = vmatprep.subr.mxu0 0.0
        %2226 = vmatpush1.msra.mxu0 0.0
        %2227 = vmatprep.subr.mxu0 0.0
        %2228 = vmatpush1.msra.mxu0 0.0
        %2229 = vmatprep.subr.mxu0 0.0
        %2230 = vmatpush1.msra.mxu0 0.0
        %2231 = vmatprep.subr.mxu0 0.0
        %2232 = vmatpush1.msra.mxu0 0.0
        %2233 = vmatprep.subr.mxu0 0.0
        %2234 = vmatpush1.msra.mxu0 0.0
        %2235 = vmatprep.subr.mxu0 0.0
        %2236 = vmatpush1.msra.mxu0 0.0
        %2237 = vmatprep.subr.mxu0 0.0
        %2238 = vmatpush1.msra.mxu0 0.0
        %2239 = vmatprep.subr.mxu0 0.0
        %2240 = vmatpush1.msra.mxu0 0.0
        %2241 = vmatprep.subr.mxu0 0.0
        %2242 = vmatpush1.msra.mxu0 0.0
        %2243 = vmatprep.subr.mxu0 0.0
        %2244 = vmatpush1.msra.mxu0 0.0
        %2245 = vmatprep.subr.mxu0 0.0
        %2246 = vmatpush1.msra.mxu0 0.0
        %2247 = vmatprep.subr.mxu0 0.0
        %2248 = vmatpush1.msra.mxu0 0.0
        %2249 = vmatprep.subr.mxu0 0.0
        %2250 = vmatpush1.msra.mxu0 0.0
        %2251 = vmatprep.subr.mxu0 0.0
        %2252 = vmatpush1.msra.mxu0 0.0
        %2253 = vmatprep.subr.mxu0 0.0
        %2254 = vmatpush1.msra.mxu0 0.0
        %2255 = vmatprep.mubr.f32.mxu0 0.0
        %2256 = vmatmul.mubr.f32.gmra.mrb[0].mxu0 %v2189
        %v2257 = vpop.f32.mrb[0].mxu0
        %v2258 = vadd.f32 0.0, %v2257
        %v2259 = vpop.f32.mrb[0].mxu0
        %2260 = vdwg.mxu0
        %2261 = vrot.lane.b32.xlu0 %v1655, 104
        %v2262 = vpop.permute.xlu0 %2261
        %2263 = vrot.lane.b32.xlu0 %v1751, 104
        %v2264 = vpop.permute.xlu0 %2263
        %v2265 = vsel %vm772, %v2262, 0
        %v2267 = vsel %vm772, %v2264, 0
        %2269 = vmatprep.subr.mxu0 0.0
        %2270 = vmatpush1.xpose.msra.mxu0 %v2267
        %2271 = vmatprep.subr.mxu0 0.0
        %2272 = vmatpush1.xpose.msra.mxu0 0.0
        %2273 = vmatprep.subr.mxu0 0.0
        %2274 = vmatpush1.xpose.msra.mxu0 0.0
        %2275 = vmatprep.subr.mxu0 0.0
        %2276 = vmatpush1.xpose.msra.mxu0 0.0
        %2277 = vmatprep.subr.mxu0 0.0
        %2278 = vmatpush1.xpose.msra.mxu0 0.0
        %2279 = vmatprep.subr.mxu0 0.0
        %2280 = vmatpush1.xpose.msra.mxu0 0.0
        %2281 = vmatprep.subr.mxu0 0.0
        %2282 = vmatpush1.xpose.msra.mxu0 0.0
        %2283 = vmatprep.subr.mxu0 0.0
        %2284 = vmatpush1.xpose.msra.mxu0 0.0
        %2285 = vmatprep.subr.mxu0 0.0
        %2286 = vmatpush1.xpose.msra.mxu0 0.0
        %2287 = vmatprep.subr.mxu0 0.0
        %2288 = vmatpush1.xpose.msra.mxu0 0.0
        %2289 = vmatprep.subr.mxu0 0.0
        %2290 = vmatpush1.xpose.msra.mxu0 0.0
        %2291 = vmatprep.subr.mxu0 0.0
        %2292 = vmatpush1.xpose.msra.mxu0 0.0
        %2293 = vmatprep.subr.mxu0 0.0
        %2294 = vmatpush1.xpose.msra.mxu0 0.0
        %2295 = vmatprep.subr.mxu0 0.0
        %2296 = vmatpush1.xpose.msra.mxu0 0.0
        %2297 = vmatprep.subr.mxu0 0.0
        %2298 = vmatpush1.xpose.msra.mxu0 0.0
        %2299 = vmatprep.subr.mxu0 0.0
        %2300 = vmatpush1.xpose.msra.mxu0 0.0
        %2301 = vmatprep.subr.mxu0 0.0
        %2302 = vmatpush1.xpose.msra.mxu0 0.0
        %2303 = vmatprep.subr.mxu0 0.0
        %2304 = vmatpush1.xpose.msra.mxu0 0.0
        %2305 = vmatprep.subr.mxu0 0.0
        %2306 = vmatpush1.xpose.msra.mxu0 0.0
        %2307 = vmatprep.subr.mxu0 0.0
        %2308 = vmatpush1.xpose.msra.mxu0 0.0
        %2309 = vmatprep.subr.mxu0 0.0
        %2310 = vmatpush1.xpose.msra.mxu0 0.0
        %2311 = vmatprep.subr.mxu0 0.0
        %2312 = vmatpush1.xpose.msra.mxu0 0.0
        %2313 = vmatprep.subr.mxu0 0.0
        %2314 = vmatpush1.xpose.msra.mxu0 0.0
        %2315 = vmatprep.subr.mxu0 0.0
        %2316 = vmatpush1.xpose.msra.mxu0 0.0
        %2317 = vmatprep.subr.mxu0 0.0
        %2318 = vmatpush1.xpose.msra.mxu0 0.0
        %2319 = vmatprep.subr.mxu0 0.0
        %2320 = vmatpush1.xpose.msra.mxu0 0.0
        %2321 = vmatprep.subr.mxu0 0.0
        %2322 = vmatpush1.xpose.msra.mxu0 0.0
        %2323 = vmatprep.subr.mxu0 0.0
        %2324 = vmatpush1.xpose.msra.mxu0 0.0
        %2325 = vmatprep.subr.mxu0 0.0
        %2326 = vmatpush1.xpose.msra.mxu0 0.0
        %2327 = vmatprep.subr.mxu0 0.0
        %2328 = vmatpush1.xpose.msra.mxu0 0.0
        %2329 = vmatprep.subr.mxu0 0.0
        %2330 = vmatpush1.xpose.msra.mxu0 0.0
        %2331 = vmatprep.subr.mxu0 0.0
        %2332 = vmatpush1.xpose.msra.mxu0 0.0
        %2333 = vmatprep.mubr.f32.mxu0 0.0
        %2334 = vmatmul.mubr.f32.gmra.mrb[0].mxu0 %v2265
        %v2335 = vpop.f32.mrb[0].mxu0
        %v2336 = vadd.f32 0.0, %v2335
        %v2337 = vpop.f32.mrb[0].mxu0
        %2338 = vdwg.mxu0
        %v2339 = vmul.f32 %v2336, 0.35355338
        %v2340 = vadd.f32 %v2339, %v1575
        %v2341 = vsel %vm772, %v2340, -inf
        %2342 = vmax.xlane.f32.xlu0 %v2341
        %v2343 = vpop.xlane.xlu0 %2342
        %v2344 = vsub.f32 %v2340, %v2343
        %v2345 = vmul.f32 %v2344, 1.442695
        %v2346 = vpow.pop %v2345
        %v2347 = vsel %vm772, %v2346, 0.0
        %2348 = vadd.xlane.f32.xlu0 %v2347
        %v2349 = vpop.xlane.xlu0 %2348
        %v2350 = vrcp.pop %v2349
        %v2351 = vmul.f32 %v2346, %v2350
        %2352 = vrot.lane.b32.xlu0 %v1760, 72
        %v2353 = vpop.permute.xlu0 %2352
        %v2356 = vsel %vm772, %v2351, 0
        %2358 = vmatprep.subr.mxu0 0.0
        %2359 = vmatpush1.msra.mxu0 %v2353
        %2360 = vmatprep.subr.mxu0 0.0
        %2361 = vmatpush1.msra.mxu0 0.0
        %2362 = vmatprep.subr.mxu0 0.0
        %2363 = vmatpush1.msra.mxu0 0.0
        %2364 = vmatprep.subr.mxu0 0.0
        %2365 = vmatpush1.msra.mxu0 0.0
        %2366 = vmatprep.subr.mxu0 0.0
        %2367 = vmatpush1.msra.mxu0 0.0
        %2368 = vmatprep.subr.mxu0 0.0
        %2369 = vmatpush1.msra.mxu0 0.0
        %2370 = vmatprep.subr.mxu0 0.0
        %2371 = vmatpush1.msra.mxu0 0.0
        %2372 = vmatprep.subr.mxu0 0.0
        %2373 = vmatpush1.msra.mxu0 0.0
        %2374 = vmatprep.subr.mxu0 0.0
        %2375 = vmatpush1.msra.mxu0 0.0
        %2376 = vmatprep.subr.mxu0 0.0
        %2377 = vmatpush1.msra.mxu0 0.0
        %2378 = vmatprep.subr.mxu0 0.0
        %2379 = vmatpush1.msra.mxu0 0.0
        %2380 = vmatprep.subr.mxu0 0.0
        %2381 = vmatpush1.msra.mxu0 0.0
        %2382 = vmatprep.subr.mxu0 0.0
        %2383 = vmatpush1.msra.mxu0 0.0
        %2384 = vmatprep.subr.mxu0 0.0
        %2385 = vmatpush1.msra.mxu0 0.0
        %2386 = vmatprep.subr.mxu0 0.0
        %2387 = vmatpush1.msra.mxu0 0.0
        %2388 = vmatprep.subr.mxu0 0.0
        %2389 = vmatpush1.msra.mxu0 0.0
        %2390 = vmatprep.subr.mxu0 0.0
        %2391 = vmatpush1.msra.mxu0 0.0
        %2392 = vmatprep.subr.mxu0 0.0
        %2393 = vmatpush1.msra.mxu0 0.0
        %2394 = vmatprep.subr.mxu0 0.0
        %2395 = vmatpush1.msra.mxu0 0.0
        %2396 = vmatprep.subr.mxu0 0.0
        %2397 = vmatpush1.msra.mxu0 0.0
        %2398 = vmatprep.subr.mxu0 0.0
        %2399 = vmatpush1.msra.mxu0 0.0
        %2400 = vmatprep.subr.mxu0 0.0
        %2401 = vmatpush1.msra.mxu0 0.0
        %2402 = vmatprep.subr.mxu0 0.0
        %2403 = vmatpush1.msra.mxu0 0.0
        %2404 = vmatprep.subr.mxu0 0.0
        %2405 = vmatpush1.msra.mxu0 0.0
        %2406 = vmatprep.subr.mxu0 0.0
        %2407 = vmatpush1.msra.mxu0 0.0
        %2408 = vmatprep.subr.mxu0 0.0
        %2409 = vmatpush1.msra.mxu0 0.0
        %2410 = vmatprep.subr.mxu0 0.0
        %2411 = vmatpush1.msra.mxu0 0.0
        %2412 = vmatprep.subr.mxu0 0.0
        %2413 = vmatpush1.msra.mxu0 0.0
        %2414 = vmatprep.subr.mxu0 0.0
        %2415 = vmatpush1.msra.mxu0 0.0
        %2416 = vmatprep.subr.mxu0 0.0
        %2417 = vmatpush1.msra.mxu0 0.0
        %2418 = vmatprep.subr.mxu0 0.0
        %2419 = vmatpush1.msra.mxu0 0.0
        %2420 = vmatprep.subr.mxu0 0.0
        %2421 = vmatpush1.msra.mxu0 0.0
        %2422 = vmatprep.mubr.f32.mxu0 0.0
        %2423 = vmatmul.mubr.f32.gmra.mrb[0].mxu0 %v2356
        %v2424 = vpop.f32.mrb[0].mxu0
        %v2425 = vadd.f32 0.0, %v2424
        %v2426 = vpop.f32.mrb[0].mxu0
        %2427 = vdwg.mxu0
        %2428 = vst.msk [vmem:[%s577] sm:$0xff] %vm772, %v1849
        %2429 = vst.msk [vmem:[%s577 + $0x8] sm:$0xff] %vm772, %v2017
        %2430 = vst.msk [vmem:[%s577 + $0x10] sm:$0xff] %vm772, %v2184
        %2431 = vst.msk [vmem:[%s577 + $0x18] sm:$0xff] %vm772, %v2351
        %2433 = vrot.lane.b32.xlu0 %v2091, 8
        %v2434 = vpop.permute.xlu0 %2433
        %2437 = vrot.lane.b32.xlu0 %v2258, 16
        %v2438 = vpop.permute.xlu0 %2437
        %2441 = vrot.lane.b32.xlu0 %v2425, 24
        %v2442 = vpop.permute.xlu0 %2441
        %v2444 = vsel %vm772, %v1924, %v2434
        %v2445 = vsel %vm1457, %v2444, %v2438
        %v2446 = vsel %vm1459, %v2445, %v2442
        %v2447 = vlaneseq
        %v2448 = vshrl.u32 %v2447, 7
        %v2449 = vsub.s32 3, %v2448
        %v2450 = vrot.slane %v1580, %v2449
        %2451 = vrot.lane.b32.xlu0 %v1576, 32
        %v2452 = vpop.permute.xlu0 %2451
        %2453 = vrot.lane.b32.xlu0 %v1577, 32
        %v2454 = vpop.permute.xlu0 %2453
        %2455 = vrot.lane.b32.xlu0 %v1578, 32
        %v2456 = vpop.permute.xlu0 %2455
        %2457 = vrot.lane.b32.xlu0 %v1579, 32
        %v2458 = vpop.permute.xlu0 %2457
        %v2464 = vsel %vm598, %v2446, 0
        %2466 = vmatprep.subr.mxu0 0.0
        %2467 = vmatpush1.msra.mxu0 %v2452
        %2468 = vmatprep.subr.mxu0 0.0
        %2469 = vmatpush1.msra.mxu0 %v2454
        %2470 = vmatprep.subr.mxu0 0.0
        %2471 = vmatpush1.msra.mxu0 %v2456
        %2472 = vmatprep.subr.mxu0 0.0
        %2473 = vmatpush1.msra.mxu0 %v2458
        %2474 = vmatprep.subr.mxu0 0.0
        %2475 = vmatpush1.msra.mxu0 0.0
        %2476 = vmatprep.subr.mxu0 0.0
        %2477 = vmatpush1.msra.mxu0 0.0
        %2478 = vmatprep.subr.mxu0 0.0
        %2479 = vmatpush1.msra.mxu0 0.0
        %2480 = vmatprep.subr.mxu0 0.0
        %2481 = vmatpush1.msra.mxu0 0.0
        %2482 = vmatprep.subr.mxu0 0.0
        %2483 = vmatpush1.msra.mxu0 0.0
        %2484 = vmatprep.subr.mxu0 0.0
        %2485 = vmatpush1.msra.mxu0 0.0
        %2486 = vmatprep.subr.mxu0 0.0
        %2487 = vmatpush1.msra.mxu0 0.0
        %2488 = vmatprep.subr.mxu0 0.0
        %2489 = vmatpush1.msra.mxu0 0.0
        %2490 = vmatprep.subr.mxu0 0.0
        %2491 = vmatpush1.msra.mxu0 0.0
        %2492 = vmatprep.subr.mxu0 0.0
        %2493 = vmatpush1.msra.mxu0 0.0
        %2494 = vmatprep.subr.mxu0 0.0
        %2495 = vmatpush1.msra.mxu0 0.0
        %2496 = vmatprep.subr.mxu0 0.0
        %2497 = vmatpush1.msra.mxu0 0.0
        %2498 = vmatprep.subr.mxu0 0.0
        %2499 = vmatpush1.msra.mxu0 0.0
        %2500 = vmatprep.subr.mxu0 0.0
        %2501 = vmatpush1.msra.mxu0 0.0
        %2502 = vmatprep.subr.mxu0 0.0
        %2503 = vmatpush1.msra.mxu0 0.0
        %2504 = vmatprep.subr.mxu0 0.0
        %2505 = vmatpush1.msra.mxu0 0.0
        %2506 = vmatprep.subr.mxu0 0.0
        %2507 = vmatpush1.msra.mxu0 0.0
        %2508 = vmatprep.subr.mxu0 0.0
        %2509 = vmatpush1.msra.mxu0 0.0
        %2510 = vmatprep.subr.mxu0 0.0
        %2511 = vmatpush1.msra.mxu0 0.0
        %2512 = vmatprep.subr.mxu0 0.0
        %2513 = vmatpush1.msra.mxu0 0.0
        %2514 = vmatprep.subr.mxu0 0.0
        %2515 = vmatpush1.msra.mxu0 0.0
        %2516 = vmatprep.subr.mxu0 0.0
        %2517 = vmatpush1.msra.mxu0 0.0
        %2518 = vmatprep.subr.mxu0 0.0
        %2519 = vmatpush1.msra.mxu0 0.0
        %2520 = vmatprep.subr.mxu0 0.0
        %2521 = vmatpush1.msra.mxu0 0.0
        %2522 = vmatprep.subr.mxu0 0.0
        %2523 = vmatpush1.msra.mxu0 0.0
        %2524 = vmatprep.subr.mxu0 0.0
        %2525 = vmatpush1.msra.mxu0 0.0
        %2526 = vmatprep.subr.mxu0 0.0
        %2527 = vmatpush1.msra.mxu0 0.0
        %2528 = vmatprep.subr.mxu0 0.0
        %2529 = vmatpush1.msra.mxu0 0.0
        %2530 = vmatprep.mubr.f32.mxu0 0.0
        %2531 = vmatmul.mubr.f32.gmra.mrb[0].mxu0 %v2464
        %v2532 = vpop.f32.mrb[0].mxu0
        %v2533 = vadd.f32 %v2450, %v2532
        %v2534 = vpop.f32.mrb[0].mxu0
        %2535 = vdwg.mxu0
        %v2536 = vadd.f32 %v2533, %v1574
        %v2537 = vsel %vm598, %v2536, 0.0
        %2538 = vadd.xlane.f32.xlu0 %v2537
        %v2539 = vpop.xlane.xlu0 %2538
        %v2540 = vmul.f32 %v2539, %v1554
        %v2541 = vsub.f32 %v2536, %v2540
        %v2542 = vmul.f32 %v2541, %v2541
        %v2543 = vsel %vm598, %v2542, 0.0
        %2544 = vadd.xlane.f32.xlu0 %v2543
        %v2545 = vpop.xlane.xlu0 %2544
        %v2546 = vmul.f32 %v2545, %v1554
        %v2547 = vadd.f32 %v2546, 1e-05
        %v2548 = vrsqrt.pop %v2547
        %v2549 = vmul.f32 %v2541, %v2548
        %v2550 = vlaneseq
        %v2551 = vshrl.u32 %v2550, 7
        %v2552 = vsub.s32 4, %v2551
        %v2553 = vrot.slane %v1580, %v2552
        %v2554 = vmul.f32 %v2549, %v2553
        %v2555 = vlaneseq
        %v2556 = vshrl.u32 %v2555, 7
        %v2557 = vsub.s32 5, %v2556
        %v2558 = vrot.slane %v1580, %v2557
        %v2559 = vadd.f32 %v2554, %v2558
        %v2560 = vld [vmem:[#allocation10] sm:$0xff]
        %v2561 = vld [vmem:[#allocation10 + $0x8] sm:$0xff]
        %v2562 = vld [vmem:[#allocation10 + $0x10] sm:$0xff]
        %v2563 = vld [vmem:[#allocation10 + $0x18] sm:$0xff]
        %v2564 = vld [vmem:[%s9] sm:$0xff]
        %v2565 = vld [vmem:[%s9 + $0x8] sm:$0xff]
        %v2566 = vld [vmem:[%s9 + $0x10] sm:$0xff]
        %v2567 = vld [vmem:[%s9 + $0x18] sm:$0xff]
        %v2568 = vld [vmem:[%s9 + $0x20] sm:$0xff]
        %v2569 = vld [vmem:[%s9 + $0x28] sm:$0xff]
        %v2570 = vld [vmem:[%s9 + $0x30] sm:$0xff]
        %v2571 = vld [vmem:[%s9 + $0x38] sm:$0xff]
        %v2572 = vld [vmem:[%s10] sm:$0xf]
        %v2573 = vlaneseq
        %v2574 = vshrl.u32 %v2573, 7
        %v2575 = vsub.s32 0, %v2574
        %v2576 = vrot.slane %v2572, %v2575
        %v2578 = vsel %vm598, %v2559, 0
        %2580 = vmatprep.subr.mxu0 0.0
        %2581 = vmatpush1.msra.mxu0 %v2560
        %2582 = vmatprep.subr.mxu0 0.0
        %2583 = vmatpush1.msra.mxu0 %v2561
        %2584 = vmatprep.subr.mxu0 0.0
        %2585 = vmatpush1.msra.mxu0 %v2562
        %2586 = vmatprep.subr.mxu0 0.0
        %2587 = vmatpush1.msra.mxu0 %v2563
        %2588 = vmatprep.subr.mxu0 0.0
        %2589 = vmatpush1.msra.mxu0 0.0
        %2590 = vmatprep.subr.mxu0 0.0
        %2591 = vmatpush1.msra.mxu0 0.0
        %2592 = vmatprep.subr.mxu0 0.0
        %2593 = vmatpush1.msra.mxu0 0.0
        %2594 = vmatprep.subr.mxu0 0.0
        %2595 = vmatpush1.msra.mxu0 0.0
        %2596 = vmatprep.subr.mxu0 0.0
        %2597 = vmatpush1.msra.mxu0 0.0
        %2598 = vmatprep.subr.mxu0 0.0
        %2599 = vmatpush1.msra.mxu0 0.0
        %2600 = vmatprep.subr.mxu0 0.0
        %2601 = vmatpush1.msra.mxu0 0.0
        %2602 = vmatprep.subr.mxu0 0.0
        %2603 = vmatpush1.msra.mxu0 0.0
        %2604 = vmatprep.subr.mxu0 0.0
        %2605 = vmatpush1.msra.mxu0 0.0
        %2606 = vmatprep.subr.mxu0 0.0
        %2607 = vmatpush1.msra.mxu0 0.0
        %2608 = vmatprep.subr.mxu0 0.0
        %2609 = vmatpush1.msra.mxu0 0.0
        %2610 = vmatprep.subr.mxu0 0.0
        %2611 = vmatpush1.msra.mxu0 0.0
        %2612 = vmatprep.subr.mxu0 0.0
        %2613 = vmatpush1.msra.mxu0 0.0
        %2614 = vmatprep.subr.mxu0 0.0
        %2615 = vmatpush1.msra.mxu0 0.0
        %2616 = vmatprep.subr.mxu0 0.0
        %2617 = vmatpush1.msra.mxu0 0.0
        %2618 = vmatprep.subr.mxu0 0.0
        %2619 = vmatpush1.msra.mxu0 0.0
        %2620 = vmatprep.subr.mxu0 0.0
        %2621 = vmatpush1.msra.mxu0 0.0
        %2622 = vmatprep.subr.mxu0 0.0
        %2623 = vmatpush1.msra.mxu0 0.0
        %2624 = vmatprep.subr.mxu0 0.0
        %2625 = vmatpush1.msra.mxu0 0.0
        %2626 = vmatprep.subr.mxu0 0.0
        %2627 = vmatpush1.msra.mxu0 0.0
        %2628 = vmatprep.subr.mxu0 0.0
        %2629 = vmatpush1.msra.mxu0 0.0
        %2630 = vmatprep.subr.mxu0 0.0
        %2631 = vmatpush1.msra.mxu0 0.0
        %2632 = vmatprep.subr.mxu0 0.0
        %2633 = vmatpush1.msra.mxu0 0.0
        %2634 = vmatprep.subr.mxu0 0.0
        %2635 = vmatpush1.msra.mxu0 0.0
        %2636 = vmatprep.subr.mxu0 0.0
        %2637 = vmatpush1.msra.mxu0 0.0
        %2638 = vmatprep.subr.mxu0 0.0
        %2639 = vmatpush1.msra.mxu0 0.0
        %2640 = vmatprep.subr.mxu0 0.0
        %2641 = vmatpush1.msra.mxu0 0.0
        %2642 = vmatprep.subr.mxu0 0.0
        %2643 = vmatpush1.msra.mxu0 0.0
        %2644 = vmatprep.mubr.f32.mxu0 0.0
        %2645 = vmatmul.mubr.f32.gmra.mrb[0].mxu0 %v2578
        %v2646 = vpop.f32.mrb[0].mxu0
        %v2647 = vadd.f32 %v2576, %v2646
        %v2648 = vpop.f32.mrb[0].mxu0
        %2649 = vdwg.mxu0
        %v2650 = vmax.f32 %v2647, 0.0
        %v2651 = vlaneseq
        %v2652 = vshrl.u32 %v2651, 7
        %v2653 = vsub.s32 1, %v2652
        %v2654 = vrot.slane %v2572, %v2653
        %vm2655 = vcmask 523264
        %v2657 = vsel %vm2655, %v2650, 0
        %2659 = vmatprep.subr.mxu0 0.0
        %2660 = vmatpush1.msra.mxu0 %v2564
        %2661 = vmatprep.subr.mxu0 0.0
        %2662 = vmatpush1.msra.mxu0 %v2565
        %2663 = vmatprep.subr.mxu0 0.0
        %2664 = vmatpush1.msra.mxu0 %v2566
        %2665 = vmatprep.subr.mxu0 0.0
        %2666 = vmatpush1.msra.mxu0 %v2567
        %2667 = vmatprep.subr.mxu0 0.0
        %2668 = vmatpush1.msra.mxu0 %v2568
        %2669 = vmatprep.subr.mxu0 0.0
        %2670 = vmatpush1.msra.mxu0 %v2569
        %2671 = vmatprep.subr.mxu0 0.0
        %2672 = vmatpush1.msra.mxu0 %v2570
        %2673 = vmatprep.subr.mxu0 0.0
        %2674 = vmatpush1.msra.mxu0 %v2571
        %2675 = vmatprep.subr.mxu0 0.0
        %2676 = vmatpush1.msra.mxu0 0.0
        %2677 = vmatprep.subr.mxu0 0.0
        %2678 = vmatpush1.msra.mxu0 0.0
        %2679 = vmatprep.subr.mxu0 0.0
        %2680 = vmatpush1.msra.mxu0 0.0
        %2681 = vmatprep.subr.mxu0 0.0
        %2682 = vmatpush1.msra.mxu0 0.0
        %2683 = vmatprep.subr.mxu0 0.0
        %2684 = vmatpush1.msra.mxu0 0.0
        %2685 = vmatprep.subr.mxu0 0.0
        %2686 = vmatpush1.msra.mxu0 0.0
        %2687 = vmatprep.subr.mxu0 0.0
        %2688 = vmatpush1.msra.mxu0 0.0
        %2689 = vmatprep.subr.mxu0 0.0
        %2690 = vmatpush1.msra.mxu0 0.0
        %2691 = vmatprep.subr.mxu0 0.0
        %2692 = vmatpush1.msra.mxu0 0.0
        %2693 = vmatprep.subr.mxu0 0.0
        %2694 = vmatpush1.msra.mxu0 0.0
        %2695 = vmatprep.subr.mxu0 0.0
        %2696 = vmatpush1.msra.mxu0 0.0
        %2697 = vmatprep.subr.mxu0 0.0
        %2698 = vmatpush1.msra.mxu0 0.0
        %2699 = vmatprep.subr.mxu0 0.0
        %2700 = vmatpush1.msra.mxu0 0.0
        %2701 = vmatprep.subr.mxu0 0.0
        %2702 = vmatpush1.msra.mxu0 0.0
        %2703 = vmatprep.subr.mxu0 0.0
        %2704 = vmatpush1.msra.mxu0 0.0
        %2705 = vmatprep.subr.mxu0 0.0
        %2706 = vmatpush1.msra.mxu0 0.0
        %2707 = vmatprep.subr.mxu0 0.0
        %2708 = vmatpush1.msra.mxu0 0.0
        %2709 = vmatprep.subr.mxu0 0.0
        %2710 = vmatpush1.msra.mxu0 0.0
        %2711 = vmatprep.subr.mxu0 0.0
        %2712 = vmatpush1.msra.mxu0 0.0
        %2713 = vmatprep.subr.mxu0 0.0
        %2714 = vmatpush1.msra.mxu0 0.0
        %2715 = vmatprep.subr.mxu0 0.0
        %2716 = vmatpush1.msra.mxu0 0.0
        %2717 = vmatprep.subr.mxu0 0.0
        %2718 = vmatpush1.msra.mxu0 0.0
        %2719 = vmatprep.subr.mxu0 0.0
        %2720 = vmatpush1.msra.mxu0 0.0
        %2721 = vmatprep.subr.mxu0 0.0
        %2722 = vmatpush1.msra.mxu0 0.0
        %2723 = vmatprep.mubr.f32.mxu0 0.0
        %2724 = vmatmul.mubr.f32.gmra.mrb[0].mxu0 %v2657
        %v2725 = vpop.f32.mrb[0].mxu0
        %v2726 = vadd.f32 %v2654, %v2725
        %v2727 = vpop.f32.mrb[0].mxu0
        %2728 = vdwg.mxu0
        %v2729 = vadd.f32 %v2726, %v2559
        %v2730 = vsel %vm598, %v2729, 0.0
        %2731 = vadd.xlane.f32.xlu0 %v2730
        %v2732 = vpop.xlane.xlu0 %2731
        %v2733 = vmul.f32 %v2732, %v1554
        %v2734 = vsub.f32 %v2729, %v2733
        %v2735 = vmul.f32 %v2734, %v2734
        %v2736 = vsel %vm598, %v2735, 0.0
        %2737 = vadd.xlane.f32.xlu0 %v2736
        %v2738 = vpop.xlane.xlu0 %2737
        %v2739 = vmul.f32 %v2738, %v1554
        %v2740 = vadd.f32 %v2739, 1e-05
        %v2741 = vrsqrt.pop %v2740
        %v2742 = vmul.f32 %v2734, %v2741
        %v2743 = vlaneseq
        %v2744 = vshrl.u32 %v2743, 7
        %v2745 = vsub.s32 2, %v2744
        %v2746 = vrot.slane %v2572, %v2745
        %v2747 = vmul.f32 %v2742, %v2746
        %v2748 = vlaneseq
        %v2749 = vshrl.u32 %v2748, 7
        %v2750 = vsub.s32 3, %v2749
        %v2751 = vrot.slane %v2572, %v2750
        %v2752 = vadd.f32 %v2747, %v2751
        %2753 = vst.msk [vmem:[%s563] sm:$0xff] %vm598, %v2752
        %s2754 = sand.u32 %s297, 1
        %s2755 = scalar_lea.sflag [#allocation4], %s2754
        %s2756 = sand.u32 %s297, 1
        %s2757 = smul.addr %s2756, 8
        %s2758 = scalar_lea.vmem [#allocation11], %s2757
        %s2759 = sand.u32 %s38, 1
        %s2760 = scalar_lea.sflag [#allocation13], %s2759
        %s2761 = sand.u32 %s323, 1
        %s2762 = smul.addr %s2761, 32
        %s2763 = scalar_lea.vmem [#allocation12], %s2762
        %s2764 = sand.u32 %s38, 1
        %s2765 = scalar_lea.sflag [#allocation13], %s2764
        %s2766 = sand.u32 %s349, 1
        %s2767 = smul.addr %s2766, 32
        %s2768 = scalar_lea.vmem [#allocation14], %s2767
        // Predicated region
        $region85: #{decoder_layer.1} parent=63 // pred_check
          %p2769 = pneg %p307
        $region86: #{decoder_layer.1} parent=63 // pred_check_branch
          %2771 = sbr.rel (%p2769) target = $region88
        $region87: #{decoder_layer.1} parent=63 // pred_region
          %s2773 = ssub.s32 128, 128
          %2774 = vsyncadd %s2755, %s2773
          %s2775 = smul.addr %s38, 128
          %s2776 = scalar_lea.hbm %s11, %s2775
          %s2778 = sshll.u32 %s2758, 4
          %s2779 = int_to_ptr.vmem [resolvable:$true] %s2778
          %2781 = dma.vmem_to_hbm [thread:$0]  %s2779, 128, %s2776, %s2755
        $region88: #{decoder_layer.1} parent=63 // pred_fallthru
          _
        // Predicated region
        $region89: #{decoder_layer.1} parent=63 // pred_check
          %p2782 = pneg %p333
        $region90: #{decoder_layer.1} parent=63 // pred_check_branch
          %2784 = sbr.rel (%p2782) target = $region92
        $region91: #{decoder_layer.1} parent=63 // pred_region
          %s2786 = ssub.s32 512, 512
          %2787 = vsyncadd %s2760, %s2786
          %s2788 = smul.addr %s38, 4
          %s2789 = smul.addr %s2788, 128
          %s2790 = scalar_lea.hbm %s12, %s2789
          %s2791 = sshll.u32 %s2763, 4
          %s2792 = int_to_ptr.vmem [resolvable:$true] %s2791
          %2797 = dma.vmem_to_hbm [thread:$0]  %s2792, 512, %s2790, %s2760, 128, 128, 8
        $region92: #{decoder_layer.1} parent=63 // pred_fallthru
          _
        // Predicated region
        $region93: #{decoder_layer.1} parent=63 // pred_check
          %p2798 = pneg %p359
        $region94: #{decoder_layer.1} parent=63 // pred_check_branch
          %2800 = sbr.rel (%p2798) target = $region96
        $region95: #{decoder_layer.1} parent=63 // pred_region
          %s2802 = ssub.s32 512, 512
          %2803 = vsyncadd %s2765, %s2802
          %s2804 = smul.addr %s38, 4
          %s2805 = smul.addr %s2804, 128
          %s2806 = scalar_lea.hbm %s13, %s2805
          %s2807 = sshll.u32 %s2768, 4
          %s2808 = int_to_ptr.vmem [resolvable:$true] %s2807
          %2813 = dma.vmem_to_hbm [thread:$0]  %s2808, 512, %s2806, %s2765, 128, 128, 8
        $region96: #{decoder_layer.1} parent=63 // pred_fallthru
          _
      $region64: #{decoder_layer.1} parent=5 // pred_fallthru
        _
      %p2814 = scmp.le.s32.totalorder 2, %s33
      // Predicated region
      $region97: #{decoder_layer.1} parent=5 // pred_check
        %p2815 = pneg %p2814
      $region98: #{decoder_layer.1} parent=5 // pred_check_branch
        %2817 = sbr.rel (%p2815) target = $region100
      $region99: #{decoder_layer.1} parent=5 // pred_region
        %s2818 = ssub.s32 %s33, 2
        // Predicated region
        $region101: #{decoder_layer.1} parent=99 // pred_check
          %p2819 = pneg %p313
        $region102: #{decoder_layer.1} parent=99 // pred_check_branch
          %2821 = sbr.rel (%p2819) target = $region104
        $region103: #{decoder_layer.1} parent=99 // pred_region
          %s2822 = sand.u32 %s298, 1
          %s2823 = scalar_lea.sflag [#allocation4], %s2822
          %s2824 = sand.u32 %s298, 1
          %s2825 = smul.addr %s2824, 8
          %s2826 = scalar_lea.vmem [#allocation11], %s2825
          %2827 = dma.done %s2823, 128
        $region104: #{decoder_layer.1} parent=99 // pred_fallthru
          _
        // Predicated region
        $region105: #{decoder_layer.1} parent=99 // pred_check
          %p2828 = pneg %p339
        $region106: #{decoder_layer.1} parent=99 // pred_check_branch
          %2830 = sbr.rel (%p2828) target = $region108
        $region107: #{decoder_layer.1} parent=99 // pred_region
          %s2831 = sand.u32 %s39, 1
          %s2832 = scalar_lea.sflag [#allocation13], %s2831
          %s2833 = sand.u32 %s324, 1
          %s2834 = smul.addr %s2833, 32
          %s2835 = scalar_lea.vmem [#allocation12], %s2834
          %2836 = dma.done %s2832, 512
        $region108: #{decoder_layer.1} parent=99 // pred_fallthru
          _
        // Predicated region
        $region109: #{decoder_layer.1} parent=99 // pred_check
          %p2837 = pneg %p365
        $region110: #{decoder_layer.1} parent=99 // pred_check_branch
          %2839 = sbr.rel (%p2837) target = $region112
        $region111: #{decoder_layer.1} parent=99 // pred_region
          %s2840 = sand.u32 %s39, 1
          %s2841 = scalar_lea.sflag [#allocation13], %s2840
          %s2842 = sand.u32 %s350, 1
          %s2843 = smul.addr %s2842, 32
          %s2844 = scalar_lea.vmem [#allocation14], %s2843
          %2845 = dma.done %s2841, 512
        $region112: #{decoder_layer.1} parent=99 // pred_fallthru
          _
      $region100: #{decoder_layer.1} parent=5 // pred_fallthru
        _
    $region6: #{decoder_layer.1} parent=1 // loop_footer
      %s37 = sadd.s32 1, %s33
    $region7: #{decoder_layer.1} parent=1 // loop_footer_branch
      %32 = sbr.rel target = $region3
    $region8: #{decoder_layer.1} parent=1 // loop_exit
      _
    %2846 = vsyncpa [#allocation3], 1
    %s2847 = scalar_lea.sflag [#allocation3], 1
    %2848 = vsyncpa %s2847, 1
    %2849 = vsyncpa [#allocation6], 1
    %s2850 = scalar_lea.sflag [#allocation6], 1
    %2851 = vsyncpa %s2850, 1
    %2852 = vsyncpa [#allocation9], 1
    %2853 = vsyncpa [#allocation4], 1
    %s2854 = scalar_lea.sflag [#allocation4], 1
    %2855 = vsyncpa %s2854, 1
    %2856 = vsyncpa [#allocation13], 1
    %s2857 = scalar_lea.sflag [#allocation13], 1
    %2858 = vsyncpa %s2857, 1

</llo_original>
